<compile_context>
chip_gen: v6e
topology: v6e:2x2x1
jax: 0.10.0
libtpu: 0.0.40
codegen_flags: <defaults>
</compile_context>

<pallas_src>
import math

import jax
import jax.numpy as jnp
from jax.experimental import pallas as pl
from jax.experimental.pallas import tpu as pltpu

NUM_HEADS = 8     # fixed by the module: .view(bs, -1, 8, 64)
HEAD_DIM = 64
EMBED_DIM = NUM_HEADS * HEAD_DIM  # 512


def _mhatt_kernel(v_ref, k_ref, q_ref,
                  wv_ref, bv_ref, wk_ref, bk_ref, wq_ref, bq_ref,
                  wm_ref, bm_ref, o_ref):
    """One batch-block per grid step.

    Blocks seen in-kernel: v/k/q (B_blk, S*, E) bf16, Wv/Wk/Wq (E, E) bf16 and
    Wm (H, D, E) bf16 (resident, single-buffered), biases (1, E) f32, output
    (B_blk, Sk, E) f32.
    """
    b_blk, sv, e = v_ref.shape
    sk = k_ref.shape[1]
    sq = q_ref.shape[1]
    h = NUM_HEADS
    d = e // h
    scale = 1.0 / math.sqrt(d)

    # Flatten batch rows so the projection matmuls see M = B_blk * S MXU rows.
    v2 = v_ref[...].reshape(b_blk * sv, e)
    k2 = k_ref[...].reshape(b_blk * sk, e)
    q2 = q_ref[...].reshape(b_blk * sq, e)

    # QKV projections on the MXU: bf16 inputs, f32 accumulation, f32 bias add.
    vp = jnp.dot(v2, wv_ref[...], preferred_element_type=jnp.float32) + bv_ref[...]
    kp = jnp.dot(k2, wk_ref[...], preferred_element_type=jnp.float32) + bk_ref[...]
    qp = jnp.dot(q2, wq_ref[...], preferred_element_type=jnp.float32) + bq_ref[...]

    # Fold the 1/sqrt(d) score scale into kp (the "query" of the swapped att
    # call) in f32, then cast each projection to bf16 exactly once (no per-head
    # sub-vreg casts inside the loop).
    kp = (kp * scale).astype(jnp.bfloat16).reshape(b_blk, sk, e)
    vp = vp.astype(jnp.bfloat16).reshape(b_blk, sv, e)
    qp = qp.astype(jnp.bfloat16).reshape(b_blk, sq, e)

    # Reproduce the module's swapped call: att(k=v_proj, q=k_proj, v=q_proj)
    #   scores = k_proj @ v_proj^T / sqrt(d);  out = softmax(scores) @ q_proj
    # The merge Linear is accumulated per head (Wm pre-reshaped to (H, D, E)),
    # so no 64-lane-offset concatenate and only one (M, E) f32 live accumulator.
    out_acc = jnp.zeros((b_blk * sk, e), jnp.float32)
    for hh in range(h):                       # statically unrolled over 8 heads
        sl = slice(hh * d, (hh + 1) * d)
        kh = kp[:, :, sl]                     # (B, Sk, D) bf16
        vh = vp[:, :, sl]                     # (B, Sv, D) bf16
        qh = qp[:, :, sl]                     # (B, Sq, D) bf16  (Sq == Sv)

        scores = jnp.einsum('bqd,bkd->bqk', kh, vh,
                            preferred_element_type=jnp.float32)   # (B, Sk, Sv)
        # Numerically stable softmax over the last axis (f32 on the VPU/EUP).
        scores = scores - jnp.max(scores, axis=-1, keepdims=True)
        p = jnp.exp(scores)
        att = p * pl.reciprocal(jnp.sum(p, axis=-1, keepdims=True), approx=True)
        # TODO(synk): dropout(p=0.1) on the attention map omitted (eval / p=0
        # parity); use pltpu.prng_seed + prng_random_bits for training parity.
        # TODO(synk): optional `mask` argument (masked_fill -1e9) not wired in;
        # this kernel implements the mask=None path.
        oh = jnp.einsum('bqk,bkd->bqd', att.astype(jnp.bfloat16), qh,
                        preferred_element_type=jnp.float32)       # (B, Sk, D)

        # Per-head slice of the merge Linear: out += oh @ Wm[h]  ((D, E) bf16).
        out_acc = out_acc + jnp.dot(
            oh.reshape(b_blk * sk, d).astype(jnp.bfloat16), wm_ref[hh],
            preferred_element_type=jnp.float32)

    out = out_acc + bm_ref[...]
    o_ref[...] = out.reshape(b_blk, sk, e).astype(o_ref.dtype)


def _pick_batch_block(bs, seq, target_rows=256):
    """Pick B_blk: aim for >= `target_rows` MXU rows per projection matmul while
    keeping the grid length >= 2 when possible (v7x shards a "parallel" grid
    axis across its two TensorCores)."""
    divisors = [d for d in range(1, bs + 1) if bs % d == 0]
    for d in divisors:                                   # smallest block reaching target
        if d * seq >= target_rows and (bs // d >= 2 or d == bs):
            return d
    for d in reversed(divisors):                         # target unreachable: keep grid >= 2
        if bs // d >= 2:
            return d
    return bs


def pack_mhatt_params(wv, bv, wk, bk, wq, bq, wm, bm):
    """One-time (outside jit) dtype/layout prep: bf16 weights, f32 biases,
    Wm reshaped to (H, D, E) so the merge Linear accumulates per head."""
    bf, f32 = jnp.bfloat16, jnp.float32
    return (wv.astype(bf), bv.astype(f32).reshape(1, -1),
            wk.astype(bf), bk.astype(f32).reshape(1, -1),
            wq.astype(bf), bq.astype(f32).reshape(1, -1),
            wm.astype(bf).reshape(NUM_HEADS, HEAD_DIM, EMBED_DIM),
            bm.astype(f32).reshape(1, -1))


@jax.jit
def mhatt_pallas(v, k, q, wv, bv, wk, bk, wq, bq, wm_h, bm):
    """MHAtt forward.  v/k/q: (bs, S*, 512) -> (bs, Sk, 512) float32.

    Weights are (in, out) bf16 (Wm pre-reshaped (H, D, E)); biases (1, out) f32.
    """
    bs, sk, e = k.shape
    sv, sq = v.shape[1], q.shape[1]
    assert e == EMBED_DIM, "embed_dim must be 512 (8 heads x 64), as hard-coded in MHAtt"
    assert sv == sq, "module requires v and q sequence lengths to match"

    # bf16 activations at the matmul inputs (~2x MXU rate, half DMA/VMEM traffic);
    # f32 accumulation + f32 bias/softmax epilogue happen inside the kernel.
    bf = jnp.bfloat16
    v_b, k_b, q_b = v.astype(bf), k.astype(bf), q.astype(bf)

    b_blk = _pick_batch_block(bs, sk)
    grid_len = bs // b_blk

    # Resident weights/biases: constant index_map + single pipeline buffer.
    w_spec = pl.BlockSpec((e, e), lambda b: (0, 0), pipeline_mode=pl.Buffered(1))
    wm_spec = pl.BlockSpec((NUM_HEADS, HEAD_DIM, e), lambda b: (0, 0, 0),
                           pipeline_mode=pl.Buffered(1))
    b_spec = pl.BlockSpec((1, e), lambda b: (0, 0), pipeline_mode=pl.Buffered(1))

    # Scoped-VMEM budget: resident bf16 weights + f32 biases, double-buffered
    # activation/output blocks, f32+bf16 projection intermediates, accumulator,
    # and per-head (Sk, Sv) score tiles; floored at the default scoped limit and
    # capped well under v7x's 64 MiB per TC.
    m_rows = b_blk * max(sv, sk, sq)
    weights_bytes = 4 * e * e * 2 + 4 * e * 4
    act_bytes = 2 * b_blk * (sv + sk + sq) * e * 2 + 2 * b_blk * sk * e * 4
    interm_bytes = (3 * 4 + 3 * 2 + 4) * m_rows * e + 2 * b_blk * sk * sv * 4
    vmem_limit = int(min(max(weights_bytes + act_bytes + interm_bytes + (4 << 20),
                             32 * 1024 * 1024),
                         48 * 1024 * 1024))

    return pl.pallas_call(
        _mhatt_kernel,
        out_shape=jax.ShapeDtypeStruct((bs, sk, e), jnp.float32),
        grid_spec=pltpu.PrefetchScalarGridSpec(
            num_scalar_prefetch=0,
            grid=(grid_len,),
            in_specs=[
                pl.BlockSpec((b_blk, sv, e), lambda b: (b, 0, 0)),   # v
                pl.BlockSpec((b_blk, sk, e), lambda b: (b, 0, 0)),   # k
                pl.BlockSpec((b_blk, sq, e), lambda b: (b, 0, 0)),   # q
                w_spec, b_spec,                                      # Wv, bv
                w_spec, b_spec,                                      # Wk, bk
                w_spec, b_spec,                                      # Wq, bq
                wm_spec, b_spec,                                     # Wm (H,D,E), bm
            ],
            out_specs=pl.BlockSpec((b_blk, sk, e), lambda b: (b, 0, 0)),
        ),
        compiler_params=pltpu.CompilerParams(
            dimension_semantics=("parallel",),
            vmem_limit_bytes=vmem_limit),
    )(v_b, k_b, q_b, wv, bv, wk, bk, wq, bq, wm_h, bm)


def init_mhatt_params(key, embed_dim, dtype=jnp.float32):
    """nn.Linear-style uniform(-1/sqrt(fan_in), 1/sqrt(fan_in)) init; W as (in, out)."""
    keys = jax.random.split(key, 8)
    bound = 1.0 / math.sqrt(embed_dim)

    def linear(kw, kb):
        w = jax.random.uniform(kw, (embed_dim, embed_dim), dtype, -bound, bound)
        b = jax.random.uniform(kb, (1, embed_dim), dtype, -bound, bound)
        return w, b

    wv, bv = linear(keys[0], keys[1])
    wk, bk = linear(keys[2], keys[3])
    wq, bq = linear(keys[4], keys[5])
    wm, bm = linear(keys[6], keys[7])
    return wv, bv, wk, bk, wq, bq, wm, bm


def mhatt_ref(v, k, q, wv, bv, wk, bk, wq, bq, wm, bm):
    """Pure-JAX reference of the PyTorch forward (same bf16-in / f32-acc matmuls)."""
    bf = jnp.bfloat16

    def lin(x, w, b):
        return jnp.dot(x.astype(bf), w.astype(bf),
                       preferred_element_type=jnp.float32) + b.astype(jnp.float32)

    bs, e = q.shape[0], q.shape[-1]
    h, d = NUM_HEADS, HEAD_DIM
    vp = lin(v, wv, bv).reshape(bs, -1, h, d).transpose(0, 2, 1, 3)
    kp = lin(k, wk, bk).reshape(bs, -1, h, d).transpose(0, 2, 1, 3)
    qp = lin(q, wq, bq).reshape(bs, -1, h, d).transpose(0, 2, 1, 3)

    # forward calls att(v, k, q) whose signature is att(k, q, v):
    scores = jnp.einsum('bhqd,bhkd->bhqk', kp.astype(bf), vp.astype(bf),
                        preferred_element_type=jnp.float32) / math.sqrt(d)
    att = jax.nn.softmax(scores, axis=-1)
    atted = jnp.einsum('bhqk,bhkd->bhqd', att.astype(bf), qp.astype(bf),
                       preferred_element_type=jnp.float32)
    atted = atted.transpose(0, 2, 1, 3).reshape(bs, -1, e)
    return lin(atted, wm, bm)


if __name__ == "__main__":
    key = jax.random.PRNGKey(0)
    kdata, kparams = jax.random.split(key)
    kv, kk, kq = jax.random.split(kdata, 3)

    # Small shapes consistent with the module: batch=2, seq=8, embed_dim=512.
    bs, seq = 2, 8
    v = jax.random.normal(kv, (bs, seq, EMBED_DIM), dtype=jnp.float32)
    k = jax.random.normal(kk, (bs, seq, EMBED_DIM), dtype=jnp.float32)
    q = jax.random.normal(kq, (bs, seq, EMBED_DIM), dtype=jnp.float32)
    params = init_mhatt_params(kparams, EMBED_DIM)
    packed = pack_mhatt_params(*params)      # one-time bf16/f32 cast + Wm reshape

    out = mhatt_pallas(v, k, q, *packed)
    jax.block_until_ready(out)

    ref = mhatt_ref(v, k, q, *params)
    assert out.shape == (bs, seq, EMBED_DIM)
    max_err = float(jnp.max(jnp.abs(out - ref)))
    assert jnp.allclose(out, ref, atol=2e-2, rtol=2e-2), f"mismatch vs reference: {max_err}"

    print("KERNEL_OK")
</pallas_src>

<mosaic_0001>
module attributes {stable_mosaic.version = 11 : i64} {
  func.func @_mhatt_kernel(%arg0: i32, %arg1: memref<1x8x512xbf16, #tpu.memory_space<vmem>>, %arg2: memref<1x8x512xbf16, #tpu.memory_space<vmem>>, %arg3: memref<1x8x512xbf16, #tpu.memory_space<vmem>>, %arg4: memref<512x512xbf16, #tpu.memory_space<vmem>>, %arg5: memref<1x512xf32, #tpu.memory_space<vmem>>, %arg6: memref<512x512xbf16, #tpu.memory_space<vmem>>, %arg7: memref<1x512xf32, #tpu.memory_space<vmem>>, %arg8: memref<512x512xbf16, #tpu.memory_space<vmem>>, %arg9: memref<1x512xf32, #tpu.memory_space<vmem>>, %arg10: memref<8x64x512xbf16, #tpu.memory_space<vmem>>, %arg11: memref<1x512xf32, #tpu.memory_space<vmem>>, %arg12: memref<1x8x512xf32, #tpu.memory_space<vmem>>) attributes {dimension_semantics = [#tpu.dimension_semantics<parallel>], iteration_bounds = array<i64: 2>, scalar_prefetch = 0 : i64, scratch_operands = 0 : i64, tpu.core_type = #tpu.core_type<tc>, window_params = [{transform_indices = @transform_0, window_bounds = array<i64: 1, 8, 512>}, {transform_indices = @transform_1, window_bounds = array<i64: 1, 8, 512>}, {transform_indices = @transform_2, window_bounds = array<i64: 1, 8, 512>}, {pipeline_mode = #tpu.pipeline_mode<synchronous>, transform_indices = @transform_3, window_bounds = array<i64: 512, 512>}, {pipeline_mode = #tpu.pipeline_mode<synchronous>, transform_indices = @transform_4, window_bounds = array<i64: 1, 512>}, {pipeline_mode = #tpu.pipeline_mode<synchronous>, transform_indices = @transform_5, window_bounds = array<i64: 512, 512>}, {pipeline_mode = #tpu.pipeline_mode<synchronous>, transform_indices = @transform_6, window_bounds = array<i64: 1, 512>}, {pipeline_mode = #tpu.pipeline_mode<synchronous>, transform_indices = @transform_7, window_bounds = array<i64: 512, 512>}, {pipeline_mode = #tpu.pipeline_mode<synchronous>, transform_indices = @transform_8, window_bounds = array<i64: 1, 512>}, {pipeline_mode = #tpu.pipeline_mode<synchronous>, transform_indices = @transform_9, window_bounds = array<i64: 8, 64, 512>}, {pipeline_mode = #tpu.pipeline_mode<synchronous>, transform_indices = @transform_10, window_bounds = array<i64: 1, 512>}, {transform_indices = @transform_11, window_bounds = array<i64: 1, 8, 512>}]} {
    %c0 = arith.constant 0 : index
    %c0_0 = arith.constant 0 : index
    %c0_1 = arith.constant 0 : index
    %0 = vector.load %arg1[%c0, %c0_0, %c0_1] : memref<1x8x512xbf16, #tpu.memory_space<vmem>>, vector<1x8x512xbf16>
    %1 = vector.shape_cast %0 : vector<1x8x512xbf16> to vector<8x512xbf16>
    %c0_2 = arith.constant 0 : index
    %c0_3 = arith.constant 0 : index
    %c0_4 = arith.constant 0 : index
    %2 = vector.load %arg2[%c0_2, %c0_3, %c0_4] : memref<1x8x512xbf16, #tpu.memory_space<vmem>>, vector<1x8x512xbf16>
    %3 = vector.shape_cast %2 : vector<1x8x512xbf16> to vector<8x512xbf16>
    %c0_5 = arith.constant 0 : index
    %c0_6 = arith.constant 0 : index
    %c0_7 = arith.constant 0 : index
    %4 = vector.load %arg3[%c0_5, %c0_6, %c0_7] : memref<1x8x512xbf16, #tpu.memory_space<vmem>>, vector<1x8x512xbf16>
    %5 = vector.shape_cast %4 : vector<1x8x512xbf16> to vector<8x512xbf16>
    %c0_8 = arith.constant 0 : index
    %c0_9 = arith.constant 0 : index
    %6 = vector.load %arg4[%c0_8, %c0_9] : memref<512x512xbf16, #tpu.memory_space<vmem>>, vector<512x512xbf16>
    %cst = arith.constant dense<0.000000e+00> : vector<8x512xf32>
    %7 = tpu.matmul %1, %6, %cst {dimension_numbers = #tpu.dot_dimension_numbers<[1], [0], [0], [1], [0, 0, 1, 1], [], []>} : vector<8x512xbf16>, vector<512x512xbf16>, vector<8x512xf32> -> vector<8x512xf32>
    %c0_10 = arith.constant 0 : index
    %c0_11 = arith.constant 0 : index
    %8 = vector.load %arg5[%c0_10, %c0_11] : memref<1x512xf32, #tpu.memory_space<vmem>>, vector<1x512xf32>
    %9 = vector.broadcast %8 : vector<1x512xf32> to vector<8x512xf32>
    %10 = arith.addf %7, %9 : vector<8x512xf32>
    %c0_12 = arith.constant 0 : index
    %c0_13 = arith.constant 0 : index
    %11 = vector.load %arg6[%c0_12, %c0_13] : memref<512x512xbf16, #tpu.memory_space<vmem>>, vector<512x512xbf16>
    %cst_14 = arith.constant dense<0.000000e+00> : vector<8x512xf32>
    %12 = tpu.matmul %3, %11, %cst_14 {dimension_numbers = #tpu.dot_dimension_numbers<[1], [0], [0], [1], [0, 0, 1, 1], [], []>} : vector<8x512xbf16>, vector<512x512xbf16>, vector<8x512xf32> -> vector<8x512xf32>
    %c0_15 = arith.constant 0 : index
    %c0_16 = arith.constant 0 : index
    %13 = vector.load %arg7[%c0_15, %c0_16] : memref<1x512xf32, #tpu.memory_space<vmem>>, vector<1x512xf32>
    %14 = vector.broadcast %13 : vector<1x512xf32> to vector<8x512xf32>
    %15 = arith.addf %12, %14 : vector<8x512xf32>
    %c0_17 = arith.constant 0 : index
    %c0_18 = arith.constant 0 : index
    %16 = vector.load %arg8[%c0_17, %c0_18] : memref<512x512xbf16, #tpu.memory_space<vmem>>, vector<512x512xbf16>
    %cst_19 = arith.constant dense<0.000000e+00> : vector<8x512xf32>
    %17 = tpu.matmul %5, %16, %cst_19 {dimension_numbers = #tpu.dot_dimension_numbers<[1], [0], [0], [1], [0, 0, 1, 1], [], []>} : vector<8x512xbf16>, vector<512x512xbf16>, vector<8x512xf32> -> vector<8x512xf32>
    %c0_20 = arith.constant 0 : index
    %c0_21 = arith.constant 0 : index
    %18 = vector.load %arg9[%c0_20, %c0_21] : memref<1x512xf32, #tpu.memory_space<vmem>>, vector<1x512xf32>
    %19 = vector.broadcast %18 : vector<1x512xf32> to vector<8x512xf32>
    %20 = arith.addf %17, %19 : vector<8x512xf32>
    %cst_22 = arith.constant 1.250000e-01 : f32
    %21 = vector.broadcast %cst_22 : f32 to vector<8x512xf32>
    %22 = arith.mulf %15, %21 : vector<8x512xf32>
    %23 = arith.truncf %22 : vector<8x512xf32> to vector<8x512xbf16>
    %24 = vector.shape_cast %23 : vector<8x512xbf16> to vector<1x8x512xbf16>
    %25 = arith.truncf %10 : vector<8x512xf32> to vector<8x512xbf16>
    %26 = vector.shape_cast %25 : vector<8x512xbf16> to vector<1x8x512xbf16>
    %27 = arith.truncf %20 : vector<8x512xf32> to vector<8x512xbf16>
    %28 = vector.shape_cast %27 : vector<8x512xbf16> to vector<1x8x512xbf16>
    %cst_23 = arith.constant 0.000000e+00 : f32
    %29 = vector.broadcast %cst_23 : f32 to vector<8x512xf32>
    %30 = vector.extract_strided_slice %24 {offsets = [0, 0, 0], sizes = [1, 8, 64], strides = [1, 1, 1]} : vector<1x8x512xbf16> to vector<1x8x64xbf16>
    %31 = vector.extract_strided_slice %26 {offsets = [0, 0, 0], sizes = [1, 8, 64], strides = [1, 1, 1]} : vector<1x8x512xbf16> to vector<1x8x64xbf16>
    %32 = vector.extract_strided_slice %28 {offsets = [0, 0, 0], sizes = [1, 8, 64], strides = [1, 1, 1]} : vector<1x8x512xbf16> to vector<1x8x64xbf16>
    "tpu.trace_start"() <{level = 10 : i32, message = "bqd,bkd->bqk"}> : () -> ()
    %cst_24 = arith.constant dense<0.000000e+00> : vector<1x8x8xf32>
    %33 = tpu.matmul %30, %31, %cst_24 {dimension_numbers = #tpu.dot_dimension_numbers<[2], [2], [1], [1], [0, 0, 0, 1, 1, 1], [0], [0]>} : vector<1x8x64xbf16>, vector<1x8x64xbf16>, vector<1x8x8xf32> -> vector<1x8x8xf32>
    "tpu.trace_stop"() : () -> ()
    %cst_25 = arith.constant dense<0xFF800000> : vector<1x8xf32>
    %34 = vector.multi_reduction <maximumf>, %33, %cst_25 [2] : vector<1x8x8xf32> to vector<1x8xf32>
    %35 = vector.shape_cast %34 : vector<1x8xf32> to vector<1x8x1xf32>
    %36 = vector.broadcast %35 : vector<1x8x1xf32> to vector<1x8x8xf32>
    %37 = arith.subf %33, %36 : vector<1x8x8xf32>
    %38 = math.exp %37 : vector<1x8x8xf32>
    %cst_26 = arith.constant dense<0.000000e+00> : vector<1x8xf32>
    %39 = vector.multi_reduction <add>, %38, %cst_26 [2] : vector<1x8x8xf32> to vector<1x8xf32>
    %40 = vector.shape_cast %39 : vector<1x8xf32> to vector<1x8x1xf32>
    %41 = tpu.reciprocal %40 {approx = true} : vector<1x8x1xf32> -> vector<1x8x1xf32>
    %42 = vector.broadcast %41 : vector<1x8x1xf32> to vector<1x8x8xf32>
    %43 = arith.mulf %38, %42 : vector<1x8x8xf32>
    %44 = arith.truncf %43 : vector<1x8x8xf32> to vector<1x8x8xbf16>
    "tpu.trace_start"() <{level = 10 : i32, message = "bqk,bkd->bqd"}> : () -> ()
    %cst_27 = arith.constant dense<0.000000e+00> : vector<1x8x64xf32>
    %45 = tpu.matmul %44, %32, %cst_27 {dimension_numbers = #tpu.dot_dimension_numbers<[2], [1], [1], [2], [0, 0, 0, 1, 1, 2], [0], [0]>} : vector<1x8x8xbf16>, vector<1x8x64xbf16>, vector<1x8x64xf32> -> vector<1x8x64xf32>
    "tpu.trace_stop"() : () -> ()
    %46 = vector.shape_cast %45 : vector<1x8x64xf32> to vector<8x64xf32>
    %47 = arith.truncf %46 : vector<8x64xf32> to vector<8x64xbf16>
    %c0_28 = arith.constant 0 : index
    %c0_29 = arith.constant 0 : index
    %c0_30 = arith.constant 0 : index
    %48 = vector.load %arg10[%c0_28, %c0_29, %c0_30] : memref<8x64x512xbf16, #tpu.memory_space<vmem>>, vector<1x64x512xbf16>
    %49 = vector.shape_cast %48 : vector<1x64x512xbf16> to vector<64x512xbf16>
    %cst_31 = arith.constant dense<0.000000e+00> : vector<8x512xf32>
    %50 = tpu.matmul %47, %49, %cst_31 {dimension_numbers = #tpu.dot_dimension_numbers<[1], [0], [0], [1], [0, 0, 1, 1], [], []>} : vector<8x64xbf16>, vector<64x512xbf16>, vector<8x512xf32> -> vector<8x512xf32>
    %51 = arith.addf %29, %50 : vector<8x512xf32>
    %52 = vector.extract_strided_slice %24 {offsets = [0, 0, 64], sizes = [1, 8, 64], strides = [1, 1, 1]} : vector<1x8x512xbf16> to vector<1x8x64xbf16>
    %53 = vector.extract_strided_slice %26 {offsets = [0, 0, 64], sizes = [1, 8, 64], strides = [1, 1, 1]} : vector<1x8x512xbf16> to vector<1x8x64xbf16>
    %54 = vector.extract_strided_slice %28 {offsets = [0, 0, 64], sizes = [1, 8, 64], strides = [1, 1, 1]} : vector<1x8x512xbf16> to vector<1x8x64xbf16>
    "tpu.trace_start"() <{level = 10 : i32, message = "bqd,bkd->bqk"}> : () -> ()
    %cst_32 = arith.constant dense<0.000000e+00> : vector<1x8x8xf32>
    %55 = tpu.matmul %52, %53, %cst_32 {dimension_numbers = #tpu.dot_dimension_numbers<[2], [2], [1], [1], [0, 0, 0, 1, 1, 1], [0], [0]>} : vector<1x8x64xbf16>, vector<1x8x64xbf16>, vector<1x8x8xf32> -> vector<1x8x8xf32>
    "tpu.trace_stop"() : () -> ()
    %cst_33 = arith.constant dense<0xFF800000> : vector<1x8xf32>
    %56 = vector.multi_reduction <maximumf>, %55, %cst_33 [2] : vector<1x8x8xf32> to vector<1x8xf32>
    %57 = vector.shape_cast %56 : vector<1x8xf32> to vector<1x8x1xf32>
    %58 = vector.broadcast %57 : vector<1x8x1xf32> to vector<1x8x8xf32>
    %59 = arith.subf %55, %58 : vector<1x8x8xf32>
    %60 = math.exp %59 : vector<1x8x8xf32>
    %cst_34 = arith.constant dense<0.000000e+00> : vector<1x8xf32>
    %61 = vector.multi_reduction <add>, %60, %cst_34 [2] : vector<1x8x8xf32> to vector<1x8xf32>
    %62 = vector.shape_cast %61 : vector<1x8xf32> to vector<1x8x1xf32>
    %63 = tpu.reciprocal %62 {approx = true} : vector<1x8x1xf32> -> vector<1x8x1xf32>
    %64 = vector.broadcast %63 : vector<1x8x1xf32> to vector<1x8x8xf32>
    %65 = arith.mulf %60, %64 : vector<1x8x8xf32>
    %66 = arith.truncf %65 : vector<1x8x8xf32> to vector<1x8x8xbf16>
    "tpu.trace_start"() <{level = 10 : i32, message = "bqk,bkd->bqd"}> : () -> ()
    %cst_35 = arith.constant dense<0.000000e+00> : vector<1x8x64xf32>
    %67 = tpu.matmul %66, %54, %cst_35 {dimension_numbers = #tpu.dot_dimension_numbers<[2], [1], [1], [2], [0, 0, 0, 1, 1, 2], [0], [0]>} : vector<1x8x8xbf16>, vector<1x8x64xbf16>, vector<1x8x64xf32> -> vector<1x8x64xf32>
    "tpu.trace_stop"() : () -> ()
    %68 = vector.shape_cast %67 : vector<1x8x64xf32> to vector<8x64xf32>
    %69 = arith.truncf %68 : vector<8x64xf32> to vector<8x64xbf16>
    %c1 = arith.constant 1 : index
    %c0_36 = arith.constant 0 : index
    %c0_37 = arith.constant 0 : index
    %70 = vector.load %arg10[%c1, %c0_36, %c0_37] : memref<8x64x512xbf16, #tpu.memory_space<vmem>>, vector<1x64x512xbf16>
    %71 = vector.shape_cast %70 : vector<1x64x512xbf16> to vector<64x512xbf16>
    %cst_38 = arith.constant dense<0.000000e+00> : vector<8x512xf32>
    %72 = tpu.matmul %69, %71, %cst_38 {dimension_numbers = #tpu.dot_dimension_numbers<[1], [0], [0], [1], [0, 0, 1, 1], [], []>} : vector<8x64xbf16>, vector<64x512xbf16>, vector<8x512xf32> -> vector<8x512xf32>
    %73 = arith.addf %51, %72 : vector<8x512xf32>
    %74 = vector.extract_strided_slice %24 {offsets = [0, 0, 128], sizes = [1, 8, 64], strides = [1, 1, 1]} : vector<1x8x512xbf16> to vector<1x8x64xbf16>
    %75 = vector.extract_strided_slice %26 {offsets = [0, 0, 128], sizes = [1, 8, 64], strides = [1, 1, 1]} : vector<1x8x512xbf16> to vector<1x8x64xbf16>
    %76 = vector.extract_strided_slice %28 {offsets = [0, 0, 128], sizes = [1, 8, 64], strides = [1, 1, 1]} : vector<1x8x512xbf16> to vector<1x8x64xbf16>
    "tpu.trace_start"() <{level = 10 : i32, message = "bqd,bkd->bqk"}> : () -> ()
    %cst_39 = arith.constant dense<0.000000e+00> : vector<1x8x8xf32>
    %77 = tpu.matmul %74, %75, %cst_39 {dimension_numbers = #tpu.dot_dimension_numbers<[2], [2], [1], [1], [0, 0, 0, 1, 1, 1], [0], [0]>} : vector<1x8x64xbf16>, vector<1x8x64xbf16>, vector<1x8x8xf32> -> vector<1x8x8xf32>
    "tpu.trace_stop"() : () -> ()
    %cst_40 = arith.constant dense<0xFF800000> : vector<1x8xf32>
    %78 = vector.multi_reduction <maximumf>, %77, %cst_40 [2] : vector<1x8x8xf32> to vector<1x8xf32>
    %79 = vector.shape_cast %78 : vector<1x8xf32> to vector<1x8x1xf32>
    %80 = vector.broadcast %79 : vector<1x8x1xf32> to vector<1x8x8xf32>
    %81 = arith.subf %77, %80 : vector<1x8x8xf32>
    %82 = math.exp %81 : vector<1x8x8xf32>
    %cst_41 = arith.constant dense<0.000000e+00> : vector<1x8xf32>
    %83 = vector.multi_reduction <add>, %82, %cst_41 [2] : vector<1x8x8xf32> to vector<1x8xf32>
    %84 = vector.shape_cast %83 : vector<1x8xf32> to vector<1x8x1xf32>
    %85 = tpu.reciprocal %84 {approx = true} : vector<1x8x1xf32> -> vector<1x8x1xf32>
    %86 = vector.broadcast %85 : vector<1x8x1xf32> to vector<1x8x8xf32>
    %87 = arith.mulf %82, %86 : vector<1x8x8xf32>
    %88 = arith.truncf %87 : vector<1x8x8xf32> to vector<1x8x8xbf16>
    "tpu.trace_start"() <{level = 10 : i32, message = "bqk,bkd->bqd"}> : () -> ()
    %cst_42 = arith.constant dense<0.000000e+00> : vector<1x8x64xf32>
    %89 = tpu.matmul %88, %76, %cst_42 {dimension_numbers = #tpu.dot_dimension_numbers<[2], [1], [1], [2], [0, 0, 0, 1, 1, 2], [0], [0]>} : vector<1x8x8xbf16>, vector<1x8x64xbf16>, vector<1x8x64xf32> -> vector<1x8x64xf32>
    "tpu.trace_stop"() : () -> ()
    %90 = vector.shape_cast %89 : vector<1x8x64xf32> to vector<8x64xf32>
    %91 = arith.truncf %90 : vector<8x64xf32> to vector<8x64xbf16>
    %c2 = arith.constant 2 : index
    %c0_43 = arith.constant 0 : index
    %c0_44 = arith.constant 0 : index
    %92 = vector.load %arg10[%c2, %c0_43, %c0_44] : memref<8x64x512xbf16, #tpu.memory_space<vmem>>, vector<1x64x512xbf16>
    %93 = vector.shape_cast %92 : vector<1x64x512xbf16> to vector<64x512xbf16>
    %cst_45 = arith.constant dense<0.000000e+00> : vector<8x512xf32>
    %94 = tpu.matmul %91, %93, %cst_45 {dimension_numbers = #tpu.dot_dimension_numbers<[1], [0], [0], [1], [0, 0, 1, 1], [], []>} : vector<8x64xbf16>, vector<64x512xbf16>, vector<8x512xf32> -> vector<8x512xf32>
    %95 = arith.addf %73, %94 : vector<8x512xf32>
    %96 = vector.extract_strided_slice %24 {offsets = [0, 0, 192], sizes = [1, 8, 64], strides = [1, 1, 1]} : vector<1x8x512xbf16> to vector<1x8x64xbf16>
    %97 = vector.extract_strided_slice %26 {offsets = [0, 0, 192], sizes = [1, 8, 64], strides = [1, 1, 1]} : vector<1x8x512xbf16> to vector<1x8x64xbf16>
    %98 = vector.extract_strided_slice %28 {offsets = [0, 0, 192], sizes = [1, 8, 64], strides = [1, 1, 1]} : vector<1x8x512xbf16> to vector<1x8x64xbf16>
    "tpu.trace_start"() <{level = 10 : i32, message = "bqd,bkd->bqk"}> : () -> ()
    %cst_46 = arith.constant dense<0.000000e+00> : vector<1x8x8xf32>
    %99 = tpu.matmul %96, %97, %cst_46 {dimension_numbers = #tpu.dot_dimension_numbers<[2], [2], [1], [1], [0, 0, 0, 1, 1, 1], [0], [0]>} : vector<1x8x64xbf16>, vector<1x8x64xbf16>, vector<1x8x8xf32> -> vector<1x8x8xf32>
    "tpu.trace_stop"() : () -> ()
    %cst_47 = arith.constant dense<0xFF800000> : vector<1x8xf32>
    %100 = vector.multi_reduction <maximumf>, %99, %cst_47 [2] : vector<1x8x8xf32> to vector<1x8xf32>
    %101 = vector.shape_cast %100 : vector<1x8xf32> to vector<1x8x1xf32>
    %102 = vector.broadcast %101 : vector<1x8x1xf32> to vector<1x8x8xf32>
    %103 = arith.subf %99, %102 : vector<1x8x8xf32>
    %104 = math.exp %103 : vector<1x8x8xf32>
    %cst_48 = arith.constant dense<0.000000e+00> : vector<1x8xf32>
    %105 = vector.multi_reduction <add>, %104, %cst_48 [2] : vector<1x8x8xf32> to vector<1x8xf32>
    %106 = vector.shape_cast %105 : vector<1x8xf32> to vector<1x8x1xf32>
    %107 = tpu.reciprocal %106 {approx = true} : vector<1x8x1xf32> -> vector<1x8x1xf32>
    %108 = vector.broadcast %107 : vector<1x8x1xf32> to vector<1x8x8xf32>
    %109 = arith.mulf %104, %108 : vector<1x8x8xf32>
    %110 = arith.truncf %109 : vector<1x8x8xf32> to vector<1x8x8xbf16>
    "tpu.trace_start"() <{level = 10 : i32, message = "bqk,bkd->bqd"}> : () -> ()
    %cst_49 = arith.constant dense<0.000000e+00> : vector<1x8x64xf32>
    %111 = tpu.matmul %110, %98, %cst_49 {dimension_numbers = #tpu.dot_dimension_numbers<[2], [1], [1], [2], [0, 0, 0, 1, 1, 2], [0], [0]>} : vector<1x8x8xbf16>, vector<1x8x64xbf16>, vector<1x8x64xf32> -> vector<1x8x64xf32>
    "tpu.trace_stop"() : () -> ()
    %112 = vector.shape_cast %111 : vector<1x8x64xf32> to vector<8x64xf32>
    %113 = arith.truncf %112 : vector<8x64xf32> to vector<8x64xbf16>
    %c3 = arith.constant 3 : index
    %c0_50 = arith.constant 0 : index
    %c0_51 = arith.constant 0 : index
    %114 = vector.load %arg10[%c3, %c0_50, %c0_51] : memref<8x64x512xbf16, #tpu.memory_space<vmem>>, vector<1x64x512xbf16>
    %115 = vector.shape_cast %114 : vector<1x64x512xbf16> to vector<64x512xbf16>
    %cst_52 = arith.constant dense<0.000000e+00> : vector<8x512xf32>
    %116 = tpu.matmul %113, %115, %cst_52 {dimension_numbers = #tpu.dot_dimension_numbers<[1], [0], [0], [1], [0, 0, 1, 1], [], []>} : vector<8x64xbf16>, vector<64x512xbf16>, vector<8x512xf32> -> vector<8x512xf32>
    %117 = arith.addf %95, %116 : vector<8x512xf32>
    %118 = vector.extract_strided_slice %24 {offsets = [0, 0, 256], sizes = [1, 8, 64], strides = [1, 1, 1]} : vector<1x8x512xbf16> to vector<1x8x64xbf16>
    %119 = vector.extract_strided_slice %26 {offsets = [0, 0, 256], sizes = [1, 8, 64], strides = [1, 1, 1]} : vector<1x8x512xbf16> to vector<1x8x64xbf16>
    %120 = vector.extract_strided_slice %28 {offsets = [0, 0, 256], sizes = [1, 8, 64], strides = [1, 1, 1]} : vector<1x8x512xbf16> to vector<1x8x64xbf16>
    "tpu.trace_start"() <{level = 10 : i32, message = "bqd,bkd->bqk"}> : () -> ()
    %cst_53 = arith.constant dense<0.000000e+00> : vector<1x8x8xf32>
    %121 = tpu.matmul %118, %119, %cst_53 {dimension_numbers = #tpu.dot_dimension_numbers<[2], [2], [1], [1], [0, 0, 0, 1, 1, 1], [0], [0]>} : vector<1x8x64xbf16>, vector<1x8x64xbf16>, vector<1x8x8xf32> -> vector<1x8x8xf32>
    "tpu.trace_stop"() : () -> ()
    %cst_54 = arith.constant dense<0xFF800000> : vector<1x8xf32>
    %122 = vector.multi_reduction <maximumf>, %121, %cst_54 [2] : vector<1x8x8xf32> to vector<1x8xf32>
    %123 = vector.shape_cast %122 : vector<1x8xf32> to vector<1x8x1xf32>
    %124 = vector.broadcast %123 : vector<1x8x1xf32> to vector<1x8x8xf32>
    %125 = arith.subf %121, %124 : vector<1x8x8xf32>
    %126 = math.exp %125 : vector<1x8x8xf32>
    %cst_55 = arith.constant dense<0.000000e+00> : vector<1x8xf32>
    %127 = vector.multi_reduction <add>, %126, %cst_55 [2] : vector<1x8x8xf32> to vector<1x8xf32>
    %128 = vector.shape_cast %127 : vector<1x8xf32> to vector<1x8x1xf32>
    %129 = tpu.reciprocal %128 {approx = true} : vector<1x8x1xf32> -> vector<1x8x1xf32>
    %130 = vector.broadcast %129 : vector<1x8x1xf32> to vector<1x8x8xf32>
    %131 = arith.mulf %126, %130 : vector<1x8x8xf32>
    %132 = arith.truncf %131 : vector<1x8x8xf32> to vector<1x8x8xbf16>
    "tpu.trace_start"() <{level = 10 : i32, message = "bqk,bkd->bqd"}> : () -> ()
    %cst_56 = arith.constant dense<0.000000e+00> : vector<1x8x64xf32>
    %133 = tpu.matmul %132, %120, %cst_56 {dimension_numbers = #tpu.dot_dimension_numbers<[2], [1], [1], [2], [0, 0, 0, 1, 1, 2], [0], [0]>} : vector<1x8x8xbf16>, vector<1x8x64xbf16>, vector<1x8x64xf32> -> vector<1x8x64xf32>
    "tpu.trace_stop"() : () -> ()
    %134 = vector.shape_cast %133 : vector<1x8x64xf32> to vector<8x64xf32>
    %135 = arith.truncf %134 : vector<8x64xf32> to vector<8x64xbf16>
    %c4 = arith.constant 4 : index
    %c0_57 = arith.constant 0 : index
    %c0_58 = arith.constant 0 : index
    %136 = vector.load %arg10[%c4, %c0_57, %c0_58] : memref<8x64x512xbf16, #tpu.memory_space<vmem>>, vector<1x64x512xbf16>
    %137 = vector.shape_cast %136 : vector<1x64x512xbf16> to vector<64x512xbf16>
    %cst_59 = arith.constant dense<0.000000e+00> : vector<8x512xf32>
    %138 = tpu.matmul %135, %137, %cst_59 {dimension_numbers = #tpu.dot_dimension_numbers<[1], [0], [0], [1], [0, 0, 1, 1], [], []>} : vector<8x64xbf16>, vector<64x512xbf16>, vector<8x512xf32> -> vector<8x512xf32>
    %139 = arith.addf %117, %138 : vector<8x512xf32>
    %140 = vector.extract_strided_slice %24 {offsets = [0, 0, 320], sizes = [1, 8, 64], strides = [1, 1, 1]} : vector<1x8x512xbf16> to vector<1x8x64xbf16>
    %141 = vector.extract_strided_slice %26 {offsets = [0, 0, 320], sizes = [1, 8, 64], strides = [1, 1, 1]} : vector<1x8x512xbf16> to vector<1x8x64xbf16>
    %142 = vector.extract_strided_slice %28 {offsets = [0, 0, 320], sizes = [1, 8, 64], strides = [1, 1, 1]} : vector<1x8x512xbf16> to vector<1x8x64xbf16>
    "tpu.trace_start"() <{level = 10 : i32, message = "bqd,bkd->bqk"}> : () -> ()
    %cst_60 = arith.constant dense<0.000000e+00> : vector<1x8x8xf32>
    %143 = tpu.matmul %140, %141, %cst_60 {dimension_numbers = #tpu.dot_dimension_numbers<[2], [2], [1], [1], [0, 0, 0, 1, 1, 1], [0], [0]>} : vector<1x8x64xbf16>, vector<1x8x64xbf16>, vector<1x8x8xf32> -> vector<1x8x8xf32>
    "tpu.trace_stop"() : () -> ()
    %cst_61 = arith.constant dense<0xFF800000> : vector<1x8xf32>
    %144 = vector.multi_reduction <maximumf>, %143, %cst_61 [2] : vector<1x8x8xf32> to vector<1x8xf32>
    %145 = vector.shape_cast %144 : vector<1x8xf32> to vector<1x8x1xf32>
    %146 = vector.broadcast %145 : vector<1x8x1xf32> to vector<1x8x8xf32>
    %147 = arith.subf %143, %146 : vector<1x8x8xf32>
    %148 = math.exp %147 : vector<1x8x8xf32>
    %cst_62 = arith.constant dense<0.000000e+00> : vector<1x8xf32>
    %149 = vector.multi_reduction <add>, %148, %cst_62 [2] : vector<1x8x8xf32> to vector<1x8xf32>
    %150 = vector.shape_cast %149 : vector<1x8xf32> to vector<1x8x1xf32>
    %151 = tpu.reciprocal %150 {approx = true} : vector<1x8x1xf32> -> vector<1x8x1xf32>
    %152 = vector.broadcast %151 : vector<1x8x1xf32> to vector<1x8x8xf32>
    %153 = arith.mulf %148, %152 : vector<1x8x8xf32>
    %154 = arith.truncf %153 : vector<1x8x8xf32> to vector<1x8x8xbf16>
    "tpu.trace_start"() <{level = 10 : i32, message = "bqk,bkd->bqd"}> : () -> ()
    %cst_63 = arith.constant dense<0.000000e+00> : vector<1x8x64xf32>
    %155 = tpu.matmul %154, %142, %cst_63 {dimension_numbers = #tpu.dot_dimension_numbers<[2], [1], [1], [2], [0, 0, 0, 1, 1, 2], [0], [0]>} : vector<1x8x8xbf16>, vector<1x8x64xbf16>, vector<1x8x64xf32> -> vector<1x8x64xf32>
    "tpu.trace_stop"() : () -> ()
    %156 = vector.shape_cast %155 : vector<1x8x64xf32> to vector<8x64xf32>
    %157 = arith.truncf %156 : vector<8x64xf32> to vector<8x64xbf16>
    %c5 = arith.constant 5 : index
    %c0_64 = arith.constant 0 : index
    %c0_65 = arith.constant 0 : index
    %158 = vector.load %arg10[%c5, %c0_64, %c0_65] : memref<8x64x512xbf16, #tpu.memory_space<vmem>>, vector<1x64x512xbf16>
    %159 = vector.shape_cast %158 : vector<1x64x512xbf16> to vector<64x512xbf16>
    %cst_66 = arith.constant dense<0.000000e+00> : vector<8x512xf32>
    %160 = tpu.matmul %157, %159, %cst_66 {dimension_numbers = #tpu.dot_dimension_numbers<[1], [0], [0], [1], [0, 0, 1, 1], [], []>} : vector<8x64xbf16>, vector<64x512xbf16>, vector<8x512xf32> -> vector<8x512xf32>
    %161 = arith.addf %139, %160 : vector<8x512xf32>
    %162 = vector.extract_strided_slice %24 {offsets = [0, 0, 384], sizes = [1, 8, 64], strides = [1, 1, 1]} : vector<1x8x512xbf16> to vector<1x8x64xbf16>
    %163 = vector.extract_strided_slice %26 {offsets = [0, 0, 384], sizes = [1, 8, 64], strides = [1, 1, 1]} : vector<1x8x512xbf16> to vector<1x8x64xbf16>
    %164 = vector.extract_strided_slice %28 {offsets = [0, 0, 384], sizes = [1, 8, 64], strides = [1, 1, 1]} : vector<1x8x512xbf16> to vector<1x8x64xbf16>
    "tpu.trace_start"() <{level = 10 : i32, message = "bqd,bkd->bqk"}> : () -> ()
    %cst_67 = arith.constant dense<0.000000e+00> : vector<1x8x8xf32>
    %165 = tpu.matmul %162, %163, %cst_67 {dimension_numbers = #tpu.dot_dimension_numbers<[2], [2], [1], [1], [0, 0, 0, 1, 1, 1], [0], [0]>} : vector<1x8x64xbf16>, vector<1x8x64xbf16>, vector<1x8x8xf32> -> vector<1x8x8xf32>
    "tpu.trace_stop"() : () -> ()
    %cst_68 = arith.constant dense<0xFF800000> : vector<1x8xf32>
    %166 = vector.multi_reduction <maximumf>, %165, %cst_68 [2] : vector<1x8x8xf32> to vector<1x8xf32>
    %167 = vector.shape_cast %166 : vector<1x8xf32> to vector<1x8x1xf32>
    %168 = vector.broadcast %167 : vector<1x8x1xf32> to vector<1x8x8xf32>
    %169 = arith.subf %165, %168 : vector<1x8x8xf32>
    %170 = math.exp %169 : vector<1x8x8xf32>
    %cst_69 = arith.constant dense<0.000000e+00> : vector<1x8xf32>
    %171 = vector.multi_reduction <add>, %170, %cst_69 [2] : vector<1x8x8xf32> to vector<1x8xf32>
    %172 = vector.shape_cast %171 : vector<1x8xf32> to vector<1x8x1xf32>
    %173 = tpu.reciprocal %172 {approx = true} : vector<1x8x1xf32> -> vector<1x8x1xf32>
    %174 = vector.broadcast %173 : vector<1x8x1xf32> to vector<1x8x8xf32>
    %175 = arith.mulf %170, %174 : vector<1x8x8xf32>
    %176 = arith.truncf %175 : vector<1x8x8xf32> to vector<1x8x8xbf16>
    "tpu.trace_start"() <{level = 10 : i32, message = "bqk,bkd->bqd"}> : () -> ()
    %cst_70 = arith.constant dense<0.000000e+00> : vector<1x8x64xf32>
    %177 = tpu.matmul %176, %164, %cst_70 {dimension_numbers = #tpu.dot_dimension_numbers<[2], [1], [1], [2], [0, 0, 0, 1, 1, 2], [0], [0]>} : vector<1x8x8xbf16>, vector<1x8x64xbf16>, vector<1x8x64xf32> -> vector<1x8x64xf32>
    "tpu.trace_stop"() : () -> ()
    %178 = vector.shape_cast %177 : vector<1x8x64xf32> to vector<8x64xf32>
    %179 = arith.truncf %178 : vector<8x64xf32> to vector<8x64xbf16>
    %c6 = arith.constant 6 : index
    %c0_71 = arith.constant 0 : index
    %c0_72 = arith.constant 0 : index
    %180 = vector.load %arg10[%c6, %c0_71, %c0_72] : memref<8x64x512xbf16, #tpu.memory_space<vmem>>, vector<1x64x512xbf16>
    %181 = vector.shape_cast %180 : vector<1x64x512xbf16> to vector<64x512xbf16>
    %cst_73 = arith.constant dense<0.000000e+00> : vector<8x512xf32>
    %182 = tpu.matmul %179, %181, %cst_73 {dimension_numbers = #tpu.dot_dimension_numbers<[1], [0], [0], [1], [0, 0, 1, 1], [], []>} : vector<8x64xbf16>, vector<64x512xbf16>, vector<8x512xf32> -> vector<8x512xf32>
    %183 = arith.addf %161, %182 : vector<8x512xf32>
    %184 = vector.extract_strided_slice %24 {offsets = [0, 0, 448], sizes = [1, 8, 64], strides = [1, 1, 1]} : vector<1x8x512xbf16> to vector<1x8x64xbf16>
    %185 = vector.extract_strided_slice %26 {offsets = [0, 0, 448], sizes = [1, 8, 64], strides = [1, 1, 1]} : vector<1x8x512xbf16> to vector<1x8x64xbf16>
    %186 = vector.extract_strided_slice %28 {offsets = [0, 0, 448], sizes = [1, 8, 64], strides = [1, 1, 1]} : vector<1x8x512xbf16> to vector<1x8x64xbf16>
    "tpu.trace_start"() <{level = 10 : i32, message = "bqd,bkd->bqk"}> : () -> ()
    %cst_74 = arith.constant dense<0.000000e+00> : vector<1x8x8xf32>
    %187 = tpu.matmul %184, %185, %cst_74 {dimension_numbers = #tpu.dot_dimension_numbers<[2], [2], [1], [1], [0, 0, 0, 1, 1, 1], [0], [0]>} : vector<1x8x64xbf16>, vector<1x8x64xbf16>, vector<1x8x8xf32> -> vector<1x8x8xf32>
    "tpu.trace_stop"() : () -> ()
    %cst_75 = arith.constant dense<0xFF800000> : vector<1x8xf32>
    %188 = vector.multi_reduction <maximumf>, %187, %cst_75 [2] : vector<1x8x8xf32> to vector<1x8xf32>
    %189 = vector.shape_cast %188 : vector<1x8xf32> to vector<1x8x1xf32>
    %190 = vector.broadcast %189 : vector<1x8x1xf32> to vector<1x8x8xf32>
    %191 = arith.subf %187, %190 : vector<1x8x8xf32>
    %192 = math.exp %191 : vector<1x8x8xf32>
    %cst_76 = arith.constant dense<0.000000e+00> : vector<1x8xf32>
    %193 = vector.multi_reduction <add>, %192, %cst_76 [2] : vector<1x8x8xf32> to vector<1x8xf32>
    %194 = vector.shape_cast %193 : vector<1x8xf32> to vector<1x8x1xf32>
    %195 = tpu.reciprocal %194 {approx = true} : vector<1x8x1xf32> -> vector<1x8x1xf32>
    %196 = vector.broadcast %195 : vector<1x8x1xf32> to vector<1x8x8xf32>
    %197 = arith.mulf %192, %196 : vector<1x8x8xf32>
    %198 = arith.truncf %197 : vector<1x8x8xf32> to vector<1x8x8xbf16>
    "tpu.trace_start"() <{level = 10 : i32, message = "bqk,bkd->bqd"}> : () -> ()
    %cst_77 = arith.constant dense<0.000000e+00> : vector<1x8x64xf32>
    %199 = tpu.matmul %198, %186, %cst_77 {dimension_numbers = #tpu.dot_dimension_numbers<[2], [1], [1], [2], [0, 0, 0, 1, 1, 2], [0], [0]>} : vector<1x8x8xbf16>, vector<1x8x64xbf16>, vector<1x8x64xf32> -> vector<1x8x64xf32>
    "tpu.trace_stop"() : () -> ()
    %200 = vector.shape_cast %199 : vector<1x8x64xf32> to vector<8x64xf32>
    %201 = arith.truncf %200 : vector<8x64xf32> to vector<8x64xbf16>
    %c7 = arith.constant 7 : index
    %c0_78 = arith.constant 0 : index
    %c0_79 = arith.constant 0 : index
    %202 = vector.load %arg10[%c7, %c0_78, %c0_79] : memref<8x64x512xbf16, #tpu.memory_space<vmem>>, vector<1x64x512xbf16>
    %203 = vector.shape_cast %202 : vector<1x64x512xbf16> to vector<64x512xbf16>
    %cst_80 = arith.constant dense<0.000000e+00> : vector<8x512xf32>
    %204 = tpu.matmul %201, %203, %cst_80 {dimension_numbers = #tpu.dot_dimension_numbers<[1], [0], [0], [1], [0, 0, 1, 1], [], []>} : vector<8x64xbf16>, vector<64x512xbf16>, vector<8x512xf32> -> vector<8x512xf32>
    %205 = arith.addf %183, %204 : vector<8x512xf32>
    %c0_81 = arith.constant 0 : index
    %c0_82 = arith.constant 0 : index
    %206 = vector.load %arg11[%c0_81, %c0_82] : memref<1x512xf32, #tpu.memory_space<vmem>>, vector<1x512xf32>
    %207 = vector.broadcast %206 : vector<1x512xf32> to vector<8x512xf32>
    %208 = arith.addf %205, %207 : vector<8x512xf32>
    %209 = vector.shape_cast %208 : vector<8x512xf32> to vector<1x8x512xf32>
    %c0_83 = arith.constant 0 : index
    %c0_84 = arith.constant 0 : index
    %c0_85 = arith.constant 0 : index
    %210 = vector.load %arg12[%c0_83, %c0_84, %c0_85] : memref<1x8x512xf32, #tpu.memory_space<vmem>>, vector<1x8x512xf32>
    tpu.vector_store %arg12[%c0_83, %c0_84, %c0_85], %209 {strides = array<i32>} : memref<1x8x512xf32, #tpu.memory_space<vmem>>, vector<1x8x512xf32>,
    return
  }
  func.func @transform_0(%arg0: i32) -> (i32, i32, i32) {
    %c0_i32 = arith.constant 0 : i32
    %c0_i32_0 = arith.constant 0 : i32
    %c0_i32_1 = arith.constant 0 : i32
    return %arg0, %c0_i32, %c0_i32_0 : i32, i32, i32
  }
  func.func @transform_1(%arg0: i32) -> (i32, i32, i32) {
    %c0_i32 = arith.constant 0 : i32
    %c0_i32_0 = arith.constant 0 : i32
    %c0_i32_1 = arith.constant 0 : i32
    return %arg0, %c0_i32, %c0_i32_0 : i32, i32, i32
  }
  func.func @transform_2(%arg0: i32) -> (i32, i32, i32) {
    %c0_i32 = arith.constant 0 : i32
    %c0_i32_0 = arith.constant 0 : i32
    %c0_i32_1 = arith.constant 0 : i32
    return %arg0, %c0_i32, %c0_i32_0 : i32, i32, i32
  }
  func.func @transform_3(%arg0: i32) -> (i32, i32) {
    %c0_i32 = arith.constant 0 : i32
    %c0_i32_0 = arith.constant 0 : i32
    %c0_i32_1 = arith.constant 0 : i32
    return %c0_i32, %c0_i32_0 : i32, i32
  }
  func.func @transform_4(%arg0: i32) -> (i32, i32) {
    %c0_i32 = arith.constant 0 : i32
    %c0_i32_0 = arith.constant 0 : i32
    %c0_i32_1 = arith.constant 0 : i32
    return %c0_i32, %c0_i32_0 : i32, i32
  }
  func.func @transform_5(%arg0: i32) -> (i32, i32) {
    %c0_i32 = arith.constant 0 : i32
    %c0_i32_0 = arith.constant 0 : i32
    %c0_i32_1 = arith.constant 0 : i32
    return %c0_i32, %c0_i32_0 : i32, i32
  }
  func.func @transform_6(%arg0: i32) -> (i32, i32) {
    %c0_i32 = arith.constant 0 : i32
    %c0_i32_0 = arith.constant 0 : i32
    %c0_i32_1 = arith.constant 0 : i32
    return %c0_i32, %c0_i32_0 : i32, i32
  }
  func.func @transform_7(%arg0: i32) -> (i32, i32) {
    %c0_i32 = arith.constant 0 : i32
    %c0_i32_0 = arith.constant 0 : i32
    %c0_i32_1 = arith.constant 0 : i32
    return %c0_i32, %c0_i32_0 : i32, i32
  }
  func.func @transform_8(%arg0: i32) -> (i32, i32) {
    %c0_i32 = arith.constant 0 : i32
    %c0_i32_0 = arith.constant 0 : i32
    %c0_i32_1 = arith.constant 0 : i32
    return %c0_i32, %c0_i32_0 : i32, i32
  }
  func.func @transform_9(%arg0: i32) -> (i32, i32, i32) {
    %c0_i32 = arith.constant 0 : i32
    %c0_i32_0 = arith.constant 0 : i32
    %c0_i32_1 = arith.constant 0 : i32
    %c0_i32_2 = arith.constant 0 : i32
    return %c0_i32, %c0_i32_0, %c0_i32_1 : i32, i32, i32
  }
  func.func @transform_10(%arg0: i32) -> (i32, i32) {
    %c0_i32 = arith.constant 0 : i32
    %c0_i32_0 = arith.constant 0 : i32
    %c0_i32_1 = arith.constant 0 : i32
    return %c0_i32, %c0_i32_0 : i32, i32
  }
  func.func @transform_11(%arg0: i32) -> (i32, i32, i32) {
    %c0_i32 = arith.constant 0 : i32
    %c0_i32_0 = arith.constant 0 : i32
    %c0_i32_1 = arith.constant 0 : i32
    return %arg0, %c0_i32, %c0_i32_0 : i32, i32, i32
  }
}

</mosaic_0001>

<llo_original>
// kernel: mhatt_pallas.1
$region0: #{mhatt_pallas.1}
  #allocation0 [shape = 'u32[]', space=smem, size = 0x4, offset = 0x4, fixed_abs, tag = 'smem constant byte address 0x4 - core index']
  #allocation1 [shape = 'u32[144,128]{1,0:T(1,128)}', space=vmem, size = 0x12000, scoped, tag = 'internal scratch']
  %s0 = inlined_call_operand.vmem [shape: bf16[2,8,512], index: 0, kind: input, shape index: {}]
  %s1 = inlined_call_operand.vmem [shape: bf16[2,8,512], index: 1, kind: input, shape index: {}]
  %s2 = inlined_call_operand.vmem [shape: bf16[2,8,512], index: 2, kind: input, shape index: {}]
  %s3 = inlined_call_operand.hbm [shape: bf16[512,512], index: 3, kind: input, shape index: {}]
  %s4 = inlined_call_operand.vmem [shape: f32[1,512], index: 4, kind: input, shape index: {}]
  %s5 = inlined_call_operand.hbm [shape: bf16[512,512], index: 5, kind: input, shape index: {}]
  %s6 = inlined_call_operand.vmem [shape: f32[1,512], index: 6, kind: input, shape index: {}]
  %s7 = inlined_call_operand.hbm [shape: bf16[512,512], index: 7, kind: input, shape index: {}]
  %s8 = inlined_call_operand.vmem [shape: f32[1,512], index: 8, kind: input, shape index: {}]
  %s9 = inlined_call_operand.hbm [shape: bf16[8,64,512], index: 9, kind: input, shape index: {}]
  %s10 = inlined_call_operand.vmem [shape: f32[1,512], index: 10, kind: input, shape index: {}]
  %s11 = inlined_call_operand.hbm [shape: f32[2,8,512], index: 11, kind: output, shape index: {}]
  %s12 = sld [smem:[#allocation0]]
  $region93: #{mhatt_pallas.1} parent=0
    _
  %s14 = ssub.s32 1, %s12
  %s15 = scalar_select 0, %s14, %s12
  $region1: #{mhatt_pallas.1} parent=0
    #allocation2 [shape = 'u8[524288]{0}', space=vmem, size = 0x80000, scoped, tag = 'input window, operand 3, single buffered']
    #allocation3 [shape = 's32[2]{0}', space=sflag, size = 0x8, scoped, tag = 'scoped memory for mhatt_pallas.1']
    #allocation4 [shape = 's32[2]{0}', space=sflag, size = 0x8, scoped, tag = 'scoped memory for mhatt_pallas.1']
    #allocation5 [shape = 'u8[524288]{0}', space=vmem, size = 0x80000, scoped, tag = 'input window, operand 5, single buffered']
    #allocation6 [shape = 's32[1]{0}', space=sflag, size = 0x4, scoped, tag = 'scoped memory for mhatt_pallas.1']
    #allocation7 [shape = 'u8[524288]{0}', space=vmem, size = 0x80000, scoped, tag = 'input window, operand 7, single buffered']
    #allocation8 [shape = 'u8[524288]{0}', space=vmem, size = 0x80000, scoped, tag = 'input window, operand 9, single buffered']
    #allocation9 [shape = 's32[1]{0}', space=sflag, size = 0x4, scoped, tag = 'scoped memory for mhatt_pallas.1']
    #allocation10 [shape = 'u8[32768]{0}', space=vmem, size = 0x8000, scoped, tag = 'output window, operand 0']
    %16 = vsyncpa [#allocation3], 0
    %17 = vsyncpa [#allocation6], 0
    %18 = vsyncpa [#allocation9], 0
    %19 = vsyncpa [#allocation4], 0
    %s20 = scalar_lea.sflag [#allocation4], 1
    %21 = vsyncpa %s20, 0
    loop: start=0, step=1, limit=4
    $region2: #{mhatt_pallas.1} parent=1 // loop_pre_header
      _
    $region3: #{mhatt_pallas.1} parent=1 // loop_header
      %s23 = sphi 0, %s27
      %p24 = scmp.ge.s32.totalorder %s23, 4
      %s33 = sphi 0, %s35
      %s36 = sphi 0, %s33
      %s37 = sphi 0, %s36
      %s53 = sphi 0, %s37
      %s59 = sphi 0, %s61
      %s62 = sphi 0, %s59
      %s63 = sphi 0, %s62
      %s79 = sphi 0, %s63
      %s85 = sphi 0, %s87
      %s88 = sphi 0, %s85
      %s89 = sphi 0, %s88
      %s105 = sphi 0, %s89
      %s109 = sphi 0, %s109
      %s111 = sphi 0, %s109
      %s112 = sphi 0, %s111
      %s126 = sphi 0, %s112
      %s130 = sphi 0, %s130
      %s132 = sphi 0, %s130
      %s133 = sphi 0, %s132
      %s147 = sphi 0, %s133
      %s151 = sphi 0, %s151
      %s153 = sphi 0, %s151
      %s154 = sphi 0, %s153
      %s168 = sphi 0, %s154
      %s172 = sphi 0, %s172
      %s174 = sphi 0, %s172
      %s175 = sphi 0, %s174
      %s189 = sphi 0, %s175
      %s193 = sphi 0, %s193
      %s195 = sphi 0, %s193
      %s196 = sphi 0, %s195
      %s210 = sphi 0, %s196
      %s214 = sphi 0, %s214
      %s216 = sphi 0, %s214
      %s217 = sphi 0, %s216
      %s231 = sphi 0, %s217
      %s235 = sphi 0, %s235
      %s237 = sphi 0, %s235
      %s238 = sphi 0, %s237
      %s252 = sphi 0, %s238
      %s256 = sphi 0, %s256
      %s258 = sphi 0, %s256
      %s259 = sphi 0, %s258
      %s273 = sphi 0, %s259
      %s279 = sphi 0, %s281
      %s282 = sphi 0, %s279
      %s283 = sphi 0, %s282
      %s299 = sphi 0, %s283
    $region4: #{mhatt_pallas.1} parent=1 // loop_header_branch
      %26 = sbr.rel (%p24) target = $region8
    $region5: #{mhatt_pallas.1} parent=1 // loop_body
      %s28 = ssub.s32 %s23, 1
      %s29 = ssub.s32 %s23, 2
      %s30 = sadd.s32 %s23, 1
      %s31 = ssub.s32 %s23, %s30
      %p32 = scmp.eq.s32.totalorder %s31, 0
      %s34 = sadd.s32 %s33, 1
      %s35 = scalar_select %p32, %s33, %s34
      %p38 = pneg %p32
      %p39 = scmp.eq.s32.totalorder %s23, 1
      %p40 = por %p38, %p39
      %p41 = scmp.ne.s32.totalorder %s33, %s36
      %p42 = scmp.eq.s32.totalorder %s23, 0
      %p43 = por %p41, %p42
      %p44 = scmp.ne.s32.totalorder %s33, %s36
      %p45 = scmp.eq.s32.totalorder %s28, 1
      %p46 = por %p44, %p45
      %p47 = scmp.ne.s32.totalorder %s36, %s37
      %p48 = scmp.eq.s32.totalorder %s28, 0
      %p49 = por %p47, %p48
      %p50 = scmp.ne.s32.totalorder %s36, %s37
      %p51 = scmp.eq.s32.totalorder %s29, 1
      %p52 = por %p50, %p51
      %p54 = scmp.ne.s32.totalorder %s37, %s53
      %p55 = scmp.eq.s32.totalorder %s29, 0
      %p56 = por %p54, %p55
      %s57 = ssub.s32 %s23, %s30
      %p58 = scmp.eq.s32.totalorder %s57, 0
      %s60 = sadd.s32 %s59, 1
      %s61 = scalar_select %p58, %s59, %s60
      %p64 = pneg %p58
      %p65 = scmp.eq.s32.totalorder %s23, 1
      %p66 = por %p64, %p65
      %p67 = scmp.ne.s32.totalorder %s59, %s62
      %p68 = scmp.eq.s32.totalorder %s23, 0
      %p69 = por %p67, %p68
      %p70 = scmp.ne.s32.totalorder %s59, %s62
      %p71 = scmp.eq.s32.totalorder %s28, 1
      %p72 = por %p70, %p71
      %p73 = scmp.ne.s32.totalorder %s62, %s63
      %p74 = scmp.eq.s32.totalorder %s28, 0
      %p75 = por %p73, %p74
      %p76 = scmp.ne.s32.totalorder %s62, %s63
      %p77 = scmp.eq.s32.totalorder %s29, 1
      %p78 = por %p76, %p77
      %p80 = scmp.ne.s32.totalorder %s63, %s79
      %p81 = scmp.eq.s32.totalorder %s29, 0
      %p82 = por %p80, %p81
      %s83 = ssub.s32 %s23, %s30
      %p84 = scmp.eq.s32.totalorder %s83, 0
      %s86 = sadd.s32 %s85, 1
      %s87 = scalar_select %p84, %s85, %s86
      %p90 = pneg %p84
      %p91 = scmp.eq.s32.totalorder %s23, 1
      %p92 = por %p90, %p91
      %p93 = scmp.ne.s32.totalorder %s85, %s88
      %p94 = scmp.eq.s32.totalorder %s23, 0
      %p95 = por %p93, %p94
      %p96 = scmp.ne.s32.totalorder %s85, %s88
      %p97 = scmp.eq.s32.totalorder %s28, 1
      %p98 = por %p96, %p97
      %p99 = scmp.ne.s32.totalorder %s88, %s89
      %p100 = scmp.eq.s32.totalorder %s28, 0
      %p101 = por %p99, %p100
      %p102 = scmp.ne.s32.totalorder %s88, %s89
      %p103 = scmp.eq.s32.totalorder %s29, 1
      %p104 = por %p102, %p103
      %p106 = scmp.ne.s32.totalorder %s89, %s105
      %p107 = scmp.eq.s32.totalorder %s29, 0
      %p108 = por %p106, %p107
      %s110 = sadd.s32 %s109, 1
      %p113 = scmp.eq.s32.totalorder %s23, 1
      %p114 = scmp.ne.s32.totalorder %s109, %s111
      %p115 = scmp.eq.s32.totalorder %s23, 0
      %p116 = por %p114, %p115
      %p117 = scmp.ne.s32.totalorder %s109, %s111
      %p118 = scmp.eq.s32.totalorder %s28, 1
      %p119 = por %p117, %p118
      %p120 = scmp.ne.s32.totalorder %s111, %s112
      %p121 = scmp.eq.s32.totalorder %s28, 0
      %p122 = por %p120, %p121
      %p123 = scmp.ne.s32.totalorder %s111, %s112
      %p124 = scmp.eq.s32.totalorder %s29, 1
      %p125 = por %p123, %p124
      %p127 = scmp.ne.s32.totalorder %s112, %s126
      %p128 = scmp.eq.s32.totalorder %s29, 0
      %p129 = por %p127, %p128
      %s131 = sadd.s32 %s130, 1
      %p134 = scmp.eq.s32.totalorder %s23, 1
      %p135 = scmp.ne.s32.totalorder %s130, %s132
      %p136 = scmp.eq.s32.totalorder %s23, 0
      %p137 = por %p135, %p136
      %p138 = scmp.ne.s32.totalorder %s130, %s132
      %p139 = scmp.eq.s32.totalorder %s28, 1
      %p140 = por %p138, %p139
      %p141 = scmp.ne.s32.totalorder %s132, %s133
      %p142 = scmp.eq.s32.totalorder %s28, 0
      %p143 = por %p141, %p142
      %p144 = scmp.ne.s32.totalorder %s132, %s133
      %p145 = scmp.eq.s32.totalorder %s29, 1
      %p146 = por %p144, %p145
      %p148 = scmp.ne.s32.totalorder %s133, %s147
      %p149 = scmp.eq.s32.totalorder %s29, 0
      %p150 = por %p148, %p149
      %s152 = sadd.s32 %s151, 1
      %p155 = scmp.eq.s32.totalorder %s23, 1
      %p156 = scmp.ne.s32.totalorder %s151, %s153
      %p157 = scmp.eq.s32.totalorder %s23, 0
      %p158 = por %p156, %p157
      %p159 = scmp.ne.s32.totalorder %s151, %s153
      %p160 = scmp.eq.s32.totalorder %s28, 1
      %p161 = por %p159, %p160
      %p162 = scmp.ne.s32.totalorder %s153, %s154
      %p163 = scmp.eq.s32.totalorder %s28, 0
      %p164 = por %p162, %p163
      %p165 = scmp.ne.s32.totalorder %s153, %s154
      %p166 = scmp.eq.s32.totalorder %s29, 1
      %p167 = por %p165, %p166
      %p169 = scmp.ne.s32.totalorder %s154, %s168
      %p170 = scmp.eq.s32.totalorder %s29, 0
      %p171 = por %p169, %p170
      %s173 = sadd.s32 %s172, 1
      %p176 = scmp.eq.s32.totalorder %s23, 1
      %p177 = scmp.ne.s32.totalorder %s172, %s174
      %p178 = scmp.eq.s32.totalorder %s23, 0
      %p179 = por %p177, %p178
      %p180 = scmp.ne.s32.totalorder %s172, %s174
      %p181 = scmp.eq.s32.totalorder %s28, 1
      %p182 = por %p180, %p181
      %p183 = scmp.ne.s32.totalorder %s174, %s175
      %p184 = scmp.eq.s32.totalorder %s28, 0
      %p185 = por %p183, %p184
      %p186 = scmp.ne.s32.totalorder %s174, %s175
      %p187 = scmp.eq.s32.totalorder %s29, 1
      %p188 = por %p186, %p187
      %p190 = scmp.ne.s32.totalorder %s175, %s189
      %p191 = scmp.eq.s32.totalorder %s29, 0
      %p192 = por %p190, %p191
      %s194 = sadd.s32 %s193, 1
      %p197 = scmp.eq.s32.totalorder %s23, 1
      %p198 = scmp.ne.s32.totalorder %s193, %s195
      %p199 = scmp.eq.s32.totalorder %s23, 0
      %p200 = por %p198, %p199
      %p201 = scmp.ne.s32.totalorder %s193, %s195
      %p202 = scmp.eq.s32.totalorder %s28, 1
      %p203 = por %p201, %p202
      %p204 = scmp.ne.s32.totalorder %s195, %s196
      %p205 = scmp.eq.s32.totalorder %s28, 0
      %p206 = por %p204, %p205
      %p207 = scmp.ne.s32.totalorder %s195, %s196
      %p208 = scmp.eq.s32.totalorder %s29, 1
      %p209 = por %p207, %p208
      %p211 = scmp.ne.s32.totalorder %s196, %s210
      %p212 = scmp.eq.s32.totalorder %s29, 0
      %p213 = por %p211, %p212
      %s215 = sadd.s32 %s214, 1
      %p218 = scmp.eq.s32.totalorder %s23, 1
      %p219 = scmp.ne.s32.totalorder %s214, %s216
      %p220 = scmp.eq.s32.totalorder %s23, 0
      %p221 = por %p219, %p220
      %p222 = scmp.ne.s32.totalorder %s214, %s216
      %p223 = scmp.eq.s32.totalorder %s28, 1
      %p224 = por %p222, %p223
      %p225 = scmp.ne.s32.totalorder %s216, %s217
      %p226 = scmp.eq.s32.totalorder %s28, 0
      %p227 = por %p225, %p226
      %p228 = scmp.ne.s32.totalorder %s216, %s217
      %p229 = scmp.eq.s32.totalorder %s29, 1
      %p230 = por %p228, %p229
      %p232 = scmp.ne.s32.totalorder %s217, %s231
      %p233 = scmp.eq.s32.totalorder %s29, 0
      %p234 = por %p232, %p233
      %s236 = sadd.s32 %s235, 1
      %p239 = scmp.eq.s32.totalorder %s23, 1
      %p240 = scmp.ne.s32.totalorder %s235, %s237
      %p241 = scmp.eq.s32.totalorder %s23, 0
      %p242 = por %p240, %p241
      %p243 = scmp.ne.s32.totalorder %s235, %s237
      %p244 = scmp.eq.s32.totalorder %s28, 1
      %p245 = por %p243, %p244
      %p246 = scmp.ne.s32.totalorder %s237, %s238
      %p247 = scmp.eq.s32.totalorder %s28, 0
      %p248 = por %p246, %p247
      %p249 = scmp.ne.s32.totalorder %s237, %s238
      %p250 = scmp.eq.s32.totalorder %s29, 1
      %p251 = por %p249, %p250
      %p253 = scmp.ne.s32.totalorder %s238, %s252
      %p254 = scmp.eq.s32.totalorder %s29, 0
      %p255 = por %p253, %p254
      %s257 = sadd.s32 %s256, 1
      %p260 = scmp.eq.s32.totalorder %s23, 1
      %p261 = scmp.ne.s32.totalorder %s256, %s258
      %p262 = scmp.eq.s32.totalorder %s23, 0
      %p263 = por %p261, %p262
      %p264 = scmp.ne.s32.totalorder %s256, %s258
      %p265 = scmp.eq.s32.totalorder %s28, 1
      %p266 = por %p264, %p265
      %p267 = scmp.ne.s32.totalorder %s258, %s259
      %p268 = scmp.eq.s32.totalorder %s28, 0
      %p269 = por %p267, %p268
      %p270 = scmp.ne.s32.totalorder %s258, %s259
      %p271 = scmp.eq.s32.totalorder %s29, 1
      %p272 = por %p270, %p271
      %p274 = scmp.ne.s32.totalorder %s259, %s273
      %p275 = scmp.eq.s32.totalorder %s29, 0
      %p276 = por %p274, %p275
      %s277 = ssub.s32 %s23, %s30
      %p278 = scmp.eq.s32.totalorder %s277, 0
      %s280 = sadd.s32 %s279, 1
      %s281 = scalar_select %p278, %s279, %s280
      %p284 = pneg %p278
      %p285 = scmp.eq.s32.totalorder %s23, 1
      %p286 = por %p284, %p285
      %p287 = scmp.ne.s32.totalorder %s279, %s282
      %p288 = scmp.eq.s32.totalorder %s23, 0
      %p289 = por %p287, %p288
      %p290 = scmp.ne.s32.totalorder %s279, %s282
      %p291 = scmp.eq.s32.totalorder %s28, 1
      %p292 = por %p290, %p291
      %p293 = scmp.ne.s32.totalorder %s282, %s283
      %p294 = scmp.eq.s32.totalorder %s28, 0
      %p295 = por %p293, %p294
      %p296 = scmp.ne.s32.totalorder %s282, %s283
      %p297 = scmp.eq.s32.totalorder %s29, 1
      %p298 = por %p296, %p297
      %p300 = scmp.ne.s32.totalorder %s283, %s299
      %p301 = scmp.eq.s32.totalorder %s29, 0
      %p302 = por %p300, %p301
      %p303 = scmp.le.s32.totalorder 1, %s23
      %p304 = scmp.lt.s32.totalorder %s23, 3
      %p305 = pnand %p303, %p304
      %p306 = pneg %p305
      // Predicated region
      $region9: #{mhatt_pallas.1} parent=5 // pred_check
        _
      $region10: #{mhatt_pallas.1} parent=5 // pred_check_branch
        %308 = sbr.rel (%p305) target = $region12
      $region11: #{mhatt_pallas.1} parent=5 // pred_region
        %s309 = ssub.s32 %s23, 1
        // Predicated region
        $region13: #{mhatt_pallas.1} parent=11 // pred_check
          %p310 = pneg %p122
        $region14: #{mhatt_pallas.1} parent=11 // pred_check_branch
          %312 = sbr.rel (%p310) target = $region16
        $region15: #{mhatt_pallas.1} parent=11 // pred_region
          %s314 = ssub.s32 16384, 16384
          %315 = vsyncadd [#allocation3], %s314
          %s316 = sshll.u32 [#allocation2], 4
          %s317 = int_to_ptr.vmem [resolvable:$true] %s316
          %322 = dma.hbm_to_vmem [thread:$0]  %s3, 16384, %s317, [#allocation3], 256, 256, 16
        $region16: #{mhatt_pallas.1} parent=11 // pred_fallthru
          _
        // Predicated region
        $region17: #{mhatt_pallas.1} parent=11 // pred_check
          %p323 = pneg %p143
        $region18: #{mhatt_pallas.1} parent=11 // pred_check_branch
          %325 = sbr.rel (%p323) target = $region20
        $region19: #{mhatt_pallas.1} parent=11 // pred_region
          _
        $region20: #{mhatt_pallas.1} parent=11 // pred_fallthru
          _
        // Predicated region
        $region21: #{mhatt_pallas.1} parent=11 // pred_check
          %p326 = pneg %p164
        $region22: #{mhatt_pallas.1} parent=11 // pred_check_branch
          %328 = sbr.rel (%p326) target = $region24
        $region23: #{mhatt_pallas.1} parent=11 // pred_region
          %s330 = ssub.s32 16384, 16384
          %331 = vsyncadd [#allocation6], %s330
          %s332 = sshll.u32 [#allocation5], 4
          %s333 = int_to_ptr.vmem [resolvable:$true] %s332
          %338 = dma.hbm_to_vmem [thread:$0]  %s5, 16384, %s333, [#allocation6], 256, 256, 16
        $region24: #{mhatt_pallas.1} parent=11 // pred_fallthru
          _
        // Predicated region
        $region25: #{mhatt_pallas.1} parent=11 // pred_check
          %p339 = pneg %p185
        $region26: #{mhatt_pallas.1} parent=11 // pred_check_branch
          %341 = sbr.rel (%p339) target = $region28
        $region27: #{mhatt_pallas.1} parent=11 // pred_region
          _
        $region28: #{mhatt_pallas.1} parent=11 // pred_fallthru
          _
        // Predicated region
        $region29: #{mhatt_pallas.1} parent=11 // pred_check
          %p342 = pneg %p206
        $region30: #{mhatt_pallas.1} parent=11 // pred_check_branch
          %344 = sbr.rel (%p342) target = $region32
        $region31: #{mhatt_pallas.1} parent=11 // pred_region
          %s346 = ssub.s32 16384, 16384
          %347 = vsyncadd [#allocation6], %s346
          %s348 = sshll.u32 [#allocation7], 4
          %s349 = int_to_ptr.vmem [resolvable:$true] %s348
          %354 = dma.hbm_to_vmem [thread:$0]  %s7, 16384, %s349, [#allocation6], 256, 256, 16
        $region32: #{mhatt_pallas.1} parent=11 // pred_fallthru
          _
        // Predicated region
        $region33: #{mhatt_pallas.1} parent=11 // pred_check
          %p355 = pneg %p227
        $region34: #{mhatt_pallas.1} parent=11 // pred_check_branch
          %357 = sbr.rel (%p355) target = $region36
        $region35: #{mhatt_pallas.1} parent=11 // pred_region
          _
        $region36: #{mhatt_pallas.1} parent=11 // pred_fallthru
          _
        // Predicated region
        $region37: #{mhatt_pallas.1} parent=11 // pred_check
          %p358 = pneg %p248
        $region38: #{mhatt_pallas.1} parent=11 // pred_check_branch
          %360 = sbr.rel (%p358) target = $region40
        $region39: #{mhatt_pallas.1} parent=11 // pred_region
          %s362 = ssub.s32 16384, 16384
          %363 = vsyncadd [#allocation9], %s362
          %s364 = sshll.u32 [#allocation8], 4
          %s365 = int_to_ptr.vmem [resolvable:$true] %s364
          %370 = dma.hbm_to_vmem [thread:$0]  %s9, 16384, %s365, [#allocation9], 256, 256, 16
        $region40: #{mhatt_pallas.1} parent=11 // pred_fallthru
          _
        // Predicated region
        $region41: #{mhatt_pallas.1} parent=11 // pred_check
          %p371 = pneg %p269
        $region42: #{mhatt_pallas.1} parent=11 // pred_check_branch
          %373 = sbr.rel (%p371) target = $region44
        $region43: #{mhatt_pallas.1} parent=11 // pred_region
          _
        $region44: #{mhatt_pallas.1} parent=11 // pred_fallthru
          _
      $region12: #{mhatt_pallas.1} parent=5 // pred_fallthru
        _
      %p374 = scmp.lt.s32.totalorder %s23, 2
      // Predicated region
      $region45: #{mhatt_pallas.1} parent=5 // pred_check
        %p375 = pneg %p374
      $region46: #{mhatt_pallas.1} parent=5 // pred_check_branch
        %377 = sbr.rel (%p375) target = $region48
      $region47: #{mhatt_pallas.1} parent=5 // pred_region
        // Predicated region
        $region49: #{mhatt_pallas.1} parent=47 // pred_check
          %p378 = pneg %p43
        $region50: #{mhatt_pallas.1} parent=47 // pred_check_branch
          %380 = sbr.rel (%p378) target = $region52
        $region51: #{mhatt_pallas.1} parent=47 // pred_region
          %p381 = scmp.lt.s32.totalorder %s23, 1
          %s382 = scalar_select %p381, %s23, 1
          %s383 = smul.addr %s382, 4
          %s384 = smul.addr %s383, 4
          %s385 = scalar_lea.vmem %s0, %s384
        $region52: #{mhatt_pallas.1} parent=47 // pred_fallthru
          _
        // Predicated region
        $region53: #{mhatt_pallas.1} parent=47 // pred_check
          %p386 = pneg %p69
        $region54: #{mhatt_pallas.1} parent=47 // pred_check_branch
          %388 = sbr.rel (%p386) target = $region56
        $region55: #{mhatt_pallas.1} parent=47 // pred_region
          %p389 = scmp.lt.s32.totalorder %s23, 1
          %s390 = scalar_select %p389, %s23, 1
          %s391 = smul.addr %s390, 4
          %s392 = smul.addr %s391, 4
          %s393 = scalar_lea.vmem %s1, %s392
        $region56: #{mhatt_pallas.1} parent=47 // pred_fallthru
          _
        // Predicated region
        $region57: #{mhatt_pallas.1} parent=47 // pred_check
          %p394 = pneg %p95
        $region58: #{mhatt_pallas.1} parent=47 // pred_check_branch
          %396 = sbr.rel (%p394) target = $region60
        $region59: #{mhatt_pallas.1} parent=47 // pred_region
          %p397 = scmp.lt.s32.totalorder %s23, 1
          %s398 = scalar_select %p397, %s23, 1
          %s399 = smul.addr %s398, 4
          %s400 = smul.addr %s399, 4
          %s401 = scalar_lea.vmem %s2, %s400
        $region60: #{mhatt_pallas.1} parent=47 // pred_fallthru
          _
      $region48: #{mhatt_pallas.1} parent=5 // pred_fallthru
        _
      %p402 = scmp.le.s32.totalorder 1, %s23
      %p403 = scmp.lt.s32.totalorder %s23, 3
      %p404 = pnand %p402, %p403
      %p405 = pneg %p404
      // Predicated region
      $region61: #{mhatt_pallas.1} parent=5 // pred_check
        _
      $region62: #{mhatt_pallas.1} parent=5 // pred_check_branch
        %407 = sbr.rel (%p404) target = $region64
      $region63: #{mhatt_pallas.1} parent=5 // pred_region
        %s408 = ssub.s32 %s23, 1
        // Predicated region
        $region65: #{mhatt_pallas.1} parent=63 // pred_check
          %p409 = pneg %p122
        $region66: #{mhatt_pallas.1} parent=63 // pred_check_branch
          %411 = sbr.rel (%p409) target = $region68
        $region67: #{mhatt_pallas.1} parent=63 // pred_region
          %412 = dma.done [#allocation3], 16384
        $region68: #{mhatt_pallas.1} parent=63 // pred_fallthru
          _
        // Predicated region
        $region69: #{mhatt_pallas.1} parent=63 // pred_check
          %p413 = pneg %p164
        $region70: #{mhatt_pallas.1} parent=63 // pred_check_branch
          %415 = sbr.rel (%p413) target = $region72
        $region71: #{mhatt_pallas.1} parent=63 // pred_region
          %416 = dma.done [#allocation6], 16384
        $region72: #{mhatt_pallas.1} parent=63 // pred_fallthru
          _
        // Predicated region
        $region73: #{mhatt_pallas.1} parent=63 // pred_check
          %p417 = pneg %p206
        $region74: #{mhatt_pallas.1} parent=63 // pred_check_branch
          %419 = sbr.rel (%p417) target = $region76
        $region75: #{mhatt_pallas.1} parent=63 // pred_region
          %420 = dma.done [#allocation6], 16384
        $region76: #{mhatt_pallas.1} parent=63 // pred_fallthru
          _
        // Predicated region
        $region77: #{mhatt_pallas.1} parent=63 // pred_check
          %p421 = pneg %p248
        $region78: #{mhatt_pallas.1} parent=63 // pred_check_branch
          %423 = sbr.rel (%p421) target = $region80
        $region79: #{mhatt_pallas.1} parent=63 // pred_region
          %424 = dma.done [#allocation9], 16384
        $region80: #{mhatt_pallas.1} parent=63 // pred_fallthru
          _
        %p425 = scmp.lt.s32.totalorder %s28, 1
        %s426 = scalar_select %p425, %s28, 1
        %s427 = smul.addr %s426, 4
        %s428 = smul.addr %s427, 4
        %s429 = scalar_lea.vmem %s0, %s428
        %p430 = pneg %p49
        %p431 = pneg %p46
        %p432 = scmp.lt.s32.totalorder %s28, 1
        %s433 = scalar_select %p432, %s28, 1
        %s434 = smul.addr %s433, 4
        %s435 = smul.addr %s434, 4
        %s436 = scalar_lea.vmem %s1, %s435
        %p437 = pneg %p75
        %p438 = pneg %p72
        %p439 = scmp.lt.s32.totalorder %s28, 1
        %s440 = scalar_select %p439, %s28, 1
        %s441 = smul.addr %s440, 4
        %s442 = smul.addr %s441, 4
        %s443 = scalar_lea.vmem %s2, %s442
        %p444 = pneg %p101
        %p445 = pneg %p98
        %p446 = pneg %p122
        %p447 = pneg %p119
        %p448 = pneg %p143
        %p449 = pneg %p140
        %p450 = pneg %p164
        %p451 = pneg %p161
        %p452 = pneg %p185
        %p453 = pneg %p182
        %p454 = pneg %p206
        %p455 = pneg %p203
        %p456 = pneg %p227
        %p457 = pneg %p224
        %p458 = pneg %p248
        %p459 = pneg %p245
        %p460 = pneg %p269
        %p461 = pneg %p266
        %p462 = pneg %p295
        %p463 = pneg %p292
        %s464 = sand.u32 %s282, 1
        %s465 = scalar_lea.sflag [#allocation4], %s464
        %s466 = sand.u32 %s282, 1
        %s467 = smul.addr %s466, 32
        %s468 = scalar_lea.vmem [#allocation10], %s467
        %p469 = scmp.lt.s32.totalorder %s28, 1
        %s470 = scalar_select %p469, %s28, 1
        %s471 = smul.addr %s470, 4
        %s472 = smul.addr %s471, 4
        %s473 = scalar_lea.vmem %s0, %s472
        %p474 = scmp.lt.s32.totalorder %s28, 1
        %s475 = scalar_select %p474, %s28, 1
        %s476 = smul.addr %s475, 4
        %s477 = smul.addr %s476, 4
        %s478 = scalar_lea.vmem %s1, %s477
        %p479 = scmp.lt.s32.totalorder %s28, 1
        %s480 = scalar_select %p479, %s28, 1
        %s481 = smul.addr %s480, 4
        %s482 = smul.addr %s481, 4
        %s483 = scalar_lea.vmem %s2, %s482
        %v485 = vld [vmem:[%s473] sm:$0xff]
        %v486 = vld [vmem:[%s473 + $0x8] sm:$0xff]
        %v487 = vld [vmem:[%s478] sm:$0xff]
        %v488 = vld [vmem:[%s478 + $0x8] sm:$0xff]
        %v489 = vld [vmem:[%s483] sm:$0xff]
        %v490 = vld [vmem:[%s483 + $0x8] sm:$0xff]
        %v491 = vld [vmem:[#allocation2] sm:$0xff]
        %v492 = vld [vmem:[#allocation2 + $0x8] sm:$0xff]
        %v493 = vld [vmem:[#allocation2 + $0x10] sm:$0xff]
        %v494 = vld [vmem:[#allocation2 + $0x18] sm:$0xff]
        %v495 = vld [vmem:[#allocation2 + $0x20] sm:$0xff]
        %v496 = vld [vmem:[#allocation2 + $0x28] sm:$0xff]
        %v497 = vld [vmem:[#allocation2 + $0x30] sm:$0xff]
        %v498 = vld [vmem:[#allocation2 + $0x38] sm:$0xff]
        %v499 = vld [vmem:[#allocation2 + $0x40] sm:$0xff]
        %v500 = vld [vmem:[#allocation2 + $0x48] sm:$0xff]
        %v501 = vld [vmem:[#allocation2 + $0x50] sm:$0xff]
        %v502 = vld [vmem:[#allocation2 + $0x58] sm:$0xff]
        %v503 = vld [vmem:[#allocation2 + $0x60] sm:$0xff]
        %v504 = vld [vmem:[#allocation2 + $0x68] sm:$0xff]
        %v505 = vld [vmem:[#allocation2 + $0x70] sm:$0xff]
        %v506 = vld [vmem:[#allocation2 + $0x78] sm:$0xff]
        %v507 = vld [vmem:[#allocation2 + $0x80] sm:$0xff]
        %v508 = vld [vmem:[#allocation2 + $0x88] sm:$0xff]
        %v509 = vld [vmem:[#allocation2 + $0x90] sm:$0xff]
        %v510 = vld [vmem:[#allocation2 + $0x98] sm:$0xff]
        %v511 = vld [vmem:[#allocation2 + $0xa0] sm:$0xff]
        %v512 = vld [vmem:[#allocation2 + $0xa8] sm:$0xff]
        %v513 = vld [vmem:[#allocation2 + $0xb0] sm:$0xff]
        %v514 = vld [vmem:[#allocation2 + $0xb8] sm:$0xff]
        %v515 = vld [vmem:[#allocation2 + $0xc0] sm:$0xff]
        %v516 = vld [vmem:[#allocation2 + $0xc8] sm:$0xff]
        %v517 = vld [vmem:[#allocation2 + $0xd0] sm:$0xff]
        %v518 = vld [vmem:[#allocation2 + $0xd8] sm:$0xff]
        %v519 = vld [vmem:[#allocation2 + $0xe0] sm:$0xff]
        %v520 = vld [vmem:[#allocation2 + $0xe8] sm:$0xff]
        %v521 = vld [vmem:[#allocation2 + $0xf0] sm:$0xff]
        %v522 = vld [vmem:[#allocation2 + $0xf8] sm:$0xff]
        %v523 = vld [vmem:[#allocation2 + $0x100] sm:$0xff]
        %v524 = vld [vmem:[#allocation2 + $0x108] sm:$0xff]
        %v525 = vld [vmem:[#allocation2 + $0x110] sm:$0xff]
        %v526 = vld [vmem:[#allocation2 + $0x118] sm:$0xff]
        %v527 = vld [vmem:[#allocation2 + $0x120] sm:$0xff]
        %v528 = vld [vmem:[#allocation2 + $0x128] sm:$0xff]
        %v529 = vld [vmem:[#allocation2 + $0x130] sm:$0xff]
        %v530 = vld [vmem:[#allocation2 + $0x138] sm:$0xff]
        %v531 = vld [vmem:[#allocation2 + $0x140] sm:$0xff]
        %v532 = vld [vmem:[#allocation2 + $0x148] sm:$0xff]
        %v533 = vld [vmem:[#allocation2 + $0x150] sm:$0xff]
        %v534 = vld [vmem:[#allocation2 + $0x158] sm:$0xff]
        %v535 = vld [vmem:[#allocation2 + $0x160] sm:$0xff]
        %v536 = vld [vmem:[#allocation2 + $0x168] sm:$0xff]
        %v537 = vld [vmem:[#allocation2 + $0x170] sm:$0xff]
        %v538 = vld [vmem:[#allocation2 + $0x178] sm:$0xff]
        %v539 = vld [vmem:[#allocation2 + $0x180] sm:$0xff]
        %v540 = vld [vmem:[#allocation2 + $0x188] sm:$0xff]
        %v541 = vld [vmem:[#allocation2 + $0x190] sm:$0xff]
        %v542 = vld [vmem:[#allocation2 + $0x198] sm:$0xff]
        %v543 = vld [vmem:[#allocation2 + $0x1a0] sm:$0xff]
        %v544 = vld [vmem:[#allocation2 + $0x1a8] sm:$0xff]
        %v545 = vld [vmem:[#allocation2 + $0x1b0] sm:$0xff]
        %v546 = vld [vmem:[#allocation2 + $0x1b8] sm:$0xff]
        %v547 = vld [vmem:[#allocation2 + $0x1c0] sm:$0xff]
        %v548 = vld [vmem:[#allocation2 + $0x1c8] sm:$0xff]
        %v549 = vld [vmem:[#allocation2 + $0x1d0] sm:$0xff]
        %v550 = vld [vmem:[#allocation2 + $0x1d8] sm:$0xff]
        %v551 = vld [vmem:[#allocation2 + $0x1e0] sm:$0xff]
        %v552 = vld [vmem:[#allocation2 + $0x1e8] sm:$0xff]
        %v553 = vld [vmem:[#allocation2 + $0x1f0] sm:$0xff]
        %v554 = vld [vmem:[#allocation2 + $0x1f8] sm:$0xff]
        %v555 = vld [vmem:[#allocation2 + $0x200] sm:$0xff]
        %v556 = vld [vmem:[#allocation2 + $0x208] sm:$0xff]
        %v557 = vld [vmem:[#allocation2 + $0x210] sm:$0xff]
        %v558 = vld [vmem:[#allocation2 + $0x218] sm:$0xff]
        %v559 = vld [vmem:[#allocation2 + $0x220] sm:$0xff]
        %v560 = vld [vmem:[#allocation2 + $0x228] sm:$0xff]
        %v561 = vld [vmem:[#allocation2 + $0x230] sm:$0xff]
        %v562 = vld [vmem:[#allocation2 + $0x238] sm:$0xff]
        %v563 = vld [vmem:[#allocation2 + $0x240] sm:$0xff]
        %v564 = vld [vmem:[#allocation2 + $0x248] sm:$0xff]
        %v565 = vld [vmem:[#allocation2 + $0x250] sm:$0xff]
        %v566 = vld [vmem:[#allocation2 + $0x258] sm:$0xff]
        %v567 = vld [vmem:[#allocation2 + $0x260] sm:$0xff]
        %v568 = vld [vmem:[#allocation2 + $0x268] sm:$0xff]
        %v569 = vld [vmem:[#allocation2 + $0x270] sm:$0xff]
        %v570 = vld [vmem:[#allocation2 + $0x278] sm:$0xff]
        %v571 = vld [vmem:[#allocation2 + $0x280] sm:$0xff]
        %v572 = vld [vmem:[#allocation2 + $0x288] sm:$0xff]
        %v573 = vld [vmem:[#allocation2 + $0x290] sm:$0xff]
        %v574 = vld [vmem:[#allocation2 + $0x298] sm:$0xff]
        %v575 = vld [vmem:[#allocation2 + $0x2a0] sm:$0xff]
        %v576 = vld [vmem:[#allocation2 + $0x2a8] sm:$0xff]
        %v577 = vld [vmem:[#allocation2 + $0x2b0] sm:$0xff]
        %v578 = vld [vmem:[#allocation2 + $0x2b8] sm:$0xff]
        %v579 = vld [vmem:[#allocation2 + $0x2c0] sm:$0xff]
        %v580 = vld [vmem:[#allocation2 + $0x2c8] sm:$0xff]
        %v581 = vld [vmem:[#allocation2 + $0x2d0] sm:$0xff]
        %v582 = vld [vmem:[#allocation2 + $0x2d8] sm:$0xff]
        %v583 = vld [vmem:[#allocation2 + $0x2e0] sm:$0xff]
        %v584 = vld [vmem:[#allocation2 + $0x2e8] sm:$0xff]
        %v585 = vld [vmem:[#allocation2 + $0x2f0] sm:$0xff]
        %v586 = vld [vmem:[#allocation2 + $0x2f8] sm:$0xff]
        %v587 = vld [vmem:[#allocation2 + $0x300] sm:$0xff]
        %v588 = vld [vmem:[#allocation2 + $0x308] sm:$0xff]
        %v589 = vld [vmem:[#allocation2 + $0x310] sm:$0xff]
        %v590 = vld [vmem:[#allocation2 + $0x318] sm:$0xff]
        %v591 = vld [vmem:[#allocation2 + $0x320] sm:$0xff]
        %v592 = vld [vmem:[#allocation2 + $0x328] sm:$0xff]
        %v593 = vld [vmem:[#allocation2 + $0x330] sm:$0xff]
        %v594 = vld [vmem:[#allocation2 + $0x338] sm:$0xff]
        %v595 = vld [vmem:[#allocation2 + $0x340] sm:$0xff]
        %v596 = vld [vmem:[#allocation2 + $0x348] sm:$0xff]
        %v597 = vld [vmem:[#allocation2 + $0x350] sm:$0xff]
        %v598 = vld [vmem:[#allocation2 + $0x358] sm:$0xff]
        %v599 = vld [vmem:[#allocation2 + $0x360] sm:$0xff]
        %v600 = vld [vmem:[#allocation2 + $0x368] sm:$0xff]
        %v601 = vld [vmem:[#allocation2 + $0x370] sm:$0xff]
        %v602 = vld [vmem:[#allocation2 + $0x378] sm:$0xff]
        %v603 = vld [vmem:[#allocation2 + $0x380] sm:$0xff]
        %v604 = vld [vmem:[#allocation2 + $0x388] sm:$0xff]
        %v605 = vld [vmem:[#allocation2 + $0x390] sm:$0xff]
        %v606 = vld [vmem:[#allocation2 + $0x398] sm:$0xff]
        %v607 = vld [vmem:[#allocation2 + $0x3a0] sm:$0xff]
        %v608 = vld [vmem:[#allocation2 + $0x3a8] sm:$0xff]
        %v609 = vld [vmem:[#allocation2 + $0x3b0] sm:$0xff]
        %v610 = vld [vmem:[#allocation2 + $0x3b8] sm:$0xff]
        %v611 = vld [vmem:[#allocation2 + $0x3c0] sm:$0xff]
        %v612 = vld [vmem:[#allocation2 + $0x3c8] sm:$0xff]
        %v613 = vld [vmem:[#allocation2 + $0x3d0] sm:$0xff]
        %v614 = vld [vmem:[#allocation2 + $0x3d8] sm:$0xff]
        %v615 = vld [vmem:[#allocation2 + $0x3e0] sm:$0xff]
        %v616 = vld [vmem:[#allocation2 + $0x3e8] sm:$0xff]
        %v617 = vld [vmem:[#allocation2 + $0x3f0] sm:$0xff]
        %v618 = vld [vmem:[#allocation2 + $0x3f8] sm:$0xff]
        %v619 = vld [vmem:[%s4] sm:$0xf]
        %v621 = vlaneseq
        %v622 = vshrl.u32 %v621, 7
        %v623 = vsub.s32 0, %v622
        %v624 = vrot.slane %v619, %v623
        %v625 = vlaneseq
        %v626 = vshrl.u32 %v625, 7
        %v627 = vsub.s32 1, %v626
        %v628 = vrot.slane %v619, %v627
        %v629 = vlaneseq
        %v630 = vshrl.u32 %v629, 7
        %v631 = vsub.s32 2, %v630
        %v632 = vrot.slane %v619, %v631
        %v633 = vlaneseq
        %v634 = vshrl.u32 %v633, 7
        %v635 = vsub.s32 3, %v634
        %v636 = vrot.slane %v619, %v635
        %v643 = vunpack.c.l.b16 %v485
        %v644 = vunpack.c.h.b16 %v485
        %v645 = vunpack.c.l.b16 %v486
        %v646 = vunpack.c.h.b16 %v486
        %v647 = vpack.c.b16 %v643, %v643
        %v648 = vpack.c.b16 %v644, %v644
        %v649 = vpack.c.b16 %v645, %v645
        %v650 = vpack.c.b16 %v646, %v646
        %v783 = vunpack.c.l.b16 %v491
        %v784 = vunpack.c.h.b16 %v491
        %v785 = vunpack.c.l.b16 %v492
        %v786 = vunpack.c.h.b16 %v492
        %v787 = vunpack.c.l.b16 %v493
        %v788 = vunpack.c.h.b16 %v493
        %v789 = vunpack.c.l.b16 %v494
        %v790 = vunpack.c.h.b16 %v494
        %v791 = vunpack.c.l.b16 %v495
        %v792 = vunpack.c.h.b16 %v495
        %v793 = vunpack.c.l.b16 %v496
        %v794 = vunpack.c.h.b16 %v496
        %v795 = vunpack.c.l.b16 %v497
        %v796 = vunpack.c.h.b16 %v497
        %v797 = vunpack.c.l.b16 %v498
        %v798 = vunpack.c.h.b16 %v498
        %v799 = vunpack.c.l.b16 %v499
        %v800 = vunpack.c.h.b16 %v499
        %v801 = vunpack.c.l.b16 %v500
        %v802 = vunpack.c.h.b16 %v500
        %v803 = vunpack.c.l.b16 %v501
        %v804 = vunpack.c.h.b16 %v501
        %v805 = vunpack.c.l.b16 %v502
        %v806 = vunpack.c.h.b16 %v502
        %v807 = vunpack.c.l.b16 %v503
        %v808 = vunpack.c.h.b16 %v503
        %v809 = vunpack.c.l.b16 %v504
        %v810 = vunpack.c.h.b16 %v504
        %v811 = vunpack.c.l.b16 %v505
        %v812 = vunpack.c.h.b16 %v505
        %v813 = vunpack.c.l.b16 %v506
        %v814 = vunpack.c.h.b16 %v506
        %v815 = vunpack.c.l.b16 %v507
        %v816 = vunpack.c.h.b16 %v507
        %v817 = vunpack.c.l.b16 %v508
        %v818 = vunpack.c.h.b16 %v508
        %v819 = vunpack.c.l.b16 %v509
        %v820 = vunpack.c.h.b16 %v509
        %v821 = vunpack.c.l.b16 %v510
        %v822 = vunpack.c.h.b16 %v510
        %v823 = vunpack.c.l.b16 %v511
        %v824 = vunpack.c.h.b16 %v511
        %v825 = vunpack.c.l.b16 %v512
        %v826 = vunpack.c.h.b16 %v512
        %v827 = vunpack.c.l.b16 %v513
        %v828 = vunpack.c.h.b16 %v513
        %v829 = vunpack.c.l.b16 %v514
        %v830 = vunpack.c.h.b16 %v514
        %v831 = vunpack.c.l.b16 %v515
        %v832 = vunpack.c.h.b16 %v515
        %v833 = vunpack.c.l.b16 %v516
        %v834 = vunpack.c.h.b16 %v516
        %v835 = vunpack.c.l.b16 %v517
        %v836 = vunpack.c.h.b16 %v517
        %v837 = vunpack.c.l.b16 %v518
        %v838 = vunpack.c.h.b16 %v518
        %v839 = vunpack.c.l.b16 %v519
        %v840 = vunpack.c.h.b16 %v519
        %v841 = vunpack.c.l.b16 %v520
        %v842 = vunpack.c.h.b16 %v520
        %v843 = vunpack.c.l.b16 %v521
        %v844 = vunpack.c.h.b16 %v521
        %v845 = vunpack.c.l.b16 %v522
        %v846 = vunpack.c.h.b16 %v522
        %v847 = vunpack.c.l.b16 %v523
        %v848 = vunpack.c.h.b16 %v523
        %v849 = vunpack.c.l.b16 %v524
        %v850 = vunpack.c.h.b16 %v524
        %v851 = vunpack.c.l.b16 %v525
        %v852 = vunpack.c.h.b16 %v525
        %v853 = vunpack.c.l.b16 %v526
        %v854 = vunpack.c.h.b16 %v526
        %v855 = vunpack.c.l.b16 %v527
        %v856 = vunpack.c.h.b16 %v527
        %v857 = vunpack.c.l.b16 %v528
        %v858 = vunpack.c.h.b16 %v528
        %v859 = vunpack.c.l.b16 %v529
        %v860 = vunpack.c.h.b16 %v529
        %v861 = vunpack.c.l.b16 %v530
        %v862 = vunpack.c.h.b16 %v530
        %v863 = vunpack.c.l.b16 %v531
        %v864 = vunpack.c.h.b16 %v531
        %v865 = vunpack.c.l.b16 %v532
        %v866 = vunpack.c.h.b16 %v532
        %v867 = vunpack.c.l.b16 %v533
        %v868 = vunpack.c.h.b16 %v533
        %v869 = vunpack.c.l.b16 %v534
        %v870 = vunpack.c.h.b16 %v534
        %v871 = vunpack.c.l.b16 %v535
        %v872 = vunpack.c.h.b16 %v535
        %v873 = vunpack.c.l.b16 %v536
        %v874 = vunpack.c.h.b16 %v536
        %v875 = vunpack.c.l.b16 %v537
        %v876 = vunpack.c.h.b16 %v537
        %v877 = vunpack.c.l.b16 %v538
        %v878 = vunpack.c.h.b16 %v538
        %v879 = vunpack.c.l.b16 %v539
        %v880 = vunpack.c.h.b16 %v539
        %v881 = vunpack.c.l.b16 %v540
        %v882 = vunpack.c.h.b16 %v540
        %v883 = vunpack.c.l.b16 %v541
        %v884 = vunpack.c.h.b16 %v541
        %v885 = vunpack.c.l.b16 %v542
        %v886 = vunpack.c.h.b16 %v542
        %v887 = vunpack.c.l.b16 %v543
        %v888 = vunpack.c.h.b16 %v543
        %v889 = vunpack.c.l.b16 %v544
        %v890 = vunpack.c.h.b16 %v544
        %v891 = vunpack.c.l.b16 %v545
        %v892 = vunpack.c.h.b16 %v545
        %v893 = vunpack.c.l.b16 %v546
        %v894 = vunpack.c.h.b16 %v546
        %v895 = vunpack.c.l.b16 %v547
        %v896 = vunpack.c.h.b16 %v547
        %v897 = vunpack.c.l.b16 %v548
        %v898 = vunpack.c.h.b16 %v548
        %v899 = vunpack.c.l.b16 %v549
        %v900 = vunpack.c.h.b16 %v549
        %v901 = vunpack.c.l.b16 %v550
        %v902 = vunpack.c.h.b16 %v550
        %v903 = vunpack.c.l.b16 %v551
        %v904 = vunpack.c.h.b16 %v551
        %v905 = vunpack.c.l.b16 %v552
        %v906 = vunpack.c.h.b16 %v552
        %v907 = vunpack.c.l.b16 %v553
        %v908 = vunpack.c.h.b16 %v553
        %v909 = vunpack.c.l.b16 %v554
        %v910 = vunpack.c.h.b16 %v554
        %v911 = vunpack.c.l.b16 %v555
        %v912 = vunpack.c.h.b16 %v555
        %v913 = vunpack.c.l.b16 %v556
        %v914 = vunpack.c.h.b16 %v556
        %v915 = vunpack.c.l.b16 %v557
        %v916 = vunpack.c.h.b16 %v557
        %v917 = vunpack.c.l.b16 %v558
        %v918 = vunpack.c.h.b16 %v558
        %v919 = vunpack.c.l.b16 %v559
        %v920 = vunpack.c.h.b16 %v559
        %v921 = vunpack.c.l.b16 %v560
        %v922 = vunpack.c.h.b16 %v560
        %v923 = vunpack.c.l.b16 %v561
        %v924 = vunpack.c.h.b16 %v561
        %v925 = vunpack.c.l.b16 %v562
        %v926 = vunpack.c.h.b16 %v562
        %v927 = vunpack.c.l.b16 %v563
        %v928 = vunpack.c.h.b16 %v563
        %v929 = vunpack.c.l.b16 %v564
        %v930 = vunpack.c.h.b16 %v564
        %v931 = vunpack.c.l.b16 %v565
        %v932 = vunpack.c.h.b16 %v565
        %v933 = vunpack.c.l.b16 %v566
        %v934 = vunpack.c.h.b16 %v566
        %v935 = vunpack.c.l.b16 %v567
        %v936 = vunpack.c.h.b16 %v567
        %v937 = vunpack.c.l.b16 %v568
        %v938 = vunpack.c.h.b16 %v568
        %v939 = vunpack.c.l.b16 %v569
        %v940 = vunpack.c.h.b16 %v569
        %v941 = vunpack.c.l.b16 %v570
        %v942 = vunpack.c.h.b16 %v570
        %v943 = vunpack.c.l.b16 %v571
        %v944 = vunpack.c.h.b16 %v571
        %v945 = vunpack.c.l.b16 %v572
        %v946 = vunpack.c.h.b16 %v572
        %v947 = vunpack.c.l.b16 %v573
        %v948 = vunpack.c.h.b16 %v573
        %v949 = vunpack.c.l.b16 %v574
        %v950 = vunpack.c.h.b16 %v574
        %v951 = vunpack.c.l.b16 %v575
        %v952 = vunpack.c.h.b16 %v575
        %v953 = vunpack.c.l.b16 %v576
        %v954 = vunpack.c.h.b16 %v576
        %v955 = vunpack.c.l.b16 %v577
        %v956 = vunpack.c.h.b16 %v577
        %v957 = vunpack.c.l.b16 %v578
        %v958 = vunpack.c.h.b16 %v578
        %v959 = vunpack.c.l.b16 %v579
        %v960 = vunpack.c.h.b16 %v579
        %v961 = vunpack.c.l.b16 %v580
        %v962 = vunpack.c.h.b16 %v580
        %v963 = vunpack.c.l.b16 %v581
        %v964 = vunpack.c.h.b16 %v581
        %v965 = vunpack.c.l.b16 %v582
        %v966 = vunpack.c.h.b16 %v582
        %v967 = vunpack.c.l.b16 %v583
        %v968 = vunpack.c.h.b16 %v583
        %v969 = vunpack.c.l.b16 %v584
        %v970 = vunpack.c.h.b16 %v584
        %v971 = vunpack.c.l.b16 %v585
        %v972 = vunpack.c.h.b16 %v585
        %v973 = vunpack.c.l.b16 %v586
        %v974 = vunpack.c.h.b16 %v586
        %v975 = vunpack.c.l.b16 %v587
        %v976 = vunpack.c.h.b16 %v587
        %v977 = vunpack.c.l.b16 %v588
        %v978 = vunpack.c.h.b16 %v588
        %v979 = vunpack.c.l.b16 %v589
        %v980 = vunpack.c.h.b16 %v589
        %v981 = vunpack.c.l.b16 %v590
        %v982 = vunpack.c.h.b16 %v590
        %v983 = vunpack.c.l.b16 %v591
        %v984 = vunpack.c.h.b16 %v591
        %v985 = vunpack.c.l.b16 %v592
        %v986 = vunpack.c.h.b16 %v592
        %v987 = vunpack.c.l.b16 %v593
        %v988 = vunpack.c.h.b16 %v593
        %v989 = vunpack.c.l.b16 %v594
        %v990 = vunpack.c.h.b16 %v594
        %v991 = vunpack.c.l.b16 %v595
        %v992 = vunpack.c.h.b16 %v595
        %v993 = vunpack.c.l.b16 %v596
        %v994 = vunpack.c.h.b16 %v596
        %v995 = vunpack.c.l.b16 %v597
        %v996 = vunpack.c.h.b16 %v597
        %v997 = vunpack.c.l.b16 %v598
        %v998 = vunpack.c.h.b16 %v598
        %v999 = vunpack.c.l.b16 %v599
        %v1000 = vunpack.c.h.b16 %v599
        %v1001 = vunpack.c.l.b16 %v600
        %v1002 = vunpack.c.h.b16 %v600
        %v1003 = vunpack.c.l.b16 %v601
        %v1004 = vunpack.c.h.b16 %v601
        %v1005 = vunpack.c.l.b16 %v602
        %v1006 = vunpack.c.h.b16 %v602
        %v1007 = vunpack.c.l.b16 %v603
        %v1008 = vunpack.c.h.b16 %v603
        %v1009 = vunpack.c.l.b16 %v604
        %v1010 = vunpack.c.h.b16 %v604
        %v1011 = vunpack.c.l.b16 %v605
        %v1012 = vunpack.c.h.b16 %v605
        %v1013 = vunpack.c.l.b16 %v606
        %v1014 = vunpack.c.h.b16 %v606
        %v1015 = vunpack.c.l.b16 %v607
        %v1016 = vunpack.c.h.b16 %v607
        %v1017 = vunpack.c.l.b16 %v608
        %v1018 = vunpack.c.h.b16 %v608
        %v1019 = vunpack.c.l.b16 %v609
        %v1020 = vunpack.c.h.b16 %v609
        %v1021 = vunpack.c.l.b16 %v610
        %v1022 = vunpack.c.h.b16 %v610
        %v1023 = vunpack.c.l.b16 %v611
        %v1024 = vunpack.c.h.b16 %v611
        %v1025 = vunpack.c.l.b16 %v612
        %v1026 = vunpack.c.h.b16 %v612
        %v1027 = vunpack.c.l.b16 %v613
        %v1028 = vunpack.c.h.b16 %v613
        %v1029 = vunpack.c.l.b16 %v614
        %v1030 = vunpack.c.h.b16 %v614
        %v1031 = vunpack.c.l.b16 %v615
        %v1032 = vunpack.c.h.b16 %v615
        %v1033 = vunpack.c.l.b16 %v616
        %v1034 = vunpack.c.h.b16 %v616
        %v1035 = vunpack.c.l.b16 %v617
        %v1036 = vunpack.c.h.b16 %v617
        %v1037 = vunpack.c.l.b16 %v618
        %v1038 = vunpack.c.h.b16 %v618
        %v1039 = vpack.c.b16 %v787, %v783
        %v1040 = vpack.c.b16 %v788, %v784
        %v1041 = vpack.c.b16 %v789, %v785
        %v1042 = vpack.c.b16 %v790, %v786
        %v1043 = vpack.c.b16 %v795, %v791
        %v1044 = vpack.c.b16 %v796, %v792
        %v1045 = vpack.c.b16 %v797, %v793
        %v1046 = vpack.c.b16 %v798, %v794
        %v1047 = vpack.c.b16 %v803, %v799
        %v1048 = vpack.c.b16 %v804, %v800
        %v1049 = vpack.c.b16 %v805, %v801
        %v1050 = vpack.c.b16 %v806, %v802
        %v1051 = vpack.c.b16 %v811, %v807
        %v1052 = vpack.c.b16 %v812, %v808
        %v1053 = vpack.c.b16 %v813, %v809
        %v1054 = vpack.c.b16 %v814, %v810
        %v1055 = vpack.c.b16 %v819, %v815
        %v1056 = vpack.c.b16 %v820, %v816
        %v1057 = vpack.c.b16 %v821, %v817
        %v1058 = vpack.c.b16 %v822, %v818
        %v1059 = vpack.c.b16 %v827, %v823
        %v1060 = vpack.c.b16 %v828, %v824
        %v1061 = vpack.c.b16 %v829, %v825
        %v1062 = vpack.c.b16 %v830, %v826
        %v1063 = vpack.c.b16 %v835, %v831
        %v1064 = vpack.c.b16 %v836, %v832
        %v1065 = vpack.c.b16 %v837, %v833
        %v1066 = vpack.c.b16 %v838, %v834
        %v1067 = vpack.c.b16 %v843, %v839
        %v1068 = vpack.c.b16 %v844, %v840
        %v1069 = vpack.c.b16 %v845, %v841
        %v1070 = vpack.c.b16 %v846, %v842
        %v1071 = vpack.c.b16 %v851, %v847
        %v1072 = vpack.c.b16 %v852, %v848
        %v1073 = vpack.c.b16 %v853, %v849
        %v1074 = vpack.c.b16 %v854, %v850
        %v1075 = vpack.c.b16 %v859, %v855
        %v1076 = vpack.c.b16 %v860, %v856
        %v1077 = vpack.c.b16 %v861, %v857
        %v1078 = vpack.c.b16 %v862, %v858
        %v1079 = vpack.c.b16 %v867, %v863
        %v1080 = vpack.c.b16 %v868, %v864
        %v1081 = vpack.c.b16 %v869, %v865
        %v1082 = vpack.c.b16 %v870, %v866
        %v1083 = vpack.c.b16 %v875, %v871
        %v1084 = vpack.c.b16 %v876, %v872
        %v1085 = vpack.c.b16 %v877, %v873
        %v1086 = vpack.c.b16 %v878, %v874
        %v1087 = vpack.c.b16 %v883, %v879
        %v1088 = vpack.c.b16 %v884, %v880
        %v1089 = vpack.c.b16 %v885, %v881
        %v1090 = vpack.c.b16 %v886, %v882
        %v1091 = vpack.c.b16 %v891, %v887
        %v1092 = vpack.c.b16 %v892, %v888
        %v1093 = vpack.c.b16 %v893, %v889
        %v1094 = vpack.c.b16 %v894, %v890
        %v1095 = vpack.c.b16 %v899, %v895
        %v1096 = vpack.c.b16 %v900, %v896
        %v1097 = vpack.c.b16 %v901, %v897
        %v1098 = vpack.c.b16 %v902, %v898
        %v1099 = vpack.c.b16 %v907, %v903
        %v1100 = vpack.c.b16 %v908, %v904
        %v1101 = vpack.c.b16 %v909, %v905
        %v1102 = vpack.c.b16 %v910, %v906
        %v1103 = vpack.c.b16 %v915, %v911
        %v1104 = vpack.c.b16 %v916, %v912
        %v1105 = vpack.c.b16 %v917, %v913
        %v1106 = vpack.c.b16 %v918, %v914
        %v1107 = vpack.c.b16 %v923, %v919
        %v1108 = vpack.c.b16 %v924, %v920
        %v1109 = vpack.c.b16 %v925, %v921
        %v1110 = vpack.c.b16 %v926, %v922
        %v1111 = vpack.c.b16 %v931, %v927
        %v1112 = vpack.c.b16 %v932, %v928
        %v1113 = vpack.c.b16 %v933, %v929
        %v1114 = vpack.c.b16 %v934, %v930
        %v1115 = vpack.c.b16 %v939, %v935
        %v1116 = vpack.c.b16 %v940, %v936
        %v1117 = vpack.c.b16 %v941, %v937
        %v1118 = vpack.c.b16 %v942, %v938
        %v1119 = vpack.c.b16 %v947, %v943
        %v1120 = vpack.c.b16 %v948, %v944
        %v1121 = vpack.c.b16 %v949, %v945
        %v1122 = vpack.c.b16 %v950, %v946
        %v1123 = vpack.c.b16 %v955, %v951
        %v1124 = vpack.c.b16 %v956, %v952
        %v1125 = vpack.c.b16 %v957, %v953
        %v1126 = vpack.c.b16 %v958, %v954
        %v1127 = vpack.c.b16 %v963, %v959
        %v1128 = vpack.c.b16 %v964, %v960
        %v1129 = vpack.c.b16 %v965, %v961
        %v1130 = vpack.c.b16 %v966, %v962
        %v1131 = vpack.c.b16 %v971, %v967
        %v1132 = vpack.c.b16 %v972, %v968
        %v1133 = vpack.c.b16 %v973, %v969
        %v1134 = vpack.c.b16 %v974, %v970
        %v1135 = vpack.c.b16 %v979, %v975
        %v1136 = vpack.c.b16 %v980, %v976
        %v1137 = vpack.c.b16 %v981, %v977
        %v1138 = vpack.c.b16 %v982, %v978
        %v1139 = vpack.c.b16 %v987, %v983
        %v1140 = vpack.c.b16 %v988, %v984
        %v1141 = vpack.c.b16 %v989, %v985
        %v1142 = vpack.c.b16 %v990, %v986
        %v1143 = vpack.c.b16 %v995, %v991
        %v1144 = vpack.c.b16 %v996, %v992
        %v1145 = vpack.c.b16 %v997, %v993
        %v1146 = vpack.c.b16 %v998, %v994
        %v1147 = vpack.c.b16 %v1003, %v999
        %v1148 = vpack.c.b16 %v1004, %v1000
        %v1149 = vpack.c.b16 %v1005, %v1001
        %v1150 = vpack.c.b16 %v1006, %v1002
        %v1151 = vpack.c.b16 %v1011, %v1007
        %v1152 = vpack.c.b16 %v1012, %v1008
        %v1153 = vpack.c.b16 %v1013, %v1009
        %v1154 = vpack.c.b16 %v1014, %v1010
        %v1155 = vpack.c.b16 %v1019, %v1015
        %v1156 = vpack.c.b16 %v1020, %v1016
        %v1157 = vpack.c.b16 %v1021, %v1017
        %v1158 = vpack.c.b16 %v1022, %v1018
        %v1159 = vpack.c.b16 %v1027, %v1023
        %v1160 = vpack.c.b16 %v1028, %v1024
        %v1161 = vpack.c.b16 %v1029, %v1025
        %v1162 = vpack.c.b16 %v1030, %v1026
        %v1163 = vpack.c.b16 %v1035, %v1031
        %v1164 = vpack.c.b16 %v1036, %v1032
        %v1165 = vpack.c.b16 %v1037, %v1033
        %v1166 = vpack.c.b16 %v1038, %v1034
        %1295 = vmatprep.subr.bf16.mxu0 %v1068
        %1296 = vmatpush1.bf16.msra.mxu0 %v1067
        %1297 = vmatprep.subr.bf16.mxu0 %v1064
        %1298 = vmatpush1.bf16.msra.mxu0 %v1063
        %1299 = vmatprep.subr.bf16.mxu0 %v1060
        %1300 = vmatpush1.bf16.msra.mxu0 %v1059
        %1301 = vmatprep.subr.bf16.mxu0 %v1056
        %1302 = vmatpush1.bf16.msra.mxu0 %v1055
        %1303 = vmatprep.subr.bf16.mxu0 %v1052
        %1304 = vmatpush1.bf16.msra.mxu0 %v1051
        %1305 = vmatprep.subr.bf16.mxu0 %v1048
        %1306 = vmatpush1.bf16.msra.mxu0 %v1047
        %1307 = vmatprep.subr.bf16.mxu0 %v1044
        %1308 = vmatpush1.bf16.msra.mxu0 %v1043
        %1309 = vmatprep.subr.bf16.mxu0 %v1040
        %1310 = vmatpush1.bf16.msra.mxu0 %v1039
        %1311 = vmatprep.subr.bf16.mxu0 %v1100
        %1312 = vmatpush2.bf16.msra.mxu0 %v1099
        %1313 = vmatprep.subr.bf16.mxu0 %v1096
        %1314 = vmatpush2.bf16.msra.mxu0 %v1095
        %1315 = vmatprep.subr.bf16.mxu0 %v1092
        %1316 = vmatpush2.bf16.msra.mxu0 %v1091
        %1317 = vmatprep.subr.bf16.mxu0 %v1088
        %1318 = vmatpush2.bf16.msra.mxu0 %v1087
        %1319 = vmatprep.subr.bf16.mxu0 %v1084
        %1320 = vmatpush2.bf16.msra.mxu0 %v1083
        %1321 = vmatprep.subr.bf16.mxu0 %v1080
        %1322 = vmatpush2.bf16.msra.mxu0 %v1079
        %1323 = vmatprep.subr.bf16.mxu0 %v1076
        %1324 = vmatpush2.bf16.msra.mxu0 %v1075
        %1325 = vmatprep.subr.bf16.mxu0 %v1072
        %1326 = vmatpush2.bf16.msra.mxu0 %v1071
        %1327 = vmatprep.mubr.bf16.mxu0 %v648
        %1328 = vmatmul.mubr.bf16.gmra.mxu0 %v647
        %v1329 = vpop.f32.mrf.mxu0
        %v1330 = vadd.f32 %v624, %v1329
        %v1331 = vpop.f32.mrf.mxu0
        %v1332 = vadd.f32 %v628, %v1331
        %v1333 = vpop.f32.mrf.mxu0
        %v1334 = vpop.f32.mrf.mxu0
        %1335 = vdwg.mxu0
        %1336 = vmatprep.subr.bf16.mxu0 %v1132
        %1337 = vmatpush1.bf16.msra.mxu0 %v1131
        %1338 = vmatprep.subr.bf16.mxu0 %v1128
        %1339 = vmatpush1.bf16.msra.mxu0 %v1127
        %1340 = vmatprep.subr.bf16.mxu0 %v1124
        %1341 = vmatpush1.bf16.msra.mxu0 %v1123
        %1342 = vmatprep.subr.bf16.mxu0 %v1120
        %1343 = vmatpush1.bf16.msra.mxu0 %v1119
        %1344 = vmatprep.subr.bf16.mxu0 %v1116
        %1345 = vmatpush1.bf16.msra.mxu0 %v1115
        %1346 = vmatprep.subr.bf16.mxu0 %v1112
        %1347 = vmatpush1.bf16.msra.mxu0 %v1111
        %1348 = vmatprep.subr.bf16.mxu0 %v1108
        %1349 = vmatpush1.bf16.msra.mxu0 %v1107
        %1350 = vmatprep.subr.bf16.mxu0 %v1104
        %1351 = vmatpush1.bf16.msra.mxu0 %v1103
        %1352 = vmatprep.subr.bf16.mxu0 %v1164
        %1353 = vmatpush2.bf16.msra.mxu0 %v1163
        %1354 = vmatprep.subr.bf16.mxu0 %v1160
        %1355 = vmatpush2.bf16.msra.mxu0 %v1159
        %1356 = vmatprep.subr.bf16.mxu0 %v1156
        %1357 = vmatpush2.bf16.msra.mxu0 %v1155
        %1358 = vmatprep.subr.bf16.mxu0 %v1152
        %1359 = vmatpush2.bf16.msra.mxu0 %v1151
        %1360 = vmatprep.subr.bf16.mxu0 %v1148
        %1361 = vmatpush2.bf16.msra.mxu0 %v1147
        %1362 = vmatprep.subr.bf16.mxu0 %v1144
        %1363 = vmatpush2.bf16.msra.mxu0 %v1143
        %1364 = vmatprep.subr.bf16.mxu0 %v1140
        %1365 = vmatpush2.bf16.msra.mxu0 %v1139
        %1366 = vmatprep.subr.bf16.mxu0 %v1136
        %1367 = vmatpush2.bf16.msra.mxu0 %v1135
        %1368 = vmatprep.mubr.bf16.mxu0 %v650
        %1369 = vmatmul.mubr.bf16.gmra.mxu0 %v649
        %v1370 = vpop.f32.mrf.mxu0
        %v1371 = vadd.f32 %v1330, %v1370
        %v1372 = vpop.f32.mrf.mxu0
        %v1373 = vadd.f32 %v1332, %v1372
        %v1374 = vpop.f32.mrf.mxu0
        %v1375 = vpop.f32.mrf.mxu0
        %1376 = vdwg.mxu0
        %1377 = vmatprep.subr.bf16.mxu0 %v1070
        %1378 = vmatpush1.bf16.msra.mxu0 %v1069
        %1379 = vmatprep.subr.bf16.mxu0 %v1066
        %1380 = vmatpush1.bf16.msra.mxu0 %v1065
        %1381 = vmatprep.subr.bf16.mxu0 %v1062
        %1382 = vmatpush1.bf16.msra.mxu0 %v1061
        %1383 = vmatprep.subr.bf16.mxu0 %v1058
        %1384 = vmatpush1.bf16.msra.mxu0 %v1057
        %1385 = vmatprep.subr.bf16.mxu0 %v1054
        %1386 = vmatpush1.bf16.msra.mxu0 %v1053
        %1387 = vmatprep.subr.bf16.mxu0 %v1050
        %1388 = vmatpush1.bf16.msra.mxu0 %v1049
        %1389 = vmatprep.subr.bf16.mxu0 %v1046
        %1390 = vmatpush1.bf16.msra.mxu0 %v1045
        %1391 = vmatprep.subr.bf16.mxu0 %v1042
        %1392 = vmatpush1.bf16.msra.mxu0 %v1041
        %1393 = vmatprep.subr.bf16.mxu0 %v1102
        %1394 = vmatpush2.bf16.msra.mxu0 %v1101
        %1395 = vmatprep.subr.bf16.mxu0 %v1098
        %1396 = vmatpush2.bf16.msra.mxu0 %v1097
        %1397 = vmatprep.subr.bf16.mxu0 %v1094
        %1398 = vmatpush2.bf16.msra.mxu0 %v1093
        %1399 = vmatprep.subr.bf16.mxu0 %v1090
        %1400 = vmatpush2.bf16.msra.mxu0 %v1089
        %1401 = vmatprep.subr.bf16.mxu0 %v1086
        %1402 = vmatpush2.bf16.msra.mxu0 %v1085
        %1403 = vmatprep.subr.bf16.mxu0 %v1082
        %1404 = vmatpush2.bf16.msra.mxu0 %v1081
        %1405 = vmatprep.subr.bf16.mxu0 %v1078
        %1406 = vmatpush2.bf16.msra.mxu0 %v1077
        %1407 = vmatprep.subr.bf16.mxu0 %v1074
        %1408 = vmatpush2.bf16.msra.mxu0 %v1073
        %1409 = vmatprep.mubr.bf16.mxu0 %v648
        %1410 = vmatmul.mubr.bf16.gmra.mxu0 %v647
        %v1411 = vpop.f32.mrf.mxu0
        %v1412 = vadd.f32 %v632, %v1411
        %v1413 = vpop.f32.mrf.mxu0
        %v1414 = vadd.f32 %v636, %v1413
        %v1415 = vpop.f32.mrf.mxu0
        %v1416 = vpop.f32.mrf.mxu0
        %1417 = vdwg.mxu0
        %1418 = vmatprep.subr.bf16.mxu0 %v1134
        %1419 = vmatpush1.bf16.msra.mxu0 %v1133
        %1420 = vmatprep.subr.bf16.mxu0 %v1130
        %1421 = vmatpush1.bf16.msra.mxu0 %v1129
        %1422 = vmatprep.subr.bf16.mxu0 %v1126
        %1423 = vmatpush1.bf16.msra.mxu0 %v1125
        %1424 = vmatprep.subr.bf16.mxu0 %v1122
        %1425 = vmatpush1.bf16.msra.mxu0 %v1121
        %1426 = vmatprep.subr.bf16.mxu0 %v1118
        %1427 = vmatpush1.bf16.msra.mxu0 %v1117
        %1428 = vmatprep.subr.bf16.mxu0 %v1114
        %1429 = vmatpush1.bf16.msra.mxu0 %v1113
        %1430 = vmatprep.subr.bf16.mxu0 %v1110
        %1431 = vmatpush1.bf16.msra.mxu0 %v1109
        %1432 = vmatprep.subr.bf16.mxu0 %v1106
        %1433 = vmatpush1.bf16.msra.mxu0 %v1105
        %1434 = vmatprep.subr.bf16.mxu0 %v1166
        %1435 = vmatpush2.bf16.msra.mxu0 %v1165
        %1436 = vmatprep.subr.bf16.mxu0 %v1162
        %1437 = vmatpush2.bf16.msra.mxu0 %v1161
        %1438 = vmatprep.subr.bf16.mxu0 %v1158
        %1439 = vmatpush2.bf16.msra.mxu0 %v1157
        %1440 = vmatprep.subr.bf16.mxu0 %v1154
        %1441 = vmatpush2.bf16.msra.mxu0 %v1153
        %1442 = vmatprep.subr.bf16.mxu0 %v1150
        %1443 = vmatpush2.bf16.msra.mxu0 %v1149
        %1444 = vmatprep.subr.bf16.mxu0 %v1146
        %1445 = vmatpush2.bf16.msra.mxu0 %v1145
        %1446 = vmatprep.subr.bf16.mxu0 %v1142
        %1447 = vmatpush2.bf16.msra.mxu0 %v1141
        %1448 = vmatprep.subr.bf16.mxu0 %v1138
        %1449 = vmatpush2.bf16.msra.mxu0 %v1137
        %1450 = vmatprep.mubr.bf16.mxu0 %v650
        %1451 = vmatmul.mubr.bf16.gmra.mxu0 %v649
        %v1452 = vpop.f32.mrf.mxu0
        %v1453 = vadd.f32 %v1412, %v1452
        %v1454 = vpop.f32.mrf.mxu0
        %v1455 = vadd.f32 %v1414, %v1454
        %v1456 = vpop.f32.mrf.mxu0
        %v1457 = vpop.f32.mrf.mxu0
        %1458 = vdwg.mxu0
        %v1459 = vld [vmem:[#allocation5] sm:$0xff]
        %v1460 = vld [vmem:[#allocation5 + $0x8] sm:$0xff]
        %v1461 = vld [vmem:[#allocation5 + $0x10] sm:$0xff]
        %v1462 = vld [vmem:[#allocation5 + $0x18] sm:$0xff]
        %v1463 = vld [vmem:[#allocation5 + $0x20] sm:$0xff]
        %v1464 = vld [vmem:[#allocation5 + $0x28] sm:$0xff]
        %v1465 = vld [vmem:[#allocation5 + $0x30] sm:$0xff]
        %v1466 = vld [vmem:[#allocation5 + $0x38] sm:$0xff]
        %v1467 = vld [vmem:[#allocation5 + $0x40] sm:$0xff]
        %v1468 = vld [vmem:[#allocation5 + $0x48] sm:$0xff]
        %v1469 = vld [vmem:[#allocation5 + $0x50] sm:$0xff]
        %v1470 = vld [vmem:[#allocation5 + $0x58] sm:$0xff]
        %v1471 = vld [vmem:[#allocation5 + $0x60] sm:$0xff]
        %v1472 = vld [vmem:[#allocation5 + $0x68] sm:$0xff]
        %v1473 = vld [vmem:[#allocation5 + $0x70] sm:$0xff]
        %v1474 = vld [vmem:[#allocation5 + $0x78] sm:$0xff]
        %v1475 = vld [vmem:[#allocation5 + $0x80] sm:$0xff]
        %v1476 = vld [vmem:[#allocation5 + $0x88] sm:$0xff]
        %v1477 = vld [vmem:[#allocation5 + $0x90] sm:$0xff]
        %v1478 = vld [vmem:[#allocation5 + $0x98] sm:$0xff]
        %v1479 = vld [vmem:[#allocation5 + $0xa0] sm:$0xff]
        %v1480 = vld [vmem:[#allocation5 + $0xa8] sm:$0xff]
        %v1481 = vld [vmem:[#allocation5 + $0xb0] sm:$0xff]
        %v1482 = vld [vmem:[#allocation5 + $0xb8] sm:$0xff]
        %v1483 = vld [vmem:[#allocation5 + $0xc0] sm:$0xff]
        %v1484 = vld [vmem:[#allocation5 + $0xc8] sm:$0xff]
        %v1485 = vld [vmem:[#allocation5 + $0xd0] sm:$0xff]
        %v1486 = vld [vmem:[#allocation5 + $0xd8] sm:$0xff]
        %v1487 = vld [vmem:[#allocation5 + $0xe0] sm:$0xff]
        %v1488 = vld [vmem:[#allocation5 + $0xe8] sm:$0xff]
        %v1489 = vld [vmem:[#allocation5 + $0xf0] sm:$0xff]
        %v1490 = vld [vmem:[#allocation5 + $0xf8] sm:$0xff]
        %v1491 = vld [vmem:[#allocation5 + $0x100] sm:$0xff]
        %v1492 = vld [vmem:[#allocation5 + $0x108] sm:$0xff]
        %v1493 = vld [vmem:[#allocation5 + $0x110] sm:$0xff]
        %v1494 = vld [vmem:[#allocation5 + $0x118] sm:$0xff]
        %v1495 = vld [vmem:[#allocation5 + $0x120] sm:$0xff]
        %v1496 = vld [vmem:[#allocation5 + $0x128] sm:$0xff]
        %v1497 = vld [vmem:[#allocation5 + $0x130] sm:$0xff]
        %v1498 = vld [vmem:[#allocation5 + $0x138] sm:$0xff]
        %v1499 = vld [vmem:[#allocation5 + $0x140] sm:$0xff]
        %v1500 = vld [vmem:[#allocation5 + $0x148] sm:$0xff]
        %v1501 = vld [vmem:[#allocation5 + $0x150] sm:$0xff]
        %v1502 = vld [vmem:[#allocation5 + $0x158] sm:$0xff]
        %v1503 = vld [vmem:[#allocation5 + $0x160] sm:$0xff]
        %v1504 = vld [vmem:[#allocation5 + $0x168] sm:$0xff]
        %v1505 = vld [vmem:[#allocation5 + $0x170] sm:$0xff]
        %v1506 = vld [vmem:[#allocation5 + $0x178] sm:$0xff]
        %v1507 = vld [vmem:[#allocation5 + $0x180] sm:$0xff]
        %v1508 = vld [vmem:[#allocation5 + $0x188] sm:$0xff]
        %v1509 = vld [vmem:[#allocation5 + $0x190] sm:$0xff]
        %v1510 = vld [vmem:[#allocation5 + $0x198] sm:$0xff]
        %v1511 = vld [vmem:[#allocation5 + $0x1a0] sm:$0xff]
        %v1512 = vld [vmem:[#allocation5 + $0x1a8] sm:$0xff]
        %v1513 = vld [vmem:[#allocation5 + $0x1b0] sm:$0xff]
        %v1514 = vld [vmem:[#allocation5 + $0x1b8] sm:$0xff]
        %v1515 = vld [vmem:[#allocation5 + $0x1c0] sm:$0xff]
        %v1516 = vld [vmem:[#allocation5 + $0x1c8] sm:$0xff]
        %v1517 = vld [vmem:[#allocation5 + $0x1d0] sm:$0xff]
        %v1518 = vld [vmem:[#allocation5 + $0x1d8] sm:$0xff]
        %v1519 = vld [vmem:[#allocation5 + $0x1e0] sm:$0xff]
        %v1520 = vld [vmem:[#allocation5 + $0x1e8] sm:$0xff]
        %v1521 = vld [vmem:[#allocation5 + $0x1f0] sm:$0xff]
        %v1522 = vld [vmem:[#allocation5 + $0x1f8] sm:$0xff]
        %v1523 = vld [vmem:[#allocation5 + $0x200] sm:$0xff]
        %v1524 = vld [vmem:[#allocation5 + $0x208] sm:$0xff]
        %v1525 = vld [vmem:[#allocation5 + $0x210] sm:$0xff]
        %v1526 = vld [vmem:[#allocation5 + $0x218] sm:$0xff]
        %v1527 = vld [vmem:[#allocation5 + $0x220] sm:$0xff]
        %v1528 = vld [vmem:[#allocation5 + $0x228] sm:$0xff]
        %v1529 = vld [vmem:[#allocation5 + $0x230] sm:$0xff]
        %v1530 = vld [vmem:[#allocation5 + $0x238] sm:$0xff]
        %v1531 = vld [vmem:[#allocation5 + $0x240] sm:$0xff]
        %v1532 = vld [vmem:[#allocation5 + $0x248] sm:$0xff]
        %v1533 = vld [vmem:[#allocation5 + $0x250] sm:$0xff]
        %v1534 = vld [vmem:[#allocation5 + $0x258] sm:$0xff]
        %v1535 = vld [vmem:[#allocation5 + $0x260] sm:$0xff]
        %v1536 = vld [vmem:[#allocation5 + $0x268] sm:$0xff]
        %v1537 = vld [vmem:[#allocation5 + $0x270] sm:$0xff]
        %v1538 = vld [vmem:[#allocation5 + $0x278] sm:$0xff]
        %v1539 = vld [vmem:[#allocation5 + $0x280] sm:$0xff]
        %v1540 = vld [vmem:[#allocation5 + $0x288] sm:$0xff]
        %v1541 = vld [vmem:[#allocation5 + $0x290] sm:$0xff]
        %v1542 = vld [vmem:[#allocation5 + $0x298] sm:$0xff]
        %v1543 = vld [vmem:[#allocation5 + $0x2a0] sm:$0xff]
        %v1544 = vld [vmem:[#allocation5 + $0x2a8] sm:$0xff]
        %v1545 = vld [vmem:[#allocation5 + $0x2b0] sm:$0xff]
        %v1546 = vld [vmem:[#allocation5 + $0x2b8] sm:$0xff]
        %v1547 = vld [vmem:[#allocation5 + $0x2c0] sm:$0xff]
        %v1548 = vld [vmem:[#allocation5 + $0x2c8] sm:$0xff]
        %v1549 = vld [vmem:[#allocation5 + $0x2d0] sm:$0xff]
        %v1550 = vld [vmem:[#allocation5 + $0x2d8] sm:$0xff]
        %v1551 = vld [vmem:[#allocation5 + $0x2e0] sm:$0xff]
        %v1552 = vld [vmem:[#allocation5 + $0x2e8] sm:$0xff]
        %v1553 = vld [vmem:[#allocation5 + $0x2f0] sm:$0xff]
        %v1554 = vld [vmem:[#allocation5 + $0x2f8] sm:$0xff]
        %v1555 = vld [vmem:[#allocation5 + $0x300] sm:$0xff]
        %v1556 = vld [vmem:[#allocation5 + $0x308] sm:$0xff]
        %v1557 = vld [vmem:[#allocation5 + $0x310] sm:$0xff]
        %v1558 = vld [vmem:[#allocation5 + $0x318] sm:$0xff]
        %v1559 = vld [vmem:[#allocation5 + $0x320] sm:$0xff]
        %v1560 = vld [vmem:[#allocation5 + $0x328] sm:$0xff]
        %v1561 = vld [vmem:[#allocation5 + $0x330] sm:$0xff]
        %v1562 = vld [vmem:[#allocation5 + $0x338] sm:$0xff]
        %v1563 = vld [vmem:[#allocation5 + $0x340] sm:$0xff]
        %v1564 = vld [vmem:[#allocation5 + $0x348] sm:$0xff]
        %v1565 = vld [vmem:[#allocation5 + $0x350] sm:$0xff]
        %v1566 = vld [vmem:[#allocation5 + $0x358] sm:$0xff]
        %v1567 = vld [vmem:[#allocation5 + $0x360] sm:$0xff]
        %v1568 = vld [vmem:[#allocation5 + $0x368] sm:$0xff]
        %v1569 = vld [vmem:[#allocation5 + $0x370] sm:$0xff]
        %v1570 = vld [vmem:[#allocation5 + $0x378] sm:$0xff]
        %v1571 = vld [vmem:[#allocation5 + $0x380] sm:$0xff]
        %v1572 = vld [vmem:[#allocation5 + $0x388] sm:$0xff]
        %v1573 = vld [vmem:[#allocation5 + $0x390] sm:$0xff]
        %v1574 = vld [vmem:[#allocation5 + $0x398] sm:$0xff]
        %v1575 = vld [vmem:[#allocation5 + $0x3a0] sm:$0xff]
        %v1576 = vld [vmem:[#allocation5 + $0x3a8] sm:$0xff]
        %v1577 = vld [vmem:[#allocation5 + $0x3b0] sm:$0xff]
        %v1578 = vld [vmem:[#allocation5 + $0x3b8] sm:$0xff]
        %v1579 = vld [vmem:[#allocation5 + $0x3c0] sm:$0xff]
        %v1580 = vld [vmem:[#allocation5 + $0x3c8] sm:$0xff]
        %v1581 = vld [vmem:[#allocation5 + $0x3d0] sm:$0xff]
        %v1582 = vld [vmem:[#allocation5 + $0x3d8] sm:$0xff]
        %v1583 = vld [vmem:[#allocation5 + $0x3e0] sm:$0xff]
        %v1584 = vld [vmem:[#allocation5 + $0x3e8] sm:$0xff]
        %v1585 = vld [vmem:[#allocation5 + $0x3f0] sm:$0xff]
        %v1586 = vld [vmem:[#allocation5 + $0x3f8] sm:$0xff]
        %v1587 = vld [vmem:[%s6] sm:$0xf]
        %v1589 = vlaneseq
        %v1590 = vshrl.u32 %v1589, 7
        %v1591 = vsub.s32 0, %v1590
        %v1592 = vrot.slane %v1587, %v1591
        %v1593 = vlaneseq
        %v1594 = vshrl.u32 %v1593, 7
        %v1595 = vsub.s32 1, %v1594
        %v1596 = vrot.slane %v1587, %v1595
        %v1597 = vlaneseq
        %v1598 = vshrl.u32 %v1597, 7
        %v1599 = vsub.s32 2, %v1598
        %v1600 = vrot.slane %v1587, %v1599
        %v1601 = vlaneseq
        %v1602 = vshrl.u32 %v1601, 7
        %v1603 = vsub.s32 3, %v1602
        %v1604 = vrot.slane %v1587, %v1603
        %v1611 = vunpack.c.l.b16 %v487
        %v1612 = vunpack.c.h.b16 %v487
        %v1613 = vunpack.c.l.b16 %v488
        %v1614 = vunpack.c.h.b16 %v488
        %v1615 = vpack.c.b16 %v1611, %v1611
        %v1616 = vpack.c.b16 %v1612, %v1612
        %v1617 = vpack.c.b16 %v1613, %v1613
        %v1618 = vpack.c.b16 %v1614, %v1614
        %v1751 = vunpack.c.l.b16 %v1459
        %v1752 = vunpack.c.h.b16 %v1459
        %v1753 = vunpack.c.l.b16 %v1460
        %v1754 = vunpack.c.h.b16 %v1460
        %v1755 = vunpack.c.l.b16 %v1461
        %v1756 = vunpack.c.h.b16 %v1461
        %v1757 = vunpack.c.l.b16 %v1462
        %v1758 = vunpack.c.h.b16 %v1462
        %v1759 = vunpack.c.l.b16 %v1463
        %v1760 = vunpack.c.h.b16 %v1463
        %v1761 = vunpack.c.l.b16 %v1464
        %v1762 = vunpack.c.h.b16 %v1464
        %v1763 = vunpack.c.l.b16 %v1465
        %v1764 = vunpack.c.h.b16 %v1465
        %v1765 = vunpack.c.l.b16 %v1466
        %v1766 = vunpack.c.h.b16 %v1466
        %v1767 = vunpack.c.l.b16 %v1467
        %v1768 = vunpack.c.h.b16 %v1467
        %v1769 = vunpack.c.l.b16 %v1468
        %v1770 = vunpack.c.h.b16 %v1468
        %v1771 = vunpack.c.l.b16 %v1469
        %v1772 = vunpack.c.h.b16 %v1469
        %v1773 = vunpack.c.l.b16 %v1470
        %v1774 = vunpack.c.h.b16 %v1470
        %v1775 = vunpack.c.l.b16 %v1471
        %v1776 = vunpack.c.h.b16 %v1471
        %v1777 = vunpack.c.l.b16 %v1472
        %v1778 = vunpack.c.h.b16 %v1472
        %v1779 = vunpack.c.l.b16 %v1473
        %v1780 = vunpack.c.h.b16 %v1473
        %v1781 = vunpack.c.l.b16 %v1474
        %v1782 = vunpack.c.h.b16 %v1474
        %v1783 = vunpack.c.l.b16 %v1475
        %v1784 = vunpack.c.h.b16 %v1475
        %v1785 = vunpack.c.l.b16 %v1476
        %v1786 = vunpack.c.h.b16 %v1476
        %v1787 = vunpack.c.l.b16 %v1477
        %v1788 = vunpack.c.h.b16 %v1477
        %v1789 = vunpack.c.l.b16 %v1478
        %v1790 = vunpack.c.h.b16 %v1478
        %v1791 = vunpack.c.l.b16 %v1479
        %v1792 = vunpack.c.h.b16 %v1479
        %v1793 = vunpack.c.l.b16 %v1480
        %v1794 = vunpack.c.h.b16 %v1480
        %v1795 = vunpack.c.l.b16 %v1481
        %v1796 = vunpack.c.h.b16 %v1481
        %v1797 = vunpack.c.l.b16 %v1482
        %v1798 = vunpack.c.h.b16 %v1482
        %v1799 = vunpack.c.l.b16 %v1483
        %v1800 = vunpack.c.h.b16 %v1483
        %v1801 = vunpack.c.l.b16 %v1484
        %v1802 = vunpack.c.h.b16 %v1484
        %v1803 = vunpack.c.l.b16 %v1485
        %v1804 = vunpack.c.h.b16 %v1485
        %v1805 = vunpack.c.l.b16 %v1486
        %v1806 = vunpack.c.h.b16 %v1486
        %v1807 = vunpack.c.l.b16 %v1487
        %v1808 = vunpack.c.h.b16 %v1487
        %v1809 = vunpack.c.l.b16 %v1488
        %v1810 = vunpack.c.h.b16 %v1488
        %v1811 = vunpack.c.l.b16 %v1489
        %v1812 = vunpack.c.h.b16 %v1489
        %v1813 = vunpack.c.l.b16 %v1490
        %v1814 = vunpack.c.h.b16 %v1490
        %v1815 = vunpack.c.l.b16 %v1491
        %v1816 = vunpack.c.h.b16 %v1491
        %v1817 = vunpack.c.l.b16 %v1492
        %v1818 = vunpack.c.h.b16 %v1492
        %v1819 = vunpack.c.l.b16 %v1493
        %v1820 = vunpack.c.h.b16 %v1493
        %v1821 = vunpack.c.l.b16 %v1494
        %v1822 = vunpack.c.h.b16 %v1494
        %v1823 = vunpack.c.l.b16 %v1495
        %v1824 = vunpack.c.h.b16 %v1495
        %v1825 = vunpack.c.l.b16 %v1496
        %v1826 = vunpack.c.h.b16 %v1496
        %v1827 = vunpack.c.l.b16 %v1497
        %v1828 = vunpack.c.h.b16 %v1497
        %v1829 = vunpack.c.l.b16 %v1498
        %v1830 = vunpack.c.h.b16 %v1498
        %v1831 = vunpack.c.l.b16 %v1499
        %v1832 = vunpack.c.h.b16 %v1499
        %v1833 = vunpack.c.l.b16 %v1500
        %v1834 = vunpack.c.h.b16 %v1500
        %v1835 = vunpack.c.l.b16 %v1501
        %v1836 = vunpack.c.h.b16 %v1501
        %v1837 = vunpack.c.l.b16 %v1502
        %v1838 = vunpack.c.h.b16 %v1502
        %v1839 = vunpack.c.l.b16 %v1503
        %v1840 = vunpack.c.h.b16 %v1503
        %v1841 = vunpack.c.l.b16 %v1504
        %v1842 = vunpack.c.h.b16 %v1504
        %v1843 = vunpack.c.l.b16 %v1505
        %v1844 = vunpack.c.h.b16 %v1505
        %v1845 = vunpack.c.l.b16 %v1506
        %v1846 = vunpack.c.h.b16 %v1506
        %v1847 = vunpack.c.l.b16 %v1507
        %v1848 = vunpack.c.h.b16 %v1507
        %v1849 = vunpack.c.l.b16 %v1508
        %v1850 = vunpack.c.h.b16 %v1508
        %v1851 = vunpack.c.l.b16 %v1509
        %v1852 = vunpack.c.h.b16 %v1509
        %v1853 = vunpack.c.l.b16 %v1510
        %v1854 = vunpack.c.h.b16 %v1510
        %v1855 = vunpack.c.l.b16 %v1511
        %v1856 = vunpack.c.h.b16 %v1511
        %v1857 = vunpack.c.l.b16 %v1512
        %v1858 = vunpack.c.h.b16 %v1512
        %v1859 = vunpack.c.l.b16 %v1513
        %v1860 = vunpack.c.h.b16 %v1513
        %v1861 = vunpack.c.l.b16 %v1514
        %v1862 = vunpack.c.h.b16 %v1514
        %v1863 = vunpack.c.l.b16 %v1515
        %v1864 = vunpack.c.h.b16 %v1515
        %v1865 = vunpack.c.l.b16 %v1516
        %v1866 = vunpack.c.h.b16 %v1516
        %v1867 = vunpack.c.l.b16 %v1517
        %v1868 = vunpack.c.h.b16 %v1517
        %v1869 = vunpack.c.l.b16 %v1518
        %v1870 = vunpack.c.h.b16 %v1518
        %v1871 = vunpack.c.l.b16 %v1519
        %v1872 = vunpack.c.h.b16 %v1519
        %v1873 = vunpack.c.l.b16 %v1520
        %v1874 = vunpack.c.h.b16 %v1520
        %v1875 = vunpack.c.l.b16 %v1521
        %v1876 = vunpack.c.h.b16 %v1521
        %v1877 = vunpack.c.l.b16 %v1522
        %v1878 = vunpack.c.h.b16 %v1522
        %v1879 = vunpack.c.l.b16 %v1523
        %v1880 = vunpack.c.h.b16 %v1523
        %v1881 = vunpack.c.l.b16 %v1524
        %v1882 = vunpack.c.h.b16 %v1524
        %v1883 = vunpack.c.l.b16 %v1525
        %v1884 = vunpack.c.h.b16 %v1525
        %v1885 = vunpack.c.l.b16 %v1526
        %v1886 = vunpack.c.h.b16 %v1526
        %v1887 = vunpack.c.l.b16 %v1527
        %v1888 = vunpack.c.h.b16 %v1527
        %v1889 = vunpack.c.l.b16 %v1528
        %v1890 = vunpack.c.h.b16 %v1528
        %v1891 = vunpack.c.l.b16 %v1529
        %v1892 = vunpack.c.h.b16 %v1529
        %v1893 = vunpack.c.l.b16 %v1530
        %v1894 = vunpack.c.h.b16 %v1530
        %v1895 = vunpack.c.l.b16 %v1531
        %v1896 = vunpack.c.h.b16 %v1531
        %v1897 = vunpack.c.l.b16 %v1532
        %v1898 = vunpack.c.h.b16 %v1532
        %v1899 = vunpack.c.l.b16 %v1533
        %v1900 = vunpack.c.h.b16 %v1533
        %v1901 = vunpack.c.l.b16 %v1534
        %v1902 = vunpack.c.h.b16 %v1534
        %v1903 = vunpack.c.l.b16 %v1535
        %v1904 = vunpack.c.h.b16 %v1535
        %v1905 = vunpack.c.l.b16 %v1536
        %v1906 = vunpack.c.h.b16 %v1536
        %v1907 = vunpack.c.l.b16 %v1537
        %v1908 = vunpack.c.h.b16 %v1537
        %v1909 = vunpack.c.l.b16 %v1538
        %v1910 = vunpack.c.h.b16 %v1538
        %v1911 = vunpack.c.l.b16 %v1539
        %v1912 = vunpack.c.h.b16 %v1539
        %v1913 = vunpack.c.l.b16 %v1540
        %v1914 = vunpack.c.h.b16 %v1540
        %v1915 = vunpack.c.l.b16 %v1541
        %v1916 = vunpack.c.h.b16 %v1541
        %v1917 = vunpack.c.l.b16 %v1542
        %v1918 = vunpack.c.h.b16 %v1542
        %v1919 = vunpack.c.l.b16 %v1543
        %v1920 = vunpack.c.h.b16 %v1543
        %v1921 = vunpack.c.l.b16 %v1544
        %v1922 = vunpack.c.h.b16 %v1544
        %v1923 = vunpack.c.l.b16 %v1545
        %v1924 = vunpack.c.h.b16 %v1545
        %v1925 = vunpack.c.l.b16 %v1546
        %v1926 = vunpack.c.h.b16 %v1546
        %v1927 = vunpack.c.l.b16 %v1547
        %v1928 = vunpack.c.h.b16 %v1547
        %v1929 = vunpack.c.l.b16 %v1548
        %v1930 = vunpack.c.h.b16 %v1548
        %v1931 = vunpack.c.l.b16 %v1549
        %v1932 = vunpack.c.h.b16 %v1549
        %v1933 = vunpack.c.l.b16 %v1550
        %v1934 = vunpack.c.h.b16 %v1550
        %v1935 = vunpack.c.l.b16 %v1551
        %v1936 = vunpack.c.h.b16 %v1551
        %v1937 = vunpack.c.l.b16 %v1552
        %v1938 = vunpack.c.h.b16 %v1552
        %v1939 = vunpack.c.l.b16 %v1553
        %v1940 = vunpack.c.h.b16 %v1553
        %v1941 = vunpack.c.l.b16 %v1554
        %v1942 = vunpack.c.h.b16 %v1554
        %v1943 = vunpack.c.l.b16 %v1555
        %v1944 = vunpack.c.h.b16 %v1555
        %v1945 = vunpack.c.l.b16 %v1556
        %v1946 = vunpack.c.h.b16 %v1556
        %v1947 = vunpack.c.l.b16 %v1557
        %v1948 = vunpack.c.h.b16 %v1557
        %v1949 = vunpack.c.l.b16 %v1558
        %v1950 = vunpack.c.h.b16 %v1558
        %v1951 = vunpack.c.l.b16 %v1559
        %v1952 = vunpack.c.h.b16 %v1559
        %v1953 = vunpack.c.l.b16 %v1560
        %v1954 = vunpack.c.h.b16 %v1560
        %v1955 = vunpack.c.l.b16 %v1561
        %v1956 = vunpack.c.h.b16 %v1561
        %v1957 = vunpack.c.l.b16 %v1562
        %v1958 = vunpack.c.h.b16 %v1562
        %v1959 = vunpack.c.l.b16 %v1563
        %v1960 = vunpack.c.h.b16 %v1563
        %v1961 = vunpack.c.l.b16 %v1564
        %v1962 = vunpack.c.h.b16 %v1564
        %v1963 = vunpack.c.l.b16 %v1565
        %v1964 = vunpack.c.h.b16 %v1565
        %v1965 = vunpack.c.l.b16 %v1566
        %v1966 = vunpack.c.h.b16 %v1566
        %v1967 = vunpack.c.l.b16 %v1567
        %v1968 = vunpack.c.h.b16 %v1567
        %v1969 = vunpack.c.l.b16 %v1568
        %v1970 = vunpack.c.h.b16 %v1568
        %v1971 = vunpack.c.l.b16 %v1569
        %v1972 = vunpack.c.h.b16 %v1569
        %v1973 = vunpack.c.l.b16 %v1570
        %v1974 = vunpack.c.h.b16 %v1570
        %v1975 = vunpack.c.l.b16 %v1571
        %v1976 = vunpack.c.h.b16 %v1571
        %v1977 = vunpack.c.l.b16 %v1572
        %v1978 = vunpack.c.h.b16 %v1572
        %v1979 = vunpack.c.l.b16 %v1573
        %v1980 = vunpack.c.h.b16 %v1573
        %v1981 = vunpack.c.l.b16 %v1574
        %v1982 = vunpack.c.h.b16 %v1574
        %v1983 = vunpack.c.l.b16 %v1575
        %v1984 = vunpack.c.h.b16 %v1575
        %v1985 = vunpack.c.l.b16 %v1576
        %v1986 = vunpack.c.h.b16 %v1576
        %v1987 = vunpack.c.l.b16 %v1577
        %v1988 = vunpack.c.h.b16 %v1577
        %v1989 = vunpack.c.l.b16 %v1578
        %v1990 = vunpack.c.h.b16 %v1578
        %v1991 = vunpack.c.l.b16 %v1579
        %v1992 = vunpack.c.h.b16 %v1579
        %v1993 = vunpack.c.l.b16 %v1580
        %v1994 = vunpack.c.h.b16 %v1580
        %v1995 = vunpack.c.l.b16 %v1581
        %v1996 = vunpack.c.h.b16 %v1581
        %v1997 = vunpack.c.l.b16 %v1582
        %v1998 = vunpack.c.h.b16 %v1582
        %v1999 = vunpack.c.l.b16 %v1583
        %v2000 = vunpack.c.h.b16 %v1583
        %v2001 = vunpack.c.l.b16 %v1584
        %v2002 = vunpack.c.h.b16 %v1584
        %v2003 = vunpack.c.l.b16 %v1585
        %v2004 = vunpack.c.h.b16 %v1585
        %v2005 = vunpack.c.l.b16 %v1586
        %v2006 = vunpack.c.h.b16 %v1586
        %v2007 = vpack.c.b16 %v1755, %v1751
        %v2008 = vpack.c.b16 %v1756, %v1752
        %v2009 = vpack.c.b16 %v1757, %v1753
        %v2010 = vpack.c.b16 %v1758, %v1754
        %v2011 = vpack.c.b16 %v1763, %v1759
        %v2012 = vpack.c.b16 %v1764, %v1760
        %v2013 = vpack.c.b16 %v1765, %v1761
        %v2014 = vpack.c.b16 %v1766, %v1762
        %v2015 = vpack.c.b16 %v1771, %v1767
        %v2016 = vpack.c.b16 %v1772, %v1768
        %v2017 = vpack.c.b16 %v1773, %v1769
        %v2018 = vpack.c.b16 %v1774, %v1770
        %v2019 = vpack.c.b16 %v1779, %v1775
        %v2020 = vpack.c.b16 %v1780, %v1776
        %v2021 = vpack.c.b16 %v1781, %v1777
        %v2022 = vpack.c.b16 %v1782, %v1778
        %v2023 = vpack.c.b16 %v1787, %v1783
        %v2024 = vpack.c.b16 %v1788, %v1784
        %v2025 = vpack.c.b16 %v1789, %v1785
        %v2026 = vpack.c.b16 %v1790, %v1786
        %v2027 = vpack.c.b16 %v1795, %v1791
        %v2028 = vpack.c.b16 %v1796, %v1792
        %v2029 = vpack.c.b16 %v1797, %v1793
        %v2030 = vpack.c.b16 %v1798, %v1794
        %v2031 = vpack.c.b16 %v1803, %v1799
        %v2032 = vpack.c.b16 %v1804, %v1800
        %v2033 = vpack.c.b16 %v1805, %v1801
        %v2034 = vpack.c.b16 %v1806, %v1802
        %v2035 = vpack.c.b16 %v1811, %v1807
        %v2036 = vpack.c.b16 %v1812, %v1808
        %v2037 = vpack.c.b16 %v1813, %v1809
        %v2038 = vpack.c.b16 %v1814, %v1810
        %v2039 = vpack.c.b16 %v1819, %v1815
        %v2040 = vpack.c.b16 %v1820, %v1816
        %v2041 = vpack.c.b16 %v1821, %v1817
        %v2042 = vpack.c.b16 %v1822, %v1818
        %v2043 = vpack.c.b16 %v1827, %v1823
        %v2044 = vpack.c.b16 %v1828, %v1824
        %v2045 = vpack.c.b16 %v1829, %v1825
        %v2046 = vpack.c.b16 %v1830, %v1826
        %v2047 = vpack.c.b16 %v1835, %v1831
        %v2048 = vpack.c.b16 %v1836, %v1832
        %v2049 = vpack.c.b16 %v1837, %v1833
        %v2050 = vpack.c.b16 %v1838, %v1834
        %v2051 = vpack.c.b16 %v1843, %v1839
        %v2052 = vpack.c.b16 %v1844, %v1840
        %v2053 = vpack.c.b16 %v1845, %v1841
        %v2054 = vpack.c.b16 %v1846, %v1842
        %v2055 = vpack.c.b16 %v1851, %v1847
        %v2056 = vpack.c.b16 %v1852, %v1848
        %v2057 = vpack.c.b16 %v1853, %v1849
        %v2058 = vpack.c.b16 %v1854, %v1850
        %v2059 = vpack.c.b16 %v1859, %v1855
        %v2060 = vpack.c.b16 %v1860, %v1856
        %v2061 = vpack.c.b16 %v1861, %v1857
        %v2062 = vpack.c.b16 %v1862, %v1858
        %v2063 = vpack.c.b16 %v1867, %v1863
        %v2064 = vpack.c.b16 %v1868, %v1864
        %v2065 = vpack.c.b16 %v1869, %v1865
        %v2066 = vpack.c.b16 %v1870, %v1866
        %v2067 = vpack.c.b16 %v1875, %v1871
        %v2068 = vpack.c.b16 %v1876, %v1872
        %v2069 = vpack.c.b16 %v1877, %v1873
        %v2070 = vpack.c.b16 %v1878, %v1874
        %v2071 = vpack.c.b16 %v1883, %v1879
        %v2072 = vpack.c.b16 %v1884, %v1880
        %v2073 = vpack.c.b16 %v1885, %v1881
        %v2074 = vpack.c.b16 %v1886, %v1882
        %v2075 = vpack.c.b16 %v1891, %v1887
        %v2076 = vpack.c.b16 %v1892, %v1888
        %v2077 = vpack.c.b16 %v1893, %v1889
        %v2078 = vpack.c.b16 %v1894, %v1890
        %v2079 = vpack.c.b16 %v1899, %v1895
        %v2080 = vpack.c.b16 %v1900, %v1896
        %v2081 = vpack.c.b16 %v1901, %v1897
        %v2082 = vpack.c.b16 %v1902, %v1898
        %v2083 = vpack.c.b16 %v1907, %v1903
        %v2084 = vpack.c.b16 %v1908, %v1904
        %v2085 = vpack.c.b16 %v1909, %v1905
        %v2086 = vpack.c.b16 %v1910, %v1906
        %v2087 = vpack.c.b16 %v1915, %v1911
        %v2088 = vpack.c.b16 %v1916, %v1912
        %v2089 = vpack.c.b16 %v1917, %v1913
        %v2090 = vpack.c.b16 %v1918, %v1914
        %v2091 = vpack.c.b16 %v1923, %v1919
        %v2092 = vpack.c.b16 %v1924, %v1920
        %v2093 = vpack.c.b16 %v1925, %v1921
        %v2094 = vpack.c.b16 %v1926, %v1922
        %v2095 = vpack.c.b16 %v1931, %v1927
        %v2096 = vpack.c.b16 %v1932, %v1928
        %v2097 = vpack.c.b16 %v1933, %v1929
        %v2098 = vpack.c.b16 %v1934, %v1930
        %v2099 = vpack.c.b16 %v1939, %v1935
        %v2100 = vpack.c.b16 %v1940, %v1936
        %v2101 = vpack.c.b16 %v1941, %v1937
        %v2102 = vpack.c.b16 %v1942, %v1938
        %v2103 = vpack.c.b16 %v1947, %v1943
        %v2104 = vpack.c.b16 %v1948, %v1944
        %v2105 = vpack.c.b16 %v1949, %v1945
        %v2106 = vpack.c.b16 %v1950, %v1946
        %v2107 = vpack.c.b16 %v1955, %v1951
        %v2108 = vpack.c.b16 %v1956, %v1952
        %v2109 = vpack.c.b16 %v1957, %v1953
        %v2110 = vpack.c.b16 %v1958, %v1954
        %v2111 = vpack.c.b16 %v1963, %v1959
        %v2112 = vpack.c.b16 %v1964, %v1960
        %v2113 = vpack.c.b16 %v1965, %v1961
        %v2114 = vpack.c.b16 %v1966, %v1962
        %v2115 = vpack.c.b16 %v1971, %v1967
        %v2116 = vpack.c.b16 %v1972, %v1968
        %v2117 = vpack.c.b16 %v1973, %v1969
        %v2118 = vpack.c.b16 %v1974, %v1970
        %v2119 = vpack.c.b16 %v1979, %v1975
        %v2120 = vpack.c.b16 %v1980, %v1976
        %v2121 = vpack.c.b16 %v1981, %v1977
        %v2122 = vpack.c.b16 %v1982, %v1978
        %v2123 = vpack.c.b16 %v1987, %v1983
        %v2124 = vpack.c.b16 %v1988, %v1984
        %v2125 = vpack.c.b16 %v1989, %v1985
        %v2126 = vpack.c.b16 %v1990, %v1986
        %v2127 = vpack.c.b16 %v1995, %v1991
        %v2128 = vpack.c.b16 %v1996, %v1992
        %v2129 = vpack.c.b16 %v1997, %v1993
        %v2130 = vpack.c.b16 %v1998, %v1994
        %v2131 = vpack.c.b16 %v2003, %v1999
        %v2132 = vpack.c.b16 %v2004, %v2000
        %v2133 = vpack.c.b16 %v2005, %v2001
        %v2134 = vpack.c.b16 %v2006, %v2002
        %2263 = vmatprep.subr.bf16.mxu0 %v2036
        %2264 = vmatpush1.bf16.msra.mxu0 %v2035
        %2265 = vmatprep.subr.bf16.mxu0 %v2032
        %2266 = vmatpush1.bf16.msra.mxu0 %v2031
        %2267 = vmatprep.subr.bf16.mxu0 %v2028
        %2268 = vmatpush1.bf16.msra.mxu0 %v2027
        %2269 = vmatprep.subr.bf16.mxu0 %v2024
        %2270 = vmatpush1.bf16.msra.mxu0 %v2023
        %2271 = vmatprep.subr.bf16.mxu0 %v2020
        %2272 = vmatpush1.bf16.msra.mxu0 %v2019
        %2273 = vmatprep.subr.bf16.mxu0 %v2016
        %2274 = vmatpush1.bf16.msra.mxu0 %v2015
        %2275 = vmatprep.subr.bf16.mxu0 %v2012
        %2276 = vmatpush1.bf16.msra.mxu0 %v2011
        %2277 = vmatprep.subr.bf16.mxu0 %v2008
        %2278 = vmatpush1.bf16.msra.mxu0 %v2007
        %2279 = vmatprep.subr.bf16.mxu0 %v2068
        %2280 = vmatpush2.bf16.msra.mxu0 %v2067
        %2281 = vmatprep.subr.bf16.mxu0 %v2064
        %2282 = vmatpush2.bf16.msra.mxu0 %v2063
        %2283 = vmatprep.subr.bf16.mxu0 %v2060
        %2284 = vmatpush2.bf16.msra.mxu0 %v2059
        %2285 = vmatprep.subr.bf16.mxu0 %v2056
        %2286 = vmatpush2.bf16.msra.mxu0 %v2055
        %2287 = vmatprep.subr.bf16.mxu0 %v2052
        %2288 = vmatpush2.bf16.msra.mxu0 %v2051
        %2289 = vmatprep.subr.bf16.mxu0 %v2048
        %2290 = vmatpush2.bf16.msra.mxu0 %v2047
        %2291 = vmatprep.subr.bf16.mxu0 %v2044
        %2292 = vmatpush2.bf16.msra.mxu0 %v2043
        %2293 = vmatprep.subr.bf16.mxu0 %v2040
        %2294 = vmatpush2.bf16.msra.mxu0 %v2039
        %2295 = vmatprep.mubr.bf16.mxu0 %v1616
        %2296 = vmatmul.mubr.bf16.gmra.mxu0 %v1615
        %v2297 = vpop.f32.mrf.mxu0
        %v2298 = vadd.f32 %v1592, %v2297
        %v2299 = vpop.f32.mrf.mxu0
        %v2300 = vadd.f32 %v1596, %v2299
        %v2301 = vpop.f32.mrf.mxu0
        %v2302 = vpop.f32.mrf.mxu0
        %2303 = vdwg.mxu0
        %2304 = vmatprep.subr.bf16.mxu0 %v2100
        %2305 = vmatpush1.bf16.msra.mxu0 %v2099
        %2306 = vmatprep.subr.bf16.mxu0 %v2096
        %2307 = vmatpush1.bf16.msra.mxu0 %v2095
        %2308 = vmatprep.subr.bf16.mxu0 %v2092
        %2309 = vmatpush1.bf16.msra.mxu0 %v2091
        %2310 = vmatprep.subr.bf16.mxu0 %v2088
        %2311 = vmatpush1.bf16.msra.mxu0 %v2087
        %2312 = vmatprep.subr.bf16.mxu0 %v2084
        %2313 = vmatpush1.bf16.msra.mxu0 %v2083
        %2314 = vmatprep.subr.bf16.mxu0 %v2080
        %2315 = vmatpush1.bf16.msra.mxu0 %v2079
        %2316 = vmatprep.subr.bf16.mxu0 %v2076
        %2317 = vmatpush1.bf16.msra.mxu0 %v2075
        %2318 = vmatprep.subr.bf16.mxu0 %v2072
        %2319 = vmatpush1.bf16.msra.mxu0 %v2071
        %2320 = vmatprep.subr.bf16.mxu0 %v2132
        %2321 = vmatpush2.bf16.msra.mxu0 %v2131
        %2322 = vmatprep.subr.bf16.mxu0 %v2128
        %2323 = vmatpush2.bf16.msra.mxu0 %v2127
        %2324 = vmatprep.subr.bf16.mxu0 %v2124
        %2325 = vmatpush2.bf16.msra.mxu0 %v2123
        %2326 = vmatprep.subr.bf16.mxu0 %v2120
        %2327 = vmatpush2.bf16.msra.mxu0 %v2119
        %2328 = vmatprep.subr.bf16.mxu0 %v2116
        %2329 = vmatpush2.bf16.msra.mxu0 %v2115
        %2330 = vmatprep.subr.bf16.mxu0 %v2112
        %2331 = vmatpush2.bf16.msra.mxu0 %v2111
        %2332 = vmatprep.subr.bf16.mxu0 %v2108
        %2333 = vmatpush2.bf16.msra.mxu0 %v2107
        %2334 = vmatprep.subr.bf16.mxu0 %v2104
        %2335 = vmatpush2.bf16.msra.mxu0 %v2103
        %2336 = vmatprep.mubr.bf16.mxu0 %v1618
        %2337 = vmatmul.mubr.bf16.gmra.mxu0 %v1617
        %v2338 = vpop.f32.mrf.mxu0
        %v2339 = vadd.f32 %v2298, %v2338
        %v2340 = vpop.f32.mrf.mxu0
        %v2341 = vadd.f32 %v2300, %v2340
        %v2342 = vpop.f32.mrf.mxu0
        %v2343 = vpop.f32.mrf.mxu0
        %2344 = vdwg.mxu0
        %2345 = vmatprep.subr.bf16.mxu0 %v2038
        %2346 = vmatpush1.bf16.msra.mxu0 %v2037
        %2347 = vmatprep.subr.bf16.mxu0 %v2034
        %2348 = vmatpush1.bf16.msra.mxu0 %v2033
        %2349 = vmatprep.subr.bf16.mxu0 %v2030
        %2350 = vmatpush1.bf16.msra.mxu0 %v2029
        %2351 = vmatprep.subr.bf16.mxu0 %v2026
        %2352 = vmatpush1.bf16.msra.mxu0 %v2025
        %2353 = vmatprep.subr.bf16.mxu0 %v2022
        %2354 = vmatpush1.bf16.msra.mxu0 %v2021
        %2355 = vmatprep.subr.bf16.mxu0 %v2018
        %2356 = vmatpush1.bf16.msra.mxu0 %v2017
        %2357 = vmatprep.subr.bf16.mxu0 %v2014
        %2358 = vmatpush1.bf16.msra.mxu0 %v2013
        %2359 = vmatprep.subr.bf16.mxu0 %v2010
        %2360 = vmatpush1.bf16.msra.mxu0 %v2009
        %2361 = vmatprep.subr.bf16.mxu0 %v2070
        %2362 = vmatpush2.bf16.msra.mxu0 %v2069
        %2363 = vmatprep.subr.bf16.mxu0 %v2066
        %2364 = vmatpush2.bf16.msra.mxu0 %v2065
        %2365 = vmatprep.subr.bf16.mxu0 %v2062
        %2366 = vmatpush2.bf16.msra.mxu0 %v2061
        %2367 = vmatprep.subr.bf16.mxu0 %v2058
        %2368 = vmatpush2.bf16.msra.mxu0 %v2057
        %2369 = vmatprep.subr.bf16.mxu0 %v2054
        %2370 = vmatpush2.bf16.msra.mxu0 %v2053
        %2371 = vmatprep.subr.bf16.mxu0 %v2050
        %2372 = vmatpush2.bf16.msra.mxu0 %v2049
        %2373 = vmatprep.subr.bf16.mxu0 %v2046
        %2374 = vmatpush2.bf16.msra.mxu0 %v2045
        %2375 = vmatprep.subr.bf16.mxu0 %v2042
        %2376 = vmatpush2.bf16.msra.mxu0 %v2041
        %2377 = vmatprep.mubr.bf16.mxu0 %v1616
        %2378 = vmatmul.mubr.bf16.gmra.mxu0 %v1615
        %v2379 = vpop.f32.mrf.mxu0
        %v2380 = vadd.f32 %v1600, %v2379
        %v2381 = vpop.f32.mrf.mxu0
        %v2382 = vadd.f32 %v1604, %v2381
        %v2383 = vpop.f32.mrf.mxu0
        %v2384 = vpop.f32.mrf.mxu0
        %2385 = vdwg.mxu0
        %2386 = vmatprep.subr.bf16.mxu0 %v2102
        %2387 = vmatpush1.bf16.msra.mxu0 %v2101
        %2388 = vmatprep.subr.bf16.mxu0 %v2098
        %2389 = vmatpush1.bf16.msra.mxu0 %v2097
        %2390 = vmatprep.subr.bf16.mxu0 %v2094
        %2391 = vmatpush1.bf16.msra.mxu0 %v2093
        %2392 = vmatprep.subr.bf16.mxu0 %v2090
        %2393 = vmatpush1.bf16.msra.mxu0 %v2089
        %2394 = vmatprep.subr.bf16.mxu0 %v2086
        %2395 = vmatpush1.bf16.msra.mxu0 %v2085
        %2396 = vmatprep.subr.bf16.mxu0 %v2082
        %2397 = vmatpush1.bf16.msra.mxu0 %v2081
        %2398 = vmatprep.subr.bf16.mxu0 %v2078
        %2399 = vmatpush1.bf16.msra.mxu0 %v2077
        %2400 = vmatprep.subr.bf16.mxu0 %v2074
        %2401 = vmatpush1.bf16.msra.mxu0 %v2073
        %2402 = vmatprep.subr.bf16.mxu0 %v2134
        %2403 = vmatpush2.bf16.msra.mxu0 %v2133
        %2404 = vmatprep.subr.bf16.mxu0 %v2130
        %2405 = vmatpush2.bf16.msra.mxu0 %v2129
        %2406 = vmatprep.subr.bf16.mxu0 %v2126
        %2407 = vmatpush2.bf16.msra.mxu0 %v2125
        %2408 = vmatprep.subr.bf16.mxu0 %v2122
        %2409 = vmatpush2.bf16.msra.mxu0 %v2121
        %2410 = vmatprep.subr.bf16.mxu0 %v2118
        %2411 = vmatpush2.bf16.msra.mxu0 %v2117
        %2412 = vmatprep.subr.bf16.mxu0 %v2114
        %2413 = vmatpush2.bf16.msra.mxu0 %v2113
        %2414 = vmatprep.subr.bf16.mxu0 %v2110
        %2415 = vmatpush2.bf16.msra.mxu0 %v2109
        %2416 = vmatprep.subr.bf16.mxu0 %v2106
        %2417 = vmatpush2.bf16.msra.mxu0 %v2105
        %2418 = vmatprep.mubr.bf16.mxu0 %v1618
        %2419 = vmatmul.mubr.bf16.gmra.mxu0 %v1617
        %v2420 = vpop.f32.mrf.mxu0
        %v2421 = vadd.f32 %v2380, %v2420
        %v2422 = vpop.f32.mrf.mxu0
        %v2423 = vadd.f32 %v2382, %v2422
        %v2424 = vpop.f32.mrf.mxu0
        %v2425 = vpop.f32.mrf.mxu0
        %2426 = vdwg.mxu0
        %v2427 = vld [vmem:[#allocation7] sm:$0xff]
        %v2428 = vld [vmem:[#allocation7 + $0x8] sm:$0xff]
        %v2429 = vld [vmem:[#allocation7 + $0x10] sm:$0xff]
        %v2430 = vld [vmem:[#allocation7 + $0x18] sm:$0xff]
        %v2431 = vld [vmem:[#allocation7 + $0x20] sm:$0xff]
        %v2432 = vld [vmem:[#allocation7 + $0x28] sm:$0xff]
        %v2433 = vld [vmem:[#allocation7 + $0x30] sm:$0xff]
        %v2434 = vld [vmem:[#allocation7 + $0x38] sm:$0xff]
        %v2435 = vld [vmem:[#allocation7 + $0x40] sm:$0xff]
        %v2436 = vld [vmem:[#allocation7 + $0x48] sm:$0xff]
        %v2437 = vld [vmem:[#allocation7 + $0x50] sm:$0xff]
        %v2438 = vld [vmem:[#allocation7 + $0x58] sm:$0xff]
        %v2439 = vld [vmem:[#allocation7 + $0x60] sm:$0xff]
        %v2440 = vld [vmem:[#allocation7 + $0x68] sm:$0xff]
        %v2441 = vld [vmem:[#allocation7 + $0x70] sm:$0xff]
        %v2442 = vld [vmem:[#allocation7 + $0x78] sm:$0xff]
        %v2443 = vld [vmem:[#allocation7 + $0x80] sm:$0xff]
        %v2444 = vld [vmem:[#allocation7 + $0x88] sm:$0xff]
        %v2445 = vld [vmem:[#allocation7 + $0x90] sm:$0xff]
        %v2446 = vld [vmem:[#allocation7 + $0x98] sm:$0xff]
        %v2447 = vld [vmem:[#allocation7 + $0xa0] sm:$0xff]
        %v2448 = vld [vmem:[#allocation7 + $0xa8] sm:$0xff]
        %v2449 = vld [vmem:[#allocation7 + $0xb0] sm:$0xff]
        %v2450 = vld [vmem:[#allocation7 + $0xb8] sm:$0xff]
        %v2451 = vld [vmem:[#allocation7 + $0xc0] sm:$0xff]
        %v2452 = vld [vmem:[#allocation7 + $0xc8] sm:$0xff]
        %v2453 = vld [vmem:[#allocation7 + $0xd0] sm:$0xff]
        %v2454 = vld [vmem:[#allocation7 + $0xd8] sm:$0xff]
        %v2455 = vld [vmem:[#allocation7 + $0xe0] sm:$0xff]
        %v2456 = vld [vmem:[#allocation7 + $0xe8] sm:$0xff]
        %v2457 = vld [vmem:[#allocation7 + $0xf0] sm:$0xff]
        %v2458 = vld [vmem:[#allocation7 + $0xf8] sm:$0xff]
        %v2459 = vld [vmem:[#allocation7 + $0x100] sm:$0xff]
        %v2460 = vld [vmem:[#allocation7 + $0x108] sm:$0xff]
        %v2461 = vld [vmem:[#allocation7 + $0x110] sm:$0xff]
        %v2462 = vld [vmem:[#allocation7 + $0x118] sm:$0xff]
        %v2463 = vld [vmem:[#allocation7 + $0x120] sm:$0xff]
        %v2464 = vld [vmem:[#allocation7 + $0x128] sm:$0xff]
        %v2465 = vld [vmem:[#allocation7 + $0x130] sm:$0xff]
        %v2466 = vld [vmem:[#allocation7 + $0x138] sm:$0xff]
        %v2467 = vld [vmem:[#allocation7 + $0x140] sm:$0xff]
        %v2468 = vld [vmem:[#allocation7 + $0x148] sm:$0xff]
        %v2469 = vld [vmem:[#allocation7 + $0x150] sm:$0xff]
        %v2470 = vld [vmem:[#allocation7 + $0x158] sm:$0xff]
        %v2471 = vld [vmem:[#allocation7 + $0x160] sm:$0xff]
        %v2472 = vld [vmem:[#allocation7 + $0x168] sm:$0xff]
        %v2473 = vld [vmem:[#allocation7 + $0x170] sm:$0xff]
        %v2474 = vld [vmem:[#allocation7 + $0x178] sm:$0xff]
        %v2475 = vld [vmem:[#allocation7 + $0x180] sm:$0xff]
        %v2476 = vld [vmem:[#allocation7 + $0x188] sm:$0xff]
        %v2477 = vld [vmem:[#allocation7 + $0x190] sm:$0xff]
        %v2478 = vld [vmem:[#allocation7 + $0x198] sm:$0xff]
        %v2479 = vld [vmem:[#allocation7 + $0x1a0] sm:$0xff]
        %v2480 = vld [vmem:[#allocation7 + $0x1a8] sm:$0xff]
        %v2481 = vld [vmem:[#allocation7 + $0x1b0] sm:$0xff]
        %v2482 = vld [vmem:[#allocation7 + $0x1b8] sm:$0xff]
        %v2483 = vld [vmem:[#allocation7 + $0x1c0] sm:$0xff]
        %v2484 = vld [vmem:[#allocation7 + $0x1c8] sm:$0xff]
        %v2485 = vld [vmem:[#allocation7 + $0x1d0] sm:$0xff]
        %v2486 = vld [vmem:[#allocation7 + $0x1d8] sm:$0xff]
        %v2487 = vld [vmem:[#allocation7 + $0x1e0] sm:$0xff]
        %v2488 = vld [vmem:[#allocation7 + $0x1e8] sm:$0xff]
        %v2489 = vld [vmem:[#allocation7 + $0x1f0] sm:$0xff]
        %v2490 = vld [vmem:[#allocation7 + $0x1f8] sm:$0xff]
        %v2491 = vld [vmem:[#allocation7 + $0x200] sm:$0xff]
        %v2492 = vld [vmem:[#allocation7 + $0x208] sm:$0xff]
        %v2493 = vld [vmem:[#allocation7 + $0x210] sm:$0xff]
        %v2494 = vld [vmem:[#allocation7 + $0x218] sm:$0xff]
        %v2495 = vld [vmem:[#allocation7 + $0x220] sm:$0xff]
        %v2496 = vld [vmem:[#allocation7 + $0x228] sm:$0xff]
        %v2497 = vld [vmem:[#allocation7 + $0x230] sm:$0xff]
        %v2498 = vld [vmem:[#allocation7 + $0x238] sm:$0xff]
        %v2499 = vld [vmem:[#allocation7 + $0x240] sm:$0xff]
        %v2500 = vld [vmem:[#allocation7 + $0x248] sm:$0xff]
        %v2501 = vld [vmem:[#allocation7 + $0x250] sm:$0xff]
        %v2502 = vld [vmem:[#allocation7 + $0x258] sm:$0xff]
        %v2503 = vld [vmem:[#allocation7 + $0x260] sm:$0xff]
        %v2504 = vld [vmem:[#allocation7 + $0x268] sm:$0xff]
        %v2505 = vld [vmem:[#allocation7 + $0x270] sm:$0xff]
        %v2506 = vld [vmem:[#allocation7 + $0x278] sm:$0xff]
        %v2507 = vld [vmem:[#allocation7 + $0x280] sm:$0xff]
        %v2508 = vld [vmem:[#allocation7 + $0x288] sm:$0xff]
        %v2509 = vld [vmem:[#allocation7 + $0x290] sm:$0xff]
        %v2510 = vld [vmem:[#allocation7 + $0x298] sm:$0xff]
        %v2511 = vld [vmem:[#allocation7 + $0x2a0] sm:$0xff]
        %v2512 = vld [vmem:[#allocation7 + $0x2a8] sm:$0xff]
        %v2513 = vld [vmem:[#allocation7 + $0x2b0] sm:$0xff]
        %v2514 = vld [vmem:[#allocation7 + $0x2b8] sm:$0xff]
        %v2515 = vld [vmem:[#allocation7 + $0x2c0] sm:$0xff]
        %v2516 = vld [vmem:[#allocation7 + $0x2c8] sm:$0xff]
        %v2517 = vld [vmem:[#allocation7 + $0x2d0] sm:$0xff]
        %v2518 = vld [vmem:[#allocation7 + $0x2d8] sm:$0xff]
        %v2519 = vld [vmem:[#allocation7 + $0x2e0] sm:$0xff]
        %v2520 = vld [vmem:[#allocation7 + $0x2e8] sm:$0xff]
        %v2521 = vld [vmem:[#allocation7 + $0x2f0] sm:$0xff]
        %v2522 = vld [vmem:[#allocation7 + $0x2f8] sm:$0xff]
        %v2523 = vld [vmem:[#allocation7 + $0x300] sm:$0xff]
        %v2524 = vld [vmem:[#allocation7 + $0x308] sm:$0xff]
        %v2525 = vld [vmem:[#allocation7 + $0x310] sm:$0xff]
        %v2526 = vld [vmem:[#allocation7 + $0x318] sm:$0xff]
        %v2527 = vld [vmem:[#allocation7 + $0x320] sm:$0xff]
        %v2528 = vld [vmem:[#allocation7 + $0x328] sm:$0xff]
        %v2529 = vld [vmem:[#allocation7 + $0x330] sm:$0xff]
        %v2530 = vld [vmem:[#allocation7 + $0x338] sm:$0xff]
        %v2531 = vld [vmem:[#allocation7 + $0x340] sm:$0xff]
        %v2532 = vld [vmem:[#allocation7 + $0x348] sm:$0xff]
        %v2533 = vld [vmem:[#allocation7 + $0x350] sm:$0xff]
        %v2534 = vld [vmem:[#allocation7 + $0x358] sm:$0xff]
        %v2535 = vld [vmem:[#allocation7 + $0x360] sm:$0xff]
        %v2536 = vld [vmem:[#allocation7 + $0x368] sm:$0xff]
        %v2537 = vld [vmem:[#allocation7 + $0x370] sm:$0xff]
        %v2538 = vld [vmem:[#allocation7 + $0x378] sm:$0xff]
        %v2539 = vld [vmem:[#allocation7 + $0x380] sm:$0xff]
        %v2540 = vld [vmem:[#allocation7 + $0x388] sm:$0xff]
        %v2541 = vld [vmem:[#allocation7 + $0x390] sm:$0xff]
        %v2542 = vld [vmem:[#allocation7 + $0x398] sm:$0xff]
        %v2543 = vld [vmem:[#allocation7 + $0x3a0] sm:$0xff]
        %v2544 = vld [vmem:[#allocation7 + $0x3a8] sm:$0xff]
        %v2545 = vld [vmem:[#allocation7 + $0x3b0] sm:$0xff]
        %v2546 = vld [vmem:[#allocation7 + $0x3b8] sm:$0xff]
        %v2547 = vld [vmem:[#allocation7 + $0x3c0] sm:$0xff]
        %v2548 = vld [vmem:[#allocation7 + $0x3c8] sm:$0xff]
        %v2549 = vld [vmem:[#allocation7 + $0x3d0] sm:$0xff]
        %v2550 = vld [vmem:[#allocation7 + $0x3d8] sm:$0xff]
        %v2551 = vld [vmem:[#allocation7 + $0x3e0] sm:$0xff]
        %v2552 = vld [vmem:[#allocation7 + $0x3e8] sm:$0xff]
        %v2553 = vld [vmem:[#allocation7 + $0x3f0] sm:$0xff]
        %v2554 = vld [vmem:[#allocation7 + $0x3f8] sm:$0xff]
        %v2555 = vld [vmem:[%s8] sm:$0xf]
        %v2557 = vlaneseq
        %v2558 = vshrl.u32 %v2557, 7
        %v2559 = vsub.s32 0, %v2558
        %v2560 = vrot.slane %v2555, %v2559
        %v2561 = vlaneseq
        %v2562 = vshrl.u32 %v2561, 7
        %v2563 = vsub.s32 1, %v2562
        %v2564 = vrot.slane %v2555, %v2563
        %v2565 = vlaneseq
        %v2566 = vshrl.u32 %v2565, 7
        %v2567 = vsub.s32 2, %v2566
        %v2568 = vrot.slane %v2555, %v2567
        %v2569 = vlaneseq
        %v2570 = vshrl.u32 %v2569, 7
        %v2571 = vsub.s32 3, %v2570
        %v2572 = vrot.slane %v2555, %v2571
        %v2579 = vunpack.c.l.b16 %v489
        %v2580 = vunpack.c.h.b16 %v489
        %v2581 = vunpack.c.l.b16 %v490
        %v2582 = vunpack.c.h.b16 %v490
        %v2583 = vpack.c.b16 %v2579, %v2579
        %v2584 = vpack.c.b16 %v2580, %v2580
        %v2585 = vpack.c.b16 %v2581, %v2581
        %v2586 = vpack.c.b16 %v2582, %v2582
        %v2719 = vunpack.c.l.b16 %v2427
        %v2720 = vunpack.c.h.b16 %v2427
        %v2721 = vunpack.c.l.b16 %v2428
        %v2722 = vunpack.c.h.b16 %v2428
        %v2723 = vunpack.c.l.b16 %v2429
        %v2724 = vunpack.c.h.b16 %v2429
        %v2725 = vunpack.c.l.b16 %v2430
        %v2726 = vunpack.c.h.b16 %v2430
        %v2727 = vunpack.c.l.b16 %v2431
        %v2728 = vunpack.c.h.b16 %v2431
        %v2729 = vunpack.c.l.b16 %v2432
        %v2730 = vunpack.c.h.b16 %v2432
        %v2731 = vunpack.c.l.b16 %v2433
        %v2732 = vunpack.c.h.b16 %v2433
        %v2733 = vunpack.c.l.b16 %v2434
        %v2734 = vunpack.c.h.b16 %v2434
        %v2735 = vunpack.c.l.b16 %v2435
        %v2736 = vunpack.c.h.b16 %v2435
        %v2737 = vunpack.c.l.b16 %v2436
        %v2738 = vunpack.c.h.b16 %v2436
        %v2739 = vunpack.c.l.b16 %v2437
        %v2740 = vunpack.c.h.b16 %v2437
        %v2741 = vunpack.c.l.b16 %v2438
        %v2742 = vunpack.c.h.b16 %v2438
        %v2743 = vunpack.c.l.b16 %v2439
        %v2744 = vunpack.c.h.b16 %v2439
        %v2745 = vunpack.c.l.b16 %v2440
        %v2746 = vunpack.c.h.b16 %v2440
        %v2747 = vunpack.c.l.b16 %v2441
        %v2748 = vunpack.c.h.b16 %v2441
        %v2749 = vunpack.c.l.b16 %v2442
        %v2750 = vunpack.c.h.b16 %v2442
        %v2751 = vunpack.c.l.b16 %v2443
        %v2752 = vunpack.c.h.b16 %v2443
        %v2753 = vunpack.c.l.b16 %v2444
        %v2754 = vunpack.c.h.b16 %v2444
        %v2755 = vunpack.c.l.b16 %v2445
        %v2756 = vunpack.c.h.b16 %v2445
        %v2757 = vunpack.c.l.b16 %v2446
        %v2758 = vunpack.c.h.b16 %v2446
        %v2759 = vunpack.c.l.b16 %v2447
        %v2760 = vunpack.c.h.b16 %v2447
        %v2761 = vunpack.c.l.b16 %v2448
        %v2762 = vunpack.c.h.b16 %v2448
        %v2763 = vunpack.c.l.b16 %v2449
        %v2764 = vunpack.c.h.b16 %v2449
        %v2765 = vunpack.c.l.b16 %v2450
        %v2766 = vunpack.c.h.b16 %v2450
        %v2767 = vunpack.c.l.b16 %v2451
        %v2768 = vunpack.c.h.b16 %v2451
        %v2769 = vunpack.c.l.b16 %v2452
        %v2770 = vunpack.c.h.b16 %v2452
        %v2771 = vunpack.c.l.b16 %v2453
        %v2772 = vunpack.c.h.b16 %v2453
        %v2773 = vunpack.c.l.b16 %v2454
        %v2774 = vunpack.c.h.b16 %v2454
        %v2775 = vunpack.c.l.b16 %v2455
        %v2776 = vunpack.c.h.b16 %v2455
        %v2777 = vunpack.c.l.b16 %v2456
        %v2778 = vunpack.c.h.b16 %v2456
        %v2779 = vunpack.c.l.b16 %v2457
        %v2780 = vunpack.c.h.b16 %v2457
        %v2781 = vunpack.c.l.b16 %v2458
        %v2782 = vunpack.c.h.b16 %v2458
        %v2783 = vunpack.c.l.b16 %v2459
        %v2784 = vunpack.c.h.b16 %v2459
        %v2785 = vunpack.c.l.b16 %v2460
        %v2786 = vunpack.c.h.b16 %v2460
        %v2787 = vunpack.c.l.b16 %v2461
        %v2788 = vunpack.c.h.b16 %v2461
        %v2789 = vunpack.c.l.b16 %v2462
        %v2790 = vunpack.c.h.b16 %v2462
        %v2791 = vunpack.c.l.b16 %v2463
        %v2792 = vunpack.c.h.b16 %v2463
        %v2793 = vunpack.c.l.b16 %v2464
        %v2794 = vunpack.c.h.b16 %v2464
        %v2795 = vunpack.c.l.b16 %v2465
        %v2796 = vunpack.c.h.b16 %v2465
        %v2797 = vunpack.c.l.b16 %v2466
        %v2798 = vunpack.c.h.b16 %v2466
        %v2799 = vunpack.c.l.b16 %v2467
        %v2800 = vunpack.c.h.b16 %v2467
        %v2801 = vunpack.c.l.b16 %v2468
        %v2802 = vunpack.c.h.b16 %v2468
        %v2803 = vunpack.c.l.b16 %v2469
        %v2804 = vunpack.c.h.b16 %v2469
        %v2805 = vunpack.c.l.b16 %v2470
        %v2806 = vunpack.c.h.b16 %v2470
        %v2807 = vunpack.c.l.b16 %v2471
        %v2808 = vunpack.c.h.b16 %v2471
        %v2809 = vunpack.c.l.b16 %v2472
        %v2810 = vunpack.c.h.b16 %v2472
        %v2811 = vunpack.c.l.b16 %v2473
        %v2812 = vunpack.c.h.b16 %v2473
        %v2813 = vunpack.c.l.b16 %v2474
        %v2814 = vunpack.c.h.b16 %v2474
        %v2815 = vunpack.c.l.b16 %v2475
        %v2816 = vunpack.c.h.b16 %v2475
        %v2817 = vunpack.c.l.b16 %v2476
        %v2818 = vunpack.c.h.b16 %v2476
        %v2819 = vunpack.c.l.b16 %v2477
        %v2820 = vunpack.c.h.b16 %v2477
        %v2821 = vunpack.c.l.b16 %v2478
        %v2822 = vunpack.c.h.b16 %v2478
        %v2823 = vunpack.c.l.b16 %v2479
        %v2824 = vunpack.c.h.b16 %v2479
        %v2825 = vunpack.c.l.b16 %v2480
        %v2826 = vunpack.c.h.b16 %v2480
        %v2827 = vunpack.c.l.b16 %v2481
        %v2828 = vunpack.c.h.b16 %v2481
        %v2829 = vunpack.c.l.b16 %v2482
        %v2830 = vunpack.c.h.b16 %v2482
        %v2831 = vunpack.c.l.b16 %v2483
        %v2832 = vunpack.c.h.b16 %v2483
        %v2833 = vunpack.c.l.b16 %v2484
        %v2834 = vunpack.c.h.b16 %v2484
        %v2835 = vunpack.c.l.b16 %v2485
        %v2836 = vunpack.c.h.b16 %v2485
        %v2837 = vunpack.c.l.b16 %v2486
        %v2838 = vunpack.c.h.b16 %v2486
        %v2839 = vunpack.c.l.b16 %v2487
        %v2840 = vunpack.c.h.b16 %v2487
        %v2841 = vunpack.c.l.b16 %v2488
        %v2842 = vunpack.c.h.b16 %v2488
        %v2843 = vunpack.c.l.b16 %v2489
        %v2844 = vunpack.c.h.b16 %v2489
        %v2845 = vunpack.c.l.b16 %v2490
        %v2846 = vunpack.c.h.b16 %v2490
        %v2847 = vunpack.c.l.b16 %v2491
        %v2848 = vunpack.c.h.b16 %v2491
        %v2849 = vunpack.c.l.b16 %v2492
        %v2850 = vunpack.c.h.b16 %v2492
        %v2851 = vunpack.c.l.b16 %v2493
        %v2852 = vunpack.c.h.b16 %v2493
        %v2853 = vunpack.c.l.b16 %v2494
        %v2854 = vunpack.c.h.b16 %v2494
        %v2855 = vunpack.c.l.b16 %v2495
        %v2856 = vunpack.c.h.b16 %v2495
        %v2857 = vunpack.c.l.b16 %v2496
        %v2858 = vunpack.c.h.b16 %v2496
        %v2859 = vunpack.c.l.b16 %v2497
        %v2860 = vunpack.c.h.b16 %v2497
        %v2861 = vunpack.c.l.b16 %v2498
        %v2862 = vunpack.c.h.b16 %v2498
        %v2863 = vunpack.c.l.b16 %v2499
        %v2864 = vunpack.c.h.b16 %v2499
        %v2865 = vunpack.c.l.b16 %v2500
        %v2866 = vunpack.c.h.b16 %v2500
        %v2867 = vunpack.c.l.b16 %v2501
        %v2868 = vunpack.c.h.b16 %v2501
        %v2869 = vunpack.c.l.b16 %v2502
        %v2870 = vunpack.c.h.b16 %v2502
        %v2871 = vunpack.c.l.b16 %v2503
        %v2872 = vunpack.c.h.b16 %v2503
        %v2873 = vunpack.c.l.b16 %v2504
        %v2874 = vunpack.c.h.b16 %v2504
        %v2875 = vunpack.c.l.b16 %v2505
        %v2876 = vunpack.c.h.b16 %v2505
        %v2877 = vunpack.c.l.b16 %v2506
        %v2878 = vunpack.c.h.b16 %v2506
        %v2879 = vunpack.c.l.b16 %v2507
        %v2880 = vunpack.c.h.b16 %v2507
        %v2881 = vunpack.c.l.b16 %v2508
        %v2882 = vunpack.c.h.b16 %v2508
        %v2883 = vunpack.c.l.b16 %v2509
        %v2884 = vunpack.c.h.b16 %v2509
        %v2885 = vunpack.c.l.b16 %v2510
        %v2886 = vunpack.c.h.b16 %v2510
        %v2887 = vunpack.c.l.b16 %v2511
        %v2888 = vunpack.c.h.b16 %v2511
        %v2889 = vunpack.c.l.b16 %v2512
        %v2890 = vunpack.c.h.b16 %v2512
        %v2891 = vunpack.c.l.b16 %v2513
        %v2892 = vunpack.c.h.b16 %v2513
        %v2893 = vunpack.c.l.b16 %v2514
        %v2894 = vunpack.c.h.b16 %v2514
        %v2895 = vunpack.c.l.b16 %v2515
        %v2896 = vunpack.c.h.b16 %v2515
        %v2897 = vunpack.c.l.b16 %v2516
        %v2898 = vunpack.c.h.b16 %v2516
        %v2899 = vunpack.c.l.b16 %v2517
        %v2900 = vunpack.c.h.b16 %v2517
        %v2901 = vunpack.c.l.b16 %v2518
        %v2902 = vunpack.c.h.b16 %v2518
        %v2903 = vunpack.c.l.b16 %v2519
        %v2904 = vunpack.c.h.b16 %v2519
        %v2905 = vunpack.c.l.b16 %v2520
        %v2906 = vunpack.c.h.b16 %v2520
        %v2907 = vunpack.c.l.b16 %v2521
        %v2908 = vunpack.c.h.b16 %v2521
        %v2909 = vunpack.c.l.b16 %v2522
        %v2910 = vunpack.c.h.b16 %v2522
        %v2911 = vunpack.c.l.b16 %v2523
        %v2912 = vunpack.c.h.b16 %v2523
        %v2913 = vunpack.c.l.b16 %v2524
        %v2914 = vunpack.c.h.b16 %v2524
        %v2915 = vunpack.c.l.b16 %v2525
        %v2916 = vunpack.c.h.b16 %v2525
        %v2917 = vunpack.c.l.b16 %v2526
        %v2918 = vunpack.c.h.b16 %v2526
        %v2919 = vunpack.c.l.b16 %v2527
        %v2920 = vunpack.c.h.b16 %v2527
        %v2921 = vunpack.c.l.b16 %v2528
        %v2922 = vunpack.c.h.b16 %v2528
        %v2923 = vunpack.c.l.b16 %v2529
        %v2924 = vunpack.c.h.b16 %v2529
        %v2925 = vunpack.c.l.b16 %v2530
        %v2926 = vunpack.c.h.b16 %v2530
        %v2927 = vunpack.c.l.b16 %v2531
        %v2928 = vunpack.c.h.b16 %v2531
        %v2929 = vunpack.c.l.b16 %v2532
        %v2930 = vunpack.c.h.b16 %v2532
        %v2931 = vunpack.c.l.b16 %v2533
        %v2932 = vunpack.c.h.b16 %v2533
        %v2933 = vunpack.c.l.b16 %v2534
        %v2934 = vunpack.c.h.b16 %v2534
        %v2935 = vunpack.c.l.b16 %v2535
        %v2936 = vunpack.c.h.b16 %v2535
        %v2937 = vunpack.c.l.b16 %v2536
        %v2938 = vunpack.c.h.b16 %v2536
        %v2939 = vunpack.c.l.b16 %v2537
        %v2940 = vunpack.c.h.b16 %v2537
        %v2941 = vunpack.c.l.b16 %v2538
        %v2942 = vunpack.c.h.b16 %v2538
        %v2943 = vunpack.c.l.b16 %v2539
        %v2944 = vunpack.c.h.b16 %v2539
        %v2945 = vunpack.c.l.b16 %v2540
        %v2946 = vunpack.c.h.b16 %v2540
        %v2947 = vunpack.c.l.b16 %v2541
        %v2948 = vunpack.c.h.b16 %v2541
        %v2949 = vunpack.c.l.b16 %v2542
        %v2950 = vunpack.c.h.b16 %v2542
        %v2951 = vunpack.c.l.b16 %v2543
        %v2952 = vunpack.c.h.b16 %v2543
        %v2953 = vunpack.c.l.b16 %v2544
        %v2954 = vunpack.c.h.b16 %v2544
        %v2955 = vunpack.c.l.b16 %v2545
        %v2956 = vunpack.c.h.b16 %v2545
        %v2957 = vunpack.c.l.b16 %v2546
        %v2958 = vunpack.c.h.b16 %v2546
        %v2959 = vunpack.c.l.b16 %v2547
        %v2960 = vunpack.c.h.b16 %v2547
        %v2961 = vunpack.c.l.b16 %v2548
        %v2962 = vunpack.c.h.b16 %v2548
        %v2963 = vunpack.c.l.b16 %v2549
        %v2964 = vunpack.c.h.b16 %v2549
        %v2965 = vunpack.c.l.b16 %v2550
        %v2966 = vunpack.c.h.b16 %v2550
        %v2967 = vunpack.c.l.b16 %v2551
        %v2968 = vunpack.c.h.b16 %v2551
        %v2969 = vunpack.c.l.b16 %v2552
        %v2970 = vunpack.c.h.b16 %v2552
        %v2971 = vunpack.c.l.b16 %v2553
        %v2972 = vunpack.c.h.b16 %v2553
        %v2973 = vunpack.c.l.b16 %v2554
        %v2974 = vunpack.c.h.b16 %v2554
        %v2975 = vpack.c.b16 %v2723, %v2719
        %v2976 = vpack.c.b16 %v2724, %v2720
        %v2977 = vpack.c.b16 %v2725, %v2721
        %v2978 = vpack.c.b16 %v2726, %v2722
        %v2979 = vpack.c.b16 %v2731, %v2727
        %v2980 = vpack.c.b16 %v2732, %v2728
        %v2981 = vpack.c.b16 %v2733, %v2729
        %v2982 = vpack.c.b16 %v2734, %v2730
        %v2983 = vpack.c.b16 %v2739, %v2735
        %v2984 = vpack.c.b16 %v2740, %v2736
        %v2985 = vpack.c.b16 %v2741, %v2737
        %v2986 = vpack.c.b16 %v2742, %v2738
        %v2987 = vpack.c.b16 %v2747, %v2743
        %v2988 = vpack.c.b16 %v2748, %v2744
        %v2989 = vpack.c.b16 %v2749, %v2745
        %v2990 = vpack.c.b16 %v2750, %v2746
        %v2991 = vpack.c.b16 %v2755, %v2751
        %v2992 = vpack.c.b16 %v2756, %v2752
        %v2993 = vpack.c.b16 %v2757, %v2753
        %v2994 = vpack.c.b16 %v2758, %v2754
        %v2995 = vpack.c.b16 %v2763, %v2759
        %v2996 = vpack.c.b16 %v2764, %v2760
        %v2997 = vpack.c.b16 %v2765, %v2761
        %v2998 = vpack.c.b16 %v2766, %v2762
        %v2999 = vpack.c.b16 %v2771, %v2767
        %v3000 = vpack.c.b16 %v2772, %v2768
        %v3001 = vpack.c.b16 %v2773, %v2769
        %v3002 = vpack.c.b16 %v2774, %v2770
        %v3003 = vpack.c.b16 %v2779, %v2775
        %v3004 = vpack.c.b16 %v2780, %v2776
        %v3005 = vpack.c.b16 %v2781, %v2777
        %v3006 = vpack.c.b16 %v2782, %v2778
        %v3007 = vpack.c.b16 %v2787, %v2783
        %v3008 = vpack.c.b16 %v2788, %v2784
        %v3009 = vpack.c.b16 %v2789, %v2785
        %v3010 = vpack.c.b16 %v2790, %v2786
        %v3011 = vpack.c.b16 %v2795, %v2791
        %v3012 = vpack.c.b16 %v2796, %v2792
        %v3013 = vpack.c.b16 %v2797, %v2793
        %v3014 = vpack.c.b16 %v2798, %v2794
        %v3015 = vpack.c.b16 %v2803, %v2799
        %v3016 = vpack.c.b16 %v2804, %v2800
        %v3017 = vpack.c.b16 %v2805, %v2801
        %v3018 = vpack.c.b16 %v2806, %v2802
        %v3019 = vpack.c.b16 %v2811, %v2807
        %v3020 = vpack.c.b16 %v2812, %v2808
        %v3021 = vpack.c.b16 %v2813, %v2809
        %v3022 = vpack.c.b16 %v2814, %v2810
        %v3023 = vpack.c.b16 %v2819, %v2815
        %v3024 = vpack.c.b16 %v2820, %v2816
        %v3025 = vpack.c.b16 %v2821, %v2817
        %v3026 = vpack.c.b16 %v2822, %v2818
        %v3027 = vpack.c.b16 %v2827, %v2823
        %v3028 = vpack.c.b16 %v2828, %v2824
        %v3029 = vpack.c.b16 %v2829, %v2825
        %v3030 = vpack.c.b16 %v2830, %v2826
        %v3031 = vpack.c.b16 %v2835, %v2831
        %v3032 = vpack.c.b16 %v2836, %v2832
        %v3033 = vpack.c.b16 %v2837, %v2833
        %v3034 = vpack.c.b16 %v2838, %v2834
        %v3035 = vpack.c.b16 %v2843, %v2839
        %v3036 = vpack.c.b16 %v2844, %v2840
        %v3037 = vpack.c.b16 %v2845, %v2841
        %v3038 = vpack.c.b16 %v2846, %v2842
        %v3039 = vpack.c.b16 %v2851, %v2847
        %v3040 = vpack.c.b16 %v2852, %v2848
        %v3041 = vpack.c.b16 %v2853, %v2849
        %v3042 = vpack.c.b16 %v2854, %v2850
        %v3043 = vpack.c.b16 %v2859, %v2855
        %v3044 = vpack.c.b16 %v2860, %v2856
        %v3045 = vpack.c.b16 %v2861, %v2857
        %v3046 = vpack.c.b16 %v2862, %v2858
        %v3047 = vpack.c.b16 %v2867, %v2863
        %v3048 = vpack.c.b16 %v2868, %v2864
        %v3049 = vpack.c.b16 %v2869, %v2865
        %v3050 = vpack.c.b16 %v2870, %v2866
        %v3051 = vpack.c.b16 %v2875, %v2871
        %v3052 = vpack.c.b16 %v2876, %v2872
        %v3053 = vpack.c.b16 %v2877, %v2873
        %v3054 = vpack.c.b16 %v2878, %v2874
        %v3055 = vpack.c.b16 %v2883, %v2879
        %v3056 = vpack.c.b16 %v2884, %v2880
        %v3057 = vpack.c.b16 %v2885, %v2881
        %v3058 = vpack.c.b16 %v2886, %v2882
        %v3059 = vpack.c.b16 %v2891, %v2887
        %v3060 = vpack.c.b16 %v2892, %v2888
        %v3061 = vpack.c.b16 %v2893, %v2889
        %v3062 = vpack.c.b16 %v2894, %v2890
        %v3063 = vpack.c.b16 %v2899, %v2895
        %v3064 = vpack.c.b16 %v2900, %v2896
        %v3065 = vpack.c.b16 %v2901, %v2897
        %v3066 = vpack.c.b16 %v2902, %v2898
        %v3067 = vpack.c.b16 %v2907, %v2903
        %v3068 = vpack.c.b16 %v2908, %v2904
        %v3069 = vpack.c.b16 %v2909, %v2905
        %v3070 = vpack.c.b16 %v2910, %v2906
        %v3071 = vpack.c.b16 %v2915, %v2911
        %v3072 = vpack.c.b16 %v2916, %v2912
        %v3073 = vpack.c.b16 %v2917, %v2913
        %v3074 = vpack.c.b16 %v2918, %v2914
        %v3075 = vpack.c.b16 %v2923, %v2919
        %v3076 = vpack.c.b16 %v2924, %v2920
        %v3077 = vpack.c.b16 %v2925, %v2921
        %v3078 = vpack.c.b16 %v2926, %v2922
        %v3079 = vpack.c.b16 %v2931, %v2927
        %v3080 = vpack.c.b16 %v2932, %v2928
        %v3081 = vpack.c.b16 %v2933, %v2929
        %v3082 = vpack.c.b16 %v2934, %v2930
        %v3083 = vpack.c.b16 %v2939, %v2935
        %v3084 = vpack.c.b16 %v2940, %v2936
        %v3085 = vpack.c.b16 %v2941, %v2937
        %v3086 = vpack.c.b16 %v2942, %v2938
        %v3087 = vpack.c.b16 %v2947, %v2943
        %v3088 = vpack.c.b16 %v2948, %v2944
        %v3089 = vpack.c.b16 %v2949, %v2945
        %v3090 = vpack.c.b16 %v2950, %v2946
        %v3091 = vpack.c.b16 %v2955, %v2951
        %v3092 = vpack.c.b16 %v2956, %v2952
        %v3093 = vpack.c.b16 %v2957, %v2953
        %v3094 = vpack.c.b16 %v2958, %v2954
        %v3095 = vpack.c.b16 %v2963, %v2959
        %v3096 = vpack.c.b16 %v2964, %v2960
        %v3097 = vpack.c.b16 %v2965, %v2961
        %v3098 = vpack.c.b16 %v2966, %v2962
        %v3099 = vpack.c.b16 %v2971, %v2967
        %v3100 = vpack.c.b16 %v2972, %v2968
        %v3101 = vpack.c.b16 %v2973, %v2969
        %v3102 = vpack.c.b16 %v2974, %v2970
        %3231 = vmatprep.subr.bf16.mxu0 %v3004
        %3232 = vmatpush1.bf16.msra.mxu0 %v3003
        %3233 = vmatprep.subr.bf16.mxu0 %v3000
        %3234 = vmatpush1.bf16.msra.mxu0 %v2999
        %3235 = vmatprep.subr.bf16.mxu0 %v2996
        %3236 = vmatpush1.bf16.msra.mxu0 %v2995
        %3237 = vmatprep.subr.bf16.mxu0 %v2992
        %3238 = vmatpush1.bf16.msra.mxu0 %v2991
        %3239 = vmatprep.subr.bf16.mxu0 %v2988
        %3240 = vmatpush1.bf16.msra.mxu0 %v2987
        %3241 = vmatprep.subr.bf16.mxu0 %v2984
        %3242 = vmatpush1.bf16.msra.mxu0 %v2983
        %3243 = vmatprep.subr.bf16.mxu0 %v2980
        %3244 = vmatpush1.bf16.msra.mxu0 %v2979
        %3245 = vmatprep.subr.bf16.mxu0 %v2976
        %3246 = vmatpush1.bf16.msra.mxu0 %v2975
        %3247 = vmatprep.subr.bf16.mxu0 %v3036
        %3248 = vmatpush2.bf16.msra.mxu0 %v3035
        %3249 = vmatprep.subr.bf16.mxu0 %v3032
        %3250 = vmatpush2.bf16.msra.mxu0 %v3031
        %3251 = vmatprep.subr.bf16.mxu0 %v3028
        %3252 = vmatpush2.bf16.msra.mxu0 %v3027
        %3253 = vmatprep.subr.bf16.mxu0 %v3024
        %3254 = vmatpush2.bf16.msra.mxu0 %v3023
        %3255 = vmatprep.subr.bf16.mxu0 %v3020
        %3256 = vmatpush2.bf16.msra.mxu0 %v3019
        %3257 = vmatprep.subr.bf16.mxu0 %v3016
        %3258 = vmatpush2.bf16.msra.mxu0 %v3015
        %3259 = vmatprep.subr.bf16.mxu0 %v3012
        %3260 = vmatpush2.bf16.msra.mxu0 %v3011
        %3261 = vmatprep.subr.bf16.mxu0 %v3008
        %3262 = vmatpush2.bf16.msra.mxu0 %v3007
        %3263 = vmatprep.mubr.bf16.mxu0 %v2584
        %3264 = vmatmul.mubr.bf16.gmra.mxu0 %v2583
        %v3265 = vpop.f32.mrf.mxu0
        %v3266 = vadd.f32 %v2560, %v3265
        %v3267 = vpop.f32.mrf.mxu0
        %v3268 = vadd.f32 %v2564, %v3267
        %v3269 = vpop.f32.mrf.mxu0
        %v3270 = vpop.f32.mrf.mxu0
        %3271 = vdwg.mxu0
        %3272 = vmatprep.subr.bf16.mxu0 %v3068
        %3273 = vmatpush1.bf16.msra.mxu0 %v3067
        %3274 = vmatprep.subr.bf16.mxu0 %v3064
        %3275 = vmatpush1.bf16.msra.mxu0 %v3063
        %3276 = vmatprep.subr.bf16.mxu0 %v3060
        %3277 = vmatpush1.bf16.msra.mxu0 %v3059
        %3278 = vmatprep.subr.bf16.mxu0 %v3056
        %3279 = vmatpush1.bf16.msra.mxu0 %v3055
        %3280 = vmatprep.subr.bf16.mxu0 %v3052
        %3281 = vmatpush1.bf16.msra.mxu0 %v3051
        %3282 = vmatprep.subr.bf16.mxu0 %v3048
        %3283 = vmatpush1.bf16.msra.mxu0 %v3047
        %3284 = vmatprep.subr.bf16.mxu0 %v3044
        %3285 = vmatpush1.bf16.msra.mxu0 %v3043
        %3286 = vmatprep.subr.bf16.mxu0 %v3040
        %3287 = vmatpush1.bf16.msra.mxu0 %v3039
        %3288 = vmatprep.subr.bf16.mxu0 %v3100
        %3289 = vmatpush2.bf16.msra.mxu0 %v3099
        %3290 = vmatprep.subr.bf16.mxu0 %v3096
        %3291 = vmatpush2.bf16.msra.mxu0 %v3095
        %3292 = vmatprep.subr.bf16.mxu0 %v3092
        %3293 = vmatpush2.bf16.msra.mxu0 %v3091
        %3294 = vmatprep.subr.bf16.mxu0 %v3088
        %3295 = vmatpush2.bf16.msra.mxu0 %v3087
        %3296 = vmatprep.subr.bf16.mxu0 %v3084
        %3297 = vmatpush2.bf16.msra.mxu0 %v3083
        %3298 = vmatprep.subr.bf16.mxu0 %v3080
        %3299 = vmatpush2.bf16.msra.mxu0 %v3079
        %3300 = vmatprep.subr.bf16.mxu0 %v3076
        %3301 = vmatpush2.bf16.msra.mxu0 %v3075
        %3302 = vmatprep.subr.bf16.mxu0 %v3072
        %3303 = vmatpush2.bf16.msra.mxu0 %v3071
        %3304 = vmatprep.mubr.bf16.mxu0 %v2586
        %3305 = vmatmul.mubr.bf16.gmra.mxu0 %v2585
        %v3306 = vpop.f32.mrf.mxu0
        %v3307 = vadd.f32 %v3266, %v3306
        %v3308 = vpop.f32.mrf.mxu0
        %v3309 = vadd.f32 %v3268, %v3308
        %v3310 = vpop.f32.mrf.mxu0
        %v3311 = vpop.f32.mrf.mxu0
        %3312 = vdwg.mxu0
        %3313 = vmatprep.subr.bf16.mxu0 %v3006
        %3314 = vmatpush1.bf16.msra.mxu0 %v3005
        %3315 = vmatprep.subr.bf16.mxu0 %v3002
        %3316 = vmatpush1.bf16.msra.mxu0 %v3001
        %3317 = vmatprep.subr.bf16.mxu0 %v2998
        %3318 = vmatpush1.bf16.msra.mxu0 %v2997
        %3319 = vmatprep.subr.bf16.mxu0 %v2994
        %3320 = vmatpush1.bf16.msra.mxu0 %v2993
        %3321 = vmatprep.subr.bf16.mxu0 %v2990
        %3322 = vmatpush1.bf16.msra.mxu0 %v2989
        %3323 = vmatprep.subr.bf16.mxu0 %v2986
        %3324 = vmatpush1.bf16.msra.mxu0 %v2985
        %3325 = vmatprep.subr.bf16.mxu0 %v2982
        %3326 = vmatpush1.bf16.msra.mxu0 %v2981
        %3327 = vmatprep.subr.bf16.mxu0 %v2978
        %3328 = vmatpush1.bf16.msra.mxu0 %v2977
        %3329 = vmatprep.subr.bf16.mxu0 %v3038
        %3330 = vmatpush2.bf16.msra.mxu0 %v3037
        %3331 = vmatprep.subr.bf16.mxu0 %v3034
        %3332 = vmatpush2.bf16.msra.mxu0 %v3033
        %3333 = vmatprep.subr.bf16.mxu0 %v3030
        %3334 = vmatpush2.bf16.msra.mxu0 %v3029
        %3335 = vmatprep.subr.bf16.mxu0 %v3026
        %3336 = vmatpush2.bf16.msra.mxu0 %v3025
        %3337 = vmatprep.subr.bf16.mxu0 %v3022
        %3338 = vmatpush2.bf16.msra.mxu0 %v3021
        %3339 = vmatprep.subr.bf16.mxu0 %v3018
        %3340 = vmatpush2.bf16.msra.mxu0 %v3017
        %3341 = vmatprep.subr.bf16.mxu0 %v3014
        %3342 = vmatpush2.bf16.msra.mxu0 %v3013
        %3343 = vmatprep.subr.bf16.mxu0 %v3010
        %3344 = vmatpush2.bf16.msra.mxu0 %v3009
        %3345 = vmatprep.mubr.bf16.mxu0 %v2584
        %3346 = vmatmul.mubr.bf16.gmra.mxu0 %v2583
        %v3347 = vpop.f32.mrf.mxu0
        %v3348 = vadd.f32 %v2568, %v3347
        %v3349 = vpop.f32.mrf.mxu0
        %v3350 = vadd.f32 %v2572, %v3349
        %v3351 = vpop.f32.mrf.mxu0
        %v3352 = vpop.f32.mrf.mxu0
        %3353 = vdwg.mxu0
        %3354 = vmatprep.subr.bf16.mxu0 %v3070
        %3355 = vmatpush1.bf16.msra.mxu0 %v3069
        %3356 = vmatprep.subr.bf16.mxu0 %v3066
        %3357 = vmatpush1.bf16.msra.mxu0 %v3065
        %3358 = vmatprep.subr.bf16.mxu0 %v3062
        %3359 = vmatpush1.bf16.msra.mxu0 %v3061
        %3360 = vmatprep.subr.bf16.mxu0 %v3058
        %3361 = vmatpush1.bf16.msra.mxu0 %v3057
        %3362 = vmatprep.subr.bf16.mxu0 %v3054
        %3363 = vmatpush1.bf16.msra.mxu0 %v3053
        %3364 = vmatprep.subr.bf16.mxu0 %v3050
        %3365 = vmatpush1.bf16.msra.mxu0 %v3049
        %3366 = vmatprep.subr.bf16.mxu0 %v3046
        %3367 = vmatpush1.bf16.msra.mxu0 %v3045
        %3368 = vmatprep.subr.bf16.mxu0 %v3042
        %3369 = vmatpush1.bf16.msra.mxu0 %v3041
        %3370 = vmatprep.subr.bf16.mxu0 %v3102
        %3371 = vmatpush2.bf16.msra.mxu0 %v3101
        %3372 = vmatprep.subr.bf16.mxu0 %v3098
        %3373 = vmatpush2.bf16.msra.mxu0 %v3097
        %3374 = vmatprep.subr.bf16.mxu0 %v3094
        %3375 = vmatpush2.bf16.msra.mxu0 %v3093
        %3376 = vmatprep.subr.bf16.mxu0 %v3090
        %3377 = vmatpush2.bf16.msra.mxu0 %v3089
        %3378 = vmatprep.subr.bf16.mxu0 %v3086
        %3379 = vmatpush2.bf16.msra.mxu0 %v3085
        %3380 = vmatprep.subr.bf16.mxu0 %v3082
        %3381 = vmatpush2.bf16.msra.mxu0 %v3081
        %3382 = vmatprep.subr.bf16.mxu0 %v3078
        %3383 = vmatpush2.bf16.msra.mxu0 %v3077
        %3384 = vmatprep.subr.bf16.mxu0 %v3074
        %3385 = vmatpush2.bf16.msra.mxu0 %v3073
        %3386 = vmatprep.mubr.bf16.mxu0 %v2586
        %3387 = vmatmul.mubr.bf16.gmra.mxu0 %v2585
        %v3388 = vpop.f32.mrf.mxu0
        %v3389 = vadd.f32 %v3348, %v3388
        %v3390 = vpop.f32.mrf.mxu0
        %v3391 = vadd.f32 %v3350, %v3390
        %v3392 = vpop.f32.mrf.mxu0
        %v3393 = vpop.f32.mrf.mxu0
        %3394 = vdwg.mxu0
        %v3395 = vmul.f32 %v2339, 0.125
        %v3396 = vmul.f32 %v2341, 0.125
        %v3397 = vmul.f32 %v2421, 0.125
        %v3398 = vmul.f32 %v2423, 0.125
        %v3399 = vpack.c.bf16 %v3395, %v3395
        %v3400 = vpack.c.bf16 %v3396, %v3396
        %v3401 = vpack.c.bf16 %v3397, %v3397
        %v3402 = vpack.c.bf16 %v3398, %v3398
        %v3403 = vpack.c.bf16 %v1371, %v1371
        %v3404 = vpack.c.bf16 %v1373, %v1373
        %v3405 = vpack.c.bf16 %v1453, %v1453
        %v3406 = vpack.c.bf16 %v1455, %v1455
        %v3407 = vpack.c.bf16 %v3307, %v3307
        %v3408 = vpack.c.bf16 %v3309, %v3309
        %v3409 = vpack.c.bf16 %v3389, %v3389
        %v3410 = vpack.c.bf16 %v3391, %v3391
        %vm3411 = vcmask 523264
        %v3413 = vsel %vm3411, %v3399, 0
        %v3416 = vsel %vm3411, %v3403, 0
        %3418 = vmatprep.subr.bf16.mxu0 0
        %3419 = vmatpush1.bf16.xpose.msra.mxu0 0
        %3420 = vmatprep.subr.bf16.mxu0 0
        %3421 = vmatpush1.bf16.xpose.msra.mxu0 0
        %3422 = vmatprep.subr.bf16.mxu0 0
        %3423 = vmatpush1.bf16.xpose.msra.mxu0 0
        %3424 = vmatprep.subr.bf16.mxu0 0
        %3425 = vmatpush1.bf16.xpose.msra.mxu0 0
        %3426 = vmatprep.subr.bf16.mxu0 0
        %3427 = vmatpush1.bf16.xpose.msra.mxu0 0
        %3428 = vmatprep.subr.bf16.mxu0 0
        %3429 = vmatpush1.bf16.xpose.msra.mxu0 0
        %3430 = vmatprep.subr.bf16.mxu0 0
        %3431 = vmatpush1.bf16.xpose.msra.mxu0 0
        %3432 = vmatprep.subr.bf16.mxu0 0
        %3433 = vmatpush1.bf16.xpose.msra.mxu0 %v3416
        %3434 = vmatprep.subr.bf16.mxu0 0
        %3435 = vmatpush2.bf16.xpose.msra.mxu0 0
        %3436 = vmatprep.subr.bf16.mxu0 0
        %3437 = vmatpush2.bf16.xpose.msra.mxu0 0
        %3438 = vmatprep.subr.bf16.mxu0 0
        %3439 = vmatpush2.bf16.xpose.msra.mxu0 0
        %3440 = vmatprep.subr.bf16.mxu0 0
        %3441 = vmatpush2.bf16.xpose.msra.mxu0 0
        %3442 = vmatprep.subr.bf16.mxu0 0
        %3443 = vmatpush2.bf16.xpose.msra.mxu0 0
        %3444 = vmatprep.subr.bf16.mxu0 0
        %3445 = vmatpush2.bf16.xpose.msra.mxu0 0
        %3446 = vmatprep.subr.bf16.mxu0 0
        %3447 = vmatpush2.bf16.xpose.msra.mxu0 0
        %3448 = vmatprep.subr.bf16.mxu0 0
        %3449 = vmatpush2.bf16.xpose.msra.mxu0 0
        %3450 = vmatprep.mubr.bf16.mxu0 0
        %3451 = vmatmul.mubr.bf16.gmra.mxu0 %v3413
        %v3452 = vpop.f32.mrf.mxu0
        %v3453 = vadd.f32 0.0, %v3452
        %v3454 = vpop.f32.mrf.mxu0
        %v3455 = vpop.f32.mrf.mxu0
        %v3456 = vpop.f32.mrf.mxu0
        %3457 = vdwg.mxu0
        %vm3458 = vcmask 64512
        %v3459 = vsel %vm3458, %v3453, -inf
        %3460 = vmax.xlane.f32.xlu0 %v3459
        %v3461 = vpop.xlane.xlu0 %3460
        %v3462 = vsub.f32 %v3453, %v3461
        %v3463 = vmul.f32 %v3462, 1.442695
        %v3464 = vpow.pop %v3463
        %v3465 = vsel %vm3458, %v3464, 0.0
        %3466 = vadd.xlane.f32.xlu0 %v3465
        %v3467 = vpop.xlane.xlu0 %3466
        %v3468 = vrcp.pop %v3467
        %v3469 = vmul.f32 %v3464, %v3468
        %v3470 = vpack.c.bf16 %v3469, %v3469
        %v3472 = vsel %vm3458, %v3470, 0
        %vm3474 = vcmask 1043456
        %v3476 = vsel %vm3474, %v3407, 0
        %3478 = vmatprep.subr.bf16.mxu0 0
        %3479 = vmatpush1.bf16.msra.mxu0 0
        %3480 = vmatprep.subr.bf16.mxu0 0
        %3481 = vmatpush1.bf16.msra.mxu0 0
        %3482 = vmatprep.subr.bf16.mxu0 0
        %3483 = vmatpush1.bf16.msra.mxu0 0
        %3484 = vmatprep.subr.bf16.mxu0 0
        %3485 = vmatpush1.bf16.msra.mxu0 0
        %3486 = vmatprep.subr.bf16.mxu0 0
        %3487 = vmatpush1.bf16.msra.mxu0 0
        %3488 = vmatprep.subr.bf16.mxu0 0
        %3489 = vmatpush1.bf16.msra.mxu0 0
        %3490 = vmatprep.subr.bf16.mxu0 0
        %3491 = vmatpush1.bf16.msra.mxu0 0
        %3492 = vmatprep.subr.bf16.mxu0 0
        %3493 = vmatpush1.bf16.msra.mxu0 %v3476
        %3494 = vmatprep.subr.bf16.mxu0 0
        %3495 = vmatpush2.bf16.msra.mxu0 0
        %3496 = vmatprep.subr.bf16.mxu0 0
        %3497 = vmatpush2.bf16.msra.mxu0 0
        %3498 = vmatprep.subr.bf16.mxu0 0
        %3499 = vmatpush2.bf16.msra.mxu0 0
        %3500 = vmatprep.subr.bf16.mxu0 0
        %3501 = vmatpush2.bf16.msra.mxu0 0
        %3502 = vmatprep.subr.bf16.mxu0 0
        %3503 = vmatpush2.bf16.msra.mxu0 0
        %3504 = vmatprep.subr.bf16.mxu0 0
        %3505 = vmatpush2.bf16.msra.mxu0 0
        %3506 = vmatprep.subr.bf16.mxu0 0
        %3507 = vmatpush2.bf16.msra.mxu0 0
        %3508 = vmatprep.subr.bf16.mxu0 0
        %3509 = vmatpush2.bf16.msra.mxu0 0
        %3510 = vmatprep.mubr.bf16.mxu0 0
        %3511 = vmatmul.mubr.bf16.gmra.mxu0 %v3472
        %v3512 = vpop.f32.mrf.mxu0
        %v3513 = vadd.f32 0.0, %v3512
        %v3514 = vpop.f32.mrf.mxu0
        %v3515 = vpop.f32.mrf.mxu0
        %v3516 = vpop.f32.mrf.mxu0
        %3517 = vdwg.mxu0
        %v3518 = vpack.c.bf16 %v3513, %v3513
        %v3519 = vld [vmem:[#allocation8] sm:$0xff]
        %v3520 = vld [vmem:[#allocation8 + $0x8] sm:$0xff]
        %v3521 = vld [vmem:[#allocation8 + $0x10] sm:$0xff]
        %v3522 = vld [vmem:[#allocation8 + $0x18] sm:$0xff]
        %v3523 = vld [vmem:[#allocation8 + $0x20] sm:$0xff]
        %v3524 = vld [vmem:[#allocation8 + $0x28] sm:$0xff]
        %v3525 = vld [vmem:[#allocation8 + $0x30] sm:$0xff]
        %v3526 = vld [vmem:[#allocation8 + $0x38] sm:$0xff]
        %v3527 = vld [vmem:[#allocation8 + $0x40] sm:$0xff]
        %v3528 = vld [vmem:[#allocation8 + $0x48] sm:$0xff]
        %v3529 = vld [vmem:[#allocation8 + $0x50] sm:$0xff]
        %v3530 = vld [vmem:[#allocation8 + $0x58] sm:$0xff]
        %v3531 = vld [vmem:[#allocation8 + $0x60] sm:$0xff]
        %v3532 = vld [vmem:[#allocation8 + $0x68] sm:$0xff]
        %v3533 = vld [vmem:[#allocation8 + $0x70] sm:$0xff]
        %v3534 = vld [vmem:[#allocation8 + $0x78] sm:$0xff]
        %3536 = vrot.lane.b32.xlu0 %v3399, 64
        %v3537 = vpop.permute.xlu0 %3536
        %3539 = vrot.lane.b32.xlu0 %v3403, 64
        %v3540 = vpop.permute.xlu0 %3539
        %v3542 = vsel %vm3411, %v3537, 0
        %v3545 = vsel %vm3411, %v3540, 0
        %3547 = vmatprep.subr.bf16.mxu0 0
        %3548 = vmatpush1.bf16.xpose.msra.mxu0 0
        %3549 = vmatprep.subr.bf16.mxu0 0
        %3550 = vmatpush1.bf16.xpose.msra.mxu0 0
        %3551 = vmatprep.subr.bf16.mxu0 0
        %3552 = vmatpush1.bf16.xpose.msra.mxu0 0
        %3553 = vmatprep.subr.bf16.mxu0 0
        %3554 = vmatpush1.bf16.xpose.msra.mxu0 0
        %3555 = vmatprep.subr.bf16.mxu0 0
        %3556 = vmatpush1.bf16.xpose.msra.mxu0 0
        %3557 = vmatprep.subr.bf16.mxu0 0
        %3558 = vmatpush1.bf16.xpose.msra.mxu0 0
        %3559 = vmatprep.subr.bf16.mxu0 0
        %3560 = vmatpush1.bf16.xpose.msra.mxu0 0
        %3561 = vmatprep.subr.bf16.mxu0 0
        %3562 = vmatpush1.bf16.xpose.msra.mxu0 %v3545
        %3563 = vmatprep.subr.bf16.mxu0 0
        %3564 = vmatpush2.bf16.xpose.msra.mxu0 0
        %3565 = vmatprep.subr.bf16.mxu0 0
        %3566 = vmatpush2.bf16.xpose.msra.mxu0 0
        %3567 = vmatprep.subr.bf16.mxu0 0
        %3568 = vmatpush2.bf16.xpose.msra.mxu0 0
        %3569 = vmatprep.subr.bf16.mxu0 0
        %3570 = vmatpush2.bf16.xpose.msra.mxu0 0
        %3571 = vmatprep.subr.bf16.mxu0 0
        %3572 = vmatpush2.bf16.xpose.msra.mxu0 0
        %3573 = vmatprep.subr.bf16.mxu0 0
        %3574 = vmatpush2.bf16.xpose.msra.mxu0 0
        %3575 = vmatprep.subr.bf16.mxu0 0
        %3576 = vmatpush2.bf16.xpose.msra.mxu0 0
        %3577 = vmatprep.subr.bf16.mxu0 0
        %3578 = vmatpush2.bf16.xpose.msra.mxu0 0
        %3579 = vmatprep.mubr.bf16.mxu0 0
        %3580 = vmatmul.mubr.bf16.gmra.mxu0 %v3542
        %v3581 = vpop.f32.mrf.mxu0
        %v3582 = vadd.f32 0.0, %v3581
        %v3583 = vpop.f32.mrf.mxu0
        %v3584 = vpop.f32.mrf.mxu0
        %v3585 = vpop.f32.mrf.mxu0
        %3586 = vdwg.mxu0
        %v3587 = vsel %vm3458, %v3582, -inf
        %3588 = vmax.xlane.f32.xlu0 %v3587
        %v3589 = vpop.xlane.xlu0 %3588
        %v3590 = vsub.f32 %v3582, %v3589
        %v3591 = vmul.f32 %v3590, 1.442695
        %v3592 = vpow.pop %v3591
        %v3593 = vsel %vm3458, %v3592, 0.0
        %3594 = vadd.xlane.f32.xlu0 %v3593
        %v3595 = vpop.xlane.xlu0 %3594
        %v3596 = vrcp.pop %v3595
        %v3597 = vmul.f32 %v3592, %v3596
        %v3598 = vpack.c.bf16 %v3597, %v3597
        %3600 = vrot.lane.b32.xlu0 %v3407, 64
        %v3601 = vpop.permute.xlu0 %3600
        %v3603 = vsel %vm3458, %v3598, 0
        %v3606 = vsel %vm3474, %v3601, 0
        %3608 = vmatprep.subr.bf16.mxu0 0
        %3609 = vmatpush1.bf16.msra.mxu0 0
        %3610 = vmatprep.subr.bf16.mxu0 0
        %3611 = vmatpush1.bf16.msra.mxu0 0
        %3612 = vmatprep.subr.bf16.mxu0 0
        %3613 = vmatpush1.bf16.msra.mxu0 0
        %3614 = vmatprep.subr.bf16.mxu0 0
        %3615 = vmatpush1.bf16.msra.mxu0 0
        %3616 = vmatprep.subr.bf16.mxu0 0
        %3617 = vmatpush1.bf16.msra.mxu0 0
        %3618 = vmatprep.subr.bf16.mxu0 0
        %3619 = vmatpush1.bf16.msra.mxu0 0
        %3620 = vmatprep.subr.bf16.mxu0 0
        %3621 = vmatpush1.bf16.msra.mxu0 0
        %3622 = vmatprep.subr.bf16.mxu0 0
        %3623 = vmatpush1.bf16.msra.mxu0 %v3606
        %3624 = vmatprep.subr.bf16.mxu0 0
        %3625 = vmatpush2.bf16.msra.mxu0 0
        %3626 = vmatprep.subr.bf16.mxu0 0
        %3627 = vmatpush2.bf16.msra.mxu0 0
        %3628 = vmatprep.subr.bf16.mxu0 0
        %3629 = vmatpush2.bf16.msra.mxu0 0
        %3630 = vmatprep.subr.bf16.mxu0 0
        %3631 = vmatpush2.bf16.msra.mxu0 0
        %3632 = vmatprep.subr.bf16.mxu0 0
        %3633 = vmatpush2.bf16.msra.mxu0 0
        %3634 = vmatprep.subr.bf16.mxu0 0
        %3635 = vmatpush2.bf16.msra.mxu0 0
        %3636 = vmatprep.subr.bf16.mxu0 0
        %3637 = vmatpush2.bf16.msra.mxu0 0
        %3638 = vmatprep.subr.bf16.mxu0 0
        %3639 = vmatpush2.bf16.msra.mxu0 0
        %3640 = vmatprep.mubr.bf16.mxu0 0
        %3641 = vmatmul.mubr.bf16.gmra.mxu0 %v3603
        %v3642 = vpop.f32.mrf.mxu0
        %v3643 = vadd.f32 0.0, %v3642
        %v3644 = vpop.f32.mrf.mxu0
        %v3645 = vpop.f32.mrf.mxu0
        %v3646 = vpop.f32.mrf.mxu0
        %3647 = vdwg.mxu0
        %v3648 = vpack.c.bf16 %v3643, %v3643
        %s3649 = scalar_lea.vmem [#allocation8], 128
        %v3650 = vld [vmem:[%s3649] sm:$0xff]
        %v3651 = vld [vmem:[%s3649 + $0x8] sm:$0xff]
        %v3652 = vld [vmem:[%s3649 + $0x10] sm:$0xff]
        %v3653 = vld [vmem:[%s3649 + $0x18] sm:$0xff]
        %v3654 = vld [vmem:[%s3649 + $0x20] sm:$0xff]
        %v3655 = vld [vmem:[%s3649 + $0x28] sm:$0xff]
        %v3656 = vld [vmem:[%s3649 + $0x30] sm:$0xff]
        %v3657 = vld [vmem:[%s3649 + $0x38] sm:$0xff]
        %v3658 = vld [vmem:[%s3649 + $0x40] sm:$0xff]
        %v3659 = vld [vmem:[%s3649 + $0x48] sm:$0xff]
        %v3660 = vld [vmem:[%s3649 + $0x50] sm:$0xff]
        %v3661 = vld [vmem:[%s3649 + $0x58] sm:$0xff]
        %v3662 = vld [vmem:[%s3649 + $0x60] sm:$0xff]
        %v3663 = vld [vmem:[%s3649 + $0x68] sm:$0xff]
        %v3664 = vld [vmem:[%s3649 + $0x70] sm:$0xff]
        %v3665 = vld [vmem:[%s3649 + $0x78] sm:$0xff]
        %v3682 = vunpack.c.l.b16 %v3650
        %v3683 = vunpack.c.h.b16 %v3650
        %v3684 = vunpack.c.l.b16 %v3651
        %v3685 = vunpack.c.h.b16 %v3651
        %v3686 = vunpack.c.l.b16 %v3652
        %v3687 = vunpack.c.h.b16 %v3652
        %v3688 = vunpack.c.l.b16 %v3653
        %v3689 = vunpack.c.h.b16 %v3653
        %v3690 = vunpack.c.l.b16 %v3654
        %v3691 = vunpack.c.h.b16 %v3654
        %v3692 = vunpack.c.l.b16 %v3655
        %v3693 = vunpack.c.h.b16 %v3655
        %v3694 = vunpack.c.l.b16 %v3656
        %v3695 = vunpack.c.h.b16 %v3656
        %v3696 = vunpack.c.l.b16 %v3657
        %v3697 = vunpack.c.h.b16 %v3657
        %v3698 = vunpack.c.l.b16 %v3658
        %v3699 = vunpack.c.h.b16 %v3658
        %v3700 = vunpack.c.l.b16 %v3659
        %v3701 = vunpack.c.h.b16 %v3659
        %v3702 = vunpack.c.l.b16 %v3660
        %v3703 = vunpack.c.h.b16 %v3660
        %v3704 = vunpack.c.l.b16 %v3661
        %v3705 = vunpack.c.h.b16 %v3661
        %v3706 = vunpack.c.l.b16 %v3662
        %v3707 = vunpack.c.h.b16 %v3662
        %v3708 = vunpack.c.l.b16 %v3663
        %v3709 = vunpack.c.h.b16 %v3663
        %v3710 = vunpack.c.l.b16 %v3664
        %v3711 = vunpack.c.h.b16 %v3664
        %v3712 = vunpack.c.l.b16 %v3665
        %v3713 = vunpack.c.h.b16 %v3665
        %v3714 = vpack.c.b16 %v3686, %v3682
        %v3715 = vpack.c.b16 %v3687, %v3683
        %v3716 = vpack.c.b16 %v3688, %v3684
        %v3717 = vpack.c.b16 %v3689, %v3685
        %v3718 = vpack.c.b16 %v3694, %v3690
        %v3719 = vpack.c.b16 %v3695, %v3691
        %v3720 = vpack.c.b16 %v3696, %v3692
        %v3721 = vpack.c.b16 %v3697, %v3693
        %v3722 = vpack.c.b16 %v3702, %v3698
        %v3723 = vpack.c.b16 %v3703, %v3699
        %v3724 = vpack.c.b16 %v3704, %v3700
        %v3725 = vpack.c.b16 %v3705, %v3701
        %v3726 = vpack.c.b16 %v3710, %v3706
        %v3727 = vpack.c.b16 %v3711, %v3707
        %v3728 = vpack.c.b16 %v3712, %v3708
        %v3729 = vpack.c.b16 %v3713, %v3709
        %v3747 = vsel %vm3411, %v3648, 0
        %3749 = vmatprep.subr.bf16.mxu0 0
        %3750 = vmatpush1.bf16.msra.mxu0 0
        %3751 = vmatprep.subr.bf16.mxu0 0
        %3752 = vmatpush1.bf16.msra.mxu0 0
        %3753 = vmatprep.subr.bf16.mxu0 0
        %3754 = vmatpush1.bf16.msra.mxu0 0
        %3755 = vmatprep.subr.bf16.mxu0 0
        %3756 = vmatpush1.bf16.msra.mxu0 0
        %3757 = vmatprep.subr.bf16.mxu0 %v3727
        %3758 = vmatpush1.bf16.msra.mxu0 %v3726
        %3759 = vmatprep.subr.bf16.mxu0 %v3723
        %3760 = vmatpush1.bf16.msra.mxu0 %v3722
        %3761 = vmatprep.subr.bf16.mxu0 %v3719
        %3762 = vmatpush1.bf16.msra.mxu0 %v3718
        %3763 = vmatprep.subr.bf16.mxu0 %v3715
        %3764 = vmatpush1.bf16.msra.mxu0 %v3714
        %3765 = vmatprep.subr.bf16.mxu0 0
        %3766 = vmatpush2.bf16.msra.mxu0 0
        %3767 = vmatprep.subr.bf16.mxu0 0
        %3768 = vmatpush2.bf16.msra.mxu0 0
        %3769 = vmatprep.subr.bf16.mxu0 0
        %3770 = vmatpush2.bf16.msra.mxu0 0
        %3771 = vmatprep.subr.bf16.mxu0 0
        %3772 = vmatpush2.bf16.msra.mxu0 0
        %3773 = vmatprep.subr.bf16.mxu0 0
        %3774 = vmatpush2.bf16.msra.mxu0 0
        %3775 = vmatprep.subr.bf16.mxu0 0
        %3776 = vmatpush2.bf16.msra.mxu0 0
        %3777 = vmatprep.subr.bf16.mxu0 0
        %3778 = vmatpush2.bf16.msra.mxu0 0
        %3779 = vmatprep.subr.bf16.mxu0 0
        %3780 = vmatpush2.bf16.msra.mxu0 0
        %3781 = vmatprep.mubr.bf16.mxu0 0
        %3782 = vmatmul.mubr.bf16.gmra.mxu0 %v3747
        %v3783 = vpop.f32.mrf.mxu0
        %v3784 = vadd.f32 0.0, %v3783
        %v3785 = vpop.f32.mrf.mxu0
        %v3786 = vadd.f32 0.0, %v3785
        %v3787 = vpop.f32.mrf.mxu0
        %v3788 = vpop.f32.mrf.mxu0
        %3789 = vdwg.mxu0
        %3790 = vmatprep.subr.bf16.mxu0 0
        %3791 = vmatpush1.bf16.msra.mxu0 0
        %3792 = vmatprep.subr.bf16.mxu0 0
        %3793 = vmatpush1.bf16.msra.mxu0 0
        %3794 = vmatprep.subr.bf16.mxu0 0
        %3795 = vmatpush1.bf16.msra.mxu0 0
        %3796 = vmatprep.subr.bf16.mxu0 0
        %3797 = vmatpush1.bf16.msra.mxu0 0
        %3798 = vmatprep.subr.bf16.mxu0 %v3729
        %3799 = vmatpush1.bf16.msra.mxu0 %v3728
        %3800 = vmatprep.subr.bf16.mxu0 %v3725
        %3801 = vmatpush1.bf16.msra.mxu0 %v3724
        %3802 = vmatprep.subr.bf16.mxu0 %v3721
        %3803 = vmatpush1.bf16.msra.mxu0 %v3720
        %3804 = vmatprep.subr.bf16.mxu0 %v3717
        %3805 = vmatpush1.bf16.msra.mxu0 %v3716
        %3806 = vmatprep.subr.bf16.mxu0 0
        %3807 = vmatpush2.bf16.msra.mxu0 0
        %3808 = vmatprep.subr.bf16.mxu0 0
        %3809 = vmatpush2.bf16.msra.mxu0 0
        %3810 = vmatprep.subr.bf16.mxu0 0
        %3811 = vmatpush2.bf16.msra.mxu0 0
        %3812 = vmatprep.subr.bf16.mxu0 0
        %3813 = vmatpush2.bf16.msra.mxu0 0
        %3814 = vmatprep.subr.bf16.mxu0 0
        %3815 = vmatpush2.bf16.msra.mxu0 0
        %3816 = vmatprep.subr.bf16.mxu0 0
        %3817 = vmatpush2.bf16.msra.mxu0 0
        %3818 = vmatprep.subr.bf16.mxu0 0
        %3819 = vmatpush2.bf16.msra.mxu0 0
        %3820 = vmatprep.subr.bf16.mxu0 0
        %3821 = vmatpush2.bf16.msra.mxu0 0
        %3822 = vmatprep.mubr.bf16.mxu0 0
        %3823 = vmatmul.mubr.bf16.gmra.mxu0 %v3747
        %v3824 = vpop.f32.mrf.mxu0
        %v3825 = vadd.f32 0.0, %v3824
        %v3826 = vpop.f32.mrf.mxu0
        %v3827 = vadd.f32 0.0, %v3826
        %v3828 = vpop.f32.mrf.mxu0
        %v3829 = vpop.f32.mrf.mxu0
        %3830 = vdwg.mxu0
        %v3847 = vunpack.c.l.b16 %v3519
        %v3848 = vunpack.c.h.b16 %v3519
        %v3849 = vunpack.c.l.b16 %v3520
        %v3850 = vunpack.c.h.b16 %v3520
        %v3851 = vunpack.c.l.b16 %v3521
        %v3852 = vunpack.c.h.b16 %v3521
        %v3853 = vunpack.c.l.b16 %v3522
        %v3854 = vunpack.c.h.b16 %v3522
        %v3855 = vunpack.c.l.b16 %v3523
        %v3856 = vunpack.c.h.b16 %v3523
        %v3857 = vunpack.c.l.b16 %v3524
        %v3858 = vunpack.c.h.b16 %v3524
        %v3859 = vunpack.c.l.b16 %v3525
        %v3860 = vunpack.c.h.b16 %v3525
        %v3861 = vunpack.c.l.b16 %v3526
        %v3862 = vunpack.c.h.b16 %v3526
        %v3863 = vunpack.c.l.b16 %v3527
        %v3864 = vunpack.c.h.b16 %v3527
        %v3865 = vunpack.c.l.b16 %v3528
        %v3866 = vunpack.c.h.b16 %v3528
        %v3867 = vunpack.c.l.b16 %v3529
        %v3868 = vunpack.c.h.b16 %v3529
        %v3869 = vunpack.c.l.b16 %v3530
        %v3870 = vunpack.c.h.b16 %v3530
        %v3871 = vunpack.c.l.b16 %v3531
        %v3872 = vunpack.c.h.b16 %v3531
        %v3873 = vunpack.c.l.b16 %v3532
        %v3874 = vunpack.c.h.b16 %v3532
        %v3875 = vunpack.c.l.b16 %v3533
        %v3876 = vunpack.c.h.b16 %v3533
        %v3877 = vunpack.c.l.b16 %v3534
        %v3878 = vunpack.c.h.b16 %v3534
        %v3879 = vpack.c.b16 %v3851, %v3847
        %v3880 = vpack.c.b16 %v3852, %v3848
        %v3881 = vpack.c.b16 %v3853, %v3849
        %v3882 = vpack.c.b16 %v3854, %v3850
        %v3883 = vpack.c.b16 %v3859, %v3855
        %v3884 = vpack.c.b16 %v3860, %v3856
        %v3885 = vpack.c.b16 %v3861, %v3857
        %v3886 = vpack.c.b16 %v3862, %v3858
        %v3887 = vpack.c.b16 %v3867, %v3863
        %v3888 = vpack.c.b16 %v3868, %v3864
        %v3889 = vpack.c.b16 %v3869, %v3865
        %v3890 = vpack.c.b16 %v3870, %v3866
        %v3891 = vpack.c.b16 %v3875, %v3871
        %v3892 = vpack.c.b16 %v3876, %v3872
        %v3893 = vpack.c.b16 %v3877, %v3873
        %v3894 = vpack.c.b16 %v3878, %v3874
        %v3912 = vsel %vm3411, %v3518, 0
        %3914 = vmatprep.subr.bf16.mxu0 0
        %3915 = vmatpush1.bf16.msra.mxu0 0
        %3916 = vmatprep.subr.bf16.mxu0 0
        %3917 = vmatpush1.bf16.msra.mxu0 0
        %3918 = vmatprep.subr.bf16.mxu0 0
        %3919 = vmatpush1.bf16.msra.mxu0 0
        %3920 = vmatprep.subr.bf16.mxu0 0
        %3921 = vmatpush1.bf16.msra.mxu0 0
        %3922 = vmatprep.subr.bf16.mxu0 %v3892
        %3923 = vmatpush1.bf16.msra.mxu0 %v3891
        %3924 = vmatprep.subr.bf16.mxu0 %v3888
        %3925 = vmatpush1.bf16.msra.mxu0 %v3887
        %3926 = vmatprep.subr.bf16.mxu0 %v3884
        %3927 = vmatpush1.bf16.msra.mxu0 %v3883
        %3928 = vmatprep.subr.bf16.mxu0 %v3880
        %3929 = vmatpush1.bf16.msra.mxu0 %v3879
        %3930 = vmatprep.subr.bf16.mxu0 0
        %3931 = vmatpush2.bf16.msra.mxu0 0
        %3932 = vmatprep.subr.bf16.mxu0 0
        %3933 = vmatpush2.bf16.msra.mxu0 0
        %3934 = vmatprep.subr.bf16.mxu0 0
        %3935 = vmatpush2.bf16.msra.mxu0 0
        %3936 = vmatprep.subr.bf16.mxu0 0
        %3937 = vmatpush2.bf16.msra.mxu0 0
        %3938 = vmatprep.subr.bf16.mxu0 0
        %3939 = vmatpush2.bf16.msra.mxu0 0
        %3940 = vmatprep.subr.bf16.mxu0 0
        %3941 = vmatpush2.bf16.msra.mxu0 0
        %3942 = vmatprep.subr.bf16.mxu0 0
        %3943 = vmatpush2.bf16.msra.mxu0 0
        %3944 = vmatprep.subr.bf16.mxu0 0
        %3945 = vmatpush2.bf16.msra.mxu0 0
        %3946 = vmatprep.mubr.bf16.mxu0 0
        %3947 = vmatmul.mubr.bf16.gmra.mxu0 %v3912
        %v3948 = vpop.f32.mrf.mxu0
        %v3949 = vadd.f32 %v3784, %v3948
        %v3950 = vpop.f32.mrf.mxu0
        %v3951 = vadd.f32 %v3786, %v3950
        %v3952 = vpop.f32.mrf.mxu0
        %v3953 = vpop.f32.mrf.mxu0
        %3954 = vdwg.mxu0
        %3955 = vmatprep.subr.bf16.mxu0 0
        %3956 = vmatpush1.bf16.msra.mxu0 0
        %3957 = vmatprep.subr.bf16.mxu0 0
        %3958 = vmatpush1.bf16.msra.mxu0 0
        %3959 = vmatprep.subr.bf16.mxu0 0
        %3960 = vmatpush1.bf16.msra.mxu0 0
        %3961 = vmatprep.subr.bf16.mxu0 0
        %3962 = vmatpush1.bf16.msra.mxu0 0
        %3963 = vmatprep.subr.bf16.mxu0 %v3894
        %3964 = vmatpush1.bf16.msra.mxu0 %v3893
        %3965 = vmatprep.subr.bf16.mxu0 %v3890
        %3966 = vmatpush1.bf16.msra.mxu0 %v3889
        %3967 = vmatprep.subr.bf16.mxu0 %v3886
        %3968 = vmatpush1.bf16.msra.mxu0 %v3885
        %3969 = vmatprep.subr.bf16.mxu0 %v3882
        %3970 = vmatpush1.bf16.msra.mxu0 %v3881
        %3971 = vmatprep.subr.bf16.mxu0 0
        %3972 = vmatpush2.bf16.msra.mxu0 0
        %3973 = vmatprep.subr.bf16.mxu0 0
        %3974 = vmatpush2.bf16.msra.mxu0 0
        %3975 = vmatprep.subr.bf16.mxu0 0
        %3976 = vmatpush2.bf16.msra.mxu0 0
        %3977 = vmatprep.subr.bf16.mxu0 0
        %3978 = vmatpush2.bf16.msra.mxu0 0
        %3979 = vmatprep.subr.bf16.mxu0 0
        %3980 = vmatpush2.bf16.msra.mxu0 0
        %3981 = vmatprep.subr.bf16.mxu0 0
        %3982 = vmatpush2.bf16.msra.mxu0 0
        %3983 = vmatprep.subr.bf16.mxu0 0
        %3984 = vmatpush2.bf16.msra.mxu0 0
        %3985 = vmatprep.subr.bf16.mxu0 0
        %3986 = vmatpush2.bf16.msra.mxu0 0
        %3987 = vmatprep.mubr.bf16.mxu0 0
        %3988 = vmatmul.mubr.bf16.gmra.mxu0 %v3912
        %v3989 = vpop.f32.mrf.mxu0
        %v3990 = vadd.f32 %v3825, %v3989
        %v3991 = vpop.f32.mrf.mxu0
        %v3992 = vadd.f32 %v3827, %v3991
        %v3993 = vpop.f32.mrf.mxu0
        %v3994 = vpop.f32.mrf.mxu0
        %3995 = vdwg.mxu0
        %v3997 = vsel %vm3411, %v3400, 0
        %v4000 = vsel %vm3411, %v3404, 0
        %4002 = vmatprep.subr.bf16.mxu0 0
        %4003 = vmatpush1.bf16.xpose.msra.mxu0 0
        %4004 = vmatprep.subr.bf16.mxu0 0
        %4005 = vmatpush1.bf16.xpose.msra.mxu0 0
        %4006 = vmatprep.subr.bf16.mxu0 0
        %4007 = vmatpush1.bf16.xpose.msra.mxu0 0
        %4008 = vmatprep.subr.bf16.mxu0 0
        %4009 = vmatpush1.bf16.xpose.msra.mxu0 0
        %4010 = vmatprep.subr.bf16.mxu0 0
        %4011 = vmatpush1.bf16.xpose.msra.mxu0 0
        %4012 = vmatprep.subr.bf16.mxu0 0
        %4013 = vmatpush1.bf16.xpose.msra.mxu0 0
        %4014 = vmatprep.subr.bf16.mxu0 0
        %4015 = vmatpush1.bf16.xpose.msra.mxu0 0
        %4016 = vmatprep.subr.bf16.mxu0 0
        %4017 = vmatpush1.bf16.xpose.msra.mxu0 %v4000
        %4018 = vmatprep.subr.bf16.mxu0 0
        %4019 = vmatpush2.bf16.xpose.msra.mxu0 0
        %4020 = vmatprep.subr.bf16.mxu0 0
        %4021 = vmatpush2.bf16.xpose.msra.mxu0 0
        %4022 = vmatprep.subr.bf16.mxu0 0
        %4023 = vmatpush2.bf16.xpose.msra.mxu0 0
        %4024 = vmatprep.subr.bf16.mxu0 0
        %4025 = vmatpush2.bf16.xpose.msra.mxu0 0
        %4026 = vmatprep.subr.bf16.mxu0 0
        %4027 = vmatpush2.bf16.xpose.msra.mxu0 0
        %4028 = vmatprep.subr.bf16.mxu0 0
        %4029 = vmatpush2.bf16.xpose.msra.mxu0 0
        %4030 = vmatprep.subr.bf16.mxu0 0
        %4031 = vmatpush2.bf16.xpose.msra.mxu0 0
        %4032 = vmatprep.subr.bf16.mxu0 0
        %4033 = vmatpush2.bf16.xpose.msra.mxu0 0
        %4034 = vmatprep.mubr.bf16.mxu0 0
        %4035 = vmatmul.mubr.bf16.gmra.mxu0 %v3997
        %v4036 = vpop.f32.mrf.mxu0
        %v4037 = vadd.f32 0.0, %v4036
        %v4038 = vpop.f32.mrf.mxu0
        %v4039 = vpop.f32.mrf.mxu0
        %v4040 = vpop.f32.mrf.mxu0
        %4041 = vdwg.mxu0
        %v4042 = vsel %vm3458, %v4037, -inf
        %4043 = vmax.xlane.f32.xlu0 %v4042
        %v4044 = vpop.xlane.xlu0 %4043
        %v4045 = vsub.f32 %v4037, %v4044
        %v4046 = vmul.f32 %v4045, 1.442695
        %v4047 = vpow.pop %v4046
        %v4048 = vsel %vm3458, %v4047, 0.0
        %4049 = vadd.xlane.f32.xlu0 %v4048
        %v4050 = vpop.xlane.xlu0 %4049
        %v4051 = vrcp.pop %v4050
        %v4052 = vmul.f32 %v4047, %v4051
        %v4053 = vpack.c.bf16 %v4052, %v4052
        %v4055 = vsel %vm3458, %v4053, 0
        %v4058 = vsel %vm3474, %v3408, 0
        %4060 = vmatprep.subr.bf16.mxu0 0
        %4061 = vmatpush1.bf16.msra.mxu0 0
        %4062 = vmatprep.subr.bf16.mxu0 0
        %4063 = vmatpush1.bf16.msra.mxu0 0
        %4064 = vmatprep.subr.bf16.mxu0 0
        %4065 = vmatpush1.bf16.msra.mxu0 0
        %4066 = vmatprep.subr.bf16.mxu0 0
        %4067 = vmatpush1.bf16.msra.mxu0 0
        %4068 = vmatprep.subr.bf16.mxu0 0
        %4069 = vmatpush1.bf16.msra.mxu0 0
        %4070 = vmatprep.subr.bf16.mxu0 0
        %4071 = vmatpush1.bf16.msra.mxu0 0
        %4072 = vmatprep.subr.bf16.mxu0 0
        %4073 = vmatpush1.bf16.msra.mxu0 0
        %4074 = vmatprep.subr.bf16.mxu0 0
        %4075 = vmatpush1.bf16.msra.mxu0 %v4058
        %4076 = vmatprep.subr.bf16.mxu0 0
        %4077 = vmatpush2.bf16.msra.mxu0 0
        %4078 = vmatprep.subr.bf16.mxu0 0
        %4079 = vmatpush2.bf16.msra.mxu0 0
        %4080 = vmatprep.subr.bf16.mxu0 0
        %4081 = vmatpush2.bf16.msra.mxu0 0
        %4082 = vmatprep.subr.bf16.mxu0 0
        %4083 = vmatpush2.bf16.msra.mxu0 0
        %4084 = vmatprep.subr.bf16.mxu0 0
        %4085 = vmatpush2.bf16.msra.mxu0 0
        %4086 = vmatprep.subr.bf16.mxu0 0
        %4087 = vmatpush2.bf16.msra.mxu0 0
        %4088 = vmatprep.subr.bf16.mxu0 0
        %4089 = vmatpush2.bf16.msra.mxu0 0
        %4090 = vmatprep.subr.bf16.mxu0 0
        %4091 = vmatpush2.bf16.msra.mxu0 0
        %4092 = vmatprep.mubr.bf16.mxu0 0
        %4093 = vmatmul.mubr.bf16.gmra.mxu0 %v4055
        %v4094 = vpop.f32.mrf.mxu0
        %v4095 = vadd.f32 0.0, %v4094
        %v4096 = vpop.f32.mrf.mxu0
        %v4097 = vpop.f32.mrf.mxu0
        %v4098 = vpop.f32.mrf.mxu0
        %4099 = vdwg.mxu0
        %v4100 = vpack.c.bf16 %v4095, %v4095
        %s4101 = scalar_lea.vmem [#allocation8], 256
        %v4102 = vld [vmem:[%s4101] sm:$0xff]
        %v4103 = vld [vmem:[%s4101 + $0x8] sm:$0xff]
        %v4104 = vld [vmem:[%s4101 + $0x10] sm:$0xff]
        %v4105 = vld [vmem:[%s4101 + $0x18] sm:$0xff]
        %v4106 = vld [vmem:[%s4101 + $0x20] sm:$0xff]
        %v4107 = vld [vmem:[%s4101 + $0x28] sm:$0xff]
        %v4108 = vld [vmem:[%s4101 + $0x30] sm:$0xff]
        %v4109 = vld [vmem:[%s4101 + $0x38] sm:$0xff]
        %v4110 = vld [vmem:[%s4101 + $0x40] sm:$0xff]
        %v4111 = vld [vmem:[%s4101 + $0x48] sm:$0xff]
        %v4112 = vld [vmem:[%s4101 + $0x50] sm:$0xff]
        %v4113 = vld [vmem:[%s4101 + $0x58] sm:$0xff]
        %v4114 = vld [vmem:[%s4101 + $0x60] sm:$0xff]
        %v4115 = vld [vmem:[%s4101 + $0x68] sm:$0xff]
        %v4116 = vld [vmem:[%s4101 + $0x70] sm:$0xff]
        %v4117 = vld [vmem:[%s4101 + $0x78] sm:$0xff]
        %v4134 = vunpack.c.l.b16 %v4102
        %v4135 = vunpack.c.h.b16 %v4102
        %v4136 = vunpack.c.l.b16 %v4103
        %v4137 = vunpack.c.h.b16 %v4103
        %v4138 = vunpack.c.l.b16 %v4104
        %v4139 = vunpack.c.h.b16 %v4104
        %v4140 = vunpack.c.l.b16 %v4105
        %v4141 = vunpack.c.h.b16 %v4105
        %v4142 = vunpack.c.l.b16 %v4106
        %v4143 = vunpack.c.h.b16 %v4106
        %v4144 = vunpack.c.l.b16 %v4107
        %v4145 = vunpack.c.h.b16 %v4107
        %v4146 = vunpack.c.l.b16 %v4108
        %v4147 = vunpack.c.h.b16 %v4108
        %v4148 = vunpack.c.l.b16 %v4109
        %v4149 = vunpack.c.h.b16 %v4109
        %v4150 = vunpack.c.l.b16 %v4110
        %v4151 = vunpack.c.h.b16 %v4110
        %v4152 = vunpack.c.l.b16 %v4111
        %v4153 = vunpack.c.h.b16 %v4111
        %v4154 = vunpack.c.l.b16 %v4112
        %v4155 = vunpack.c.h.b16 %v4112
        %v4156 = vunpack.c.l.b16 %v4113
        %v4157 = vunpack.c.h.b16 %v4113
        %v4158 = vunpack.c.l.b16 %v4114
        %v4159 = vunpack.c.h.b16 %v4114
        %v4160 = vunpack.c.l.b16 %v4115
        %v4161 = vunpack.c.h.b16 %v4115
        %v4162 = vunpack.c.l.b16 %v4116
        %v4163 = vunpack.c.h.b16 %v4116
        %v4164 = vunpack.c.l.b16 %v4117
        %v4165 = vunpack.c.h.b16 %v4117
        %v4166 = vpack.c.b16 %v4138, %v4134
        %v4167 = vpack.c.b16 %v4139, %v4135
        %v4168 = vpack.c.b16 %v4140, %v4136
        %v4169 = vpack.c.b16 %v4141, %v4137
        %v4170 = vpack.c.b16 %v4146, %v4142
        %v4171 = vpack.c.b16 %v4147, %v4143
        %v4172 = vpack.c.b16 %v4148, %v4144
        %v4173 = vpack.c.b16 %v4149, %v4145
        %v4174 = vpack.c.b16 %v4154, %v4150
        %v4175 = vpack.c.b16 %v4155, %v4151
        %v4176 = vpack.c.b16 %v4156, %v4152
        %v4177 = vpack.c.b16 %v4157, %v4153
        %v4178 = vpack.c.b16 %v4162, %v4158
        %v4179 = vpack.c.b16 %v4163, %v4159
        %v4180 = vpack.c.b16 %v4164, %v4160
        %v4181 = vpack.c.b16 %v4165, %v4161
        %v4199 = vsel %vm3411, %v4100, 0
        %4201 = vmatprep.subr.bf16.mxu0 0
        %4202 = vmatpush1.bf16.msra.mxu0 0
        %4203 = vmatprep.subr.bf16.mxu0 0
        %4204 = vmatpush1.bf16.msra.mxu0 0
        %4205 = vmatprep.subr.bf16.mxu0 0
        %4206 = vmatpush1.bf16.msra.mxu0 0
        %4207 = vmatprep.subr.bf16.mxu0 0
        %4208 = vmatpush1.bf16.msra.mxu0 0
        %4209 = vmatprep.subr.bf16.mxu0 %v4179
        %4210 = vmatpush1.bf16.msra.mxu0 %v4178
        %4211 = vmatprep.subr.bf16.mxu0 %v4175
        %4212 = vmatpush1.bf16.msra.mxu0 %v4174
        %4213 = vmatprep.subr.bf16.mxu0 %v4171
        %4214 = vmatpush1.bf16.msra.mxu0 %v4170
        %4215 = vmatprep.subr.bf16.mxu0 %v4167
        %4216 = vmatpush1.bf16.msra.mxu0 %v4166
        %4217 = vmatprep.subr.bf16.mxu0 0
        %4218 = vmatpush2.bf16.msra.mxu0 0
        %4219 = vmatprep.subr.bf16.mxu0 0
        %4220 = vmatpush2.bf16.msra.mxu0 0
        %4221 = vmatprep.subr.bf16.mxu0 0
        %4222 = vmatpush2.bf16.msra.mxu0 0
        %4223 = vmatprep.subr.bf16.mxu0 0
        %4224 = vmatpush2.bf16.msra.mxu0 0
        %4225 = vmatprep.subr.bf16.mxu0 0
        %4226 = vmatpush2.bf16.msra.mxu0 0
        %4227 = vmatprep.subr.bf16.mxu0 0
        %4228 = vmatpush2.bf16.msra.mxu0 0
        %4229 = vmatprep.subr.bf16.mxu0 0
        %4230 = vmatpush2.bf16.msra.mxu0 0
        %4231 = vmatprep.subr.bf16.mxu0 0
        %4232 = vmatpush2.bf16.msra.mxu0 0
        %4233 = vmatprep.mubr.bf16.mxu0 0
        %4234 = vmatmul.mubr.bf16.gmra.mxu0 %v4199
        %v4235 = vpop.f32.mrf.mxu0
        %v4236 = vadd.f32 0.0, %v4235
        %v4237 = vpop.f32.mrf.mxu0
        %v4238 = vadd.f32 0.0, %v4237
        %v4239 = vpop.f32.mrf.mxu0
        %v4240 = vpop.f32.mrf.mxu0
        %4241 = vdwg.mxu0
        %4242 = vmatprep.subr.bf16.mxu0 0
        %4243 = vmatpush1.bf16.msra.mxu0 0
        %4244 = vmatprep.subr.bf16.mxu0 0
        %4245 = vmatpush1.bf16.msra.mxu0 0
        %4246 = vmatprep.subr.bf16.mxu0 0
        %4247 = vmatpush1.bf16.msra.mxu0 0
        %4248 = vmatprep.subr.bf16.mxu0 0
        %4249 = vmatpush1.bf16.msra.mxu0 0
        %4250 = vmatprep.subr.bf16.mxu0 %v4181
        %4251 = vmatpush1.bf16.msra.mxu0 %v4180
        %4252 = vmatprep.subr.bf16.mxu0 %v4177
        %4253 = vmatpush1.bf16.msra.mxu0 %v4176
        %4254 = vmatprep.subr.bf16.mxu0 %v4173
        %4255 = vmatpush1.bf16.msra.mxu0 %v4172
        %4256 = vmatprep.subr.bf16.mxu0 %v4169
        %4257 = vmatpush1.bf16.msra.mxu0 %v4168
        %4258 = vmatprep.subr.bf16.mxu0 0
        %4259 = vmatpush2.bf16.msra.mxu0 0
        %4260 = vmatprep.subr.bf16.mxu0 0
        %4261 = vmatpush2.bf16.msra.mxu0 0
        %4262 = vmatprep.subr.bf16.mxu0 0
        %4263 = vmatpush2.bf16.msra.mxu0 0
        %4264 = vmatprep.subr.bf16.mxu0 0
        %4265 = vmatpush2.bf16.msra.mxu0 0
        %4266 = vmatprep.subr.bf16.mxu0 0
        %4267 = vmatpush2.bf16.msra.mxu0 0
        %4268 = vmatprep.subr.bf16.mxu0 0
        %4269 = vmatpush2.bf16.msra.mxu0 0
        %4270 = vmatprep.subr.bf16.mxu0 0
        %4271 = vmatpush2.bf16.msra.mxu0 0
        %4272 = vmatprep.subr.bf16.mxu0 0
        %4273 = vmatpush2.bf16.msra.mxu0 0
        %4274 = vmatprep.mubr.bf16.mxu0 0
        %4275 = vmatmul.mubr.bf16.gmra.mxu0 %v4199
        %v4276 = vpop.f32.mrf.mxu0
        %v4277 = vadd.f32 0.0, %v4276
        %v4278 = vpop.f32.mrf.mxu0
        %v4279 = vadd.f32 0.0, %v4278
        %v4280 = vpop.f32.mrf.mxu0
        %v4281 = vpop.f32.mrf.mxu0
        %4282 = vdwg.mxu0
        %v4283 = vadd.f32 %v3949, %v4236
        %v4284 = vadd.f32 %v3951, %v4238
        %v4285 = vadd.f32 %v3990, %v4277
        %v4286 = vadd.f32 %v3992, %v4279
        %4288 = vrot.lane.b32.xlu0 %v3400, 64
        %v4289 = vpop.permute.xlu0 %4288
        %4291 = vrot.lane.b32.xlu0 %v3404, 64
        %v4292 = vpop.permute.xlu0 %4291
        %v4294 = vsel %vm3411, %v4289, 0
        %v4297 = vsel %vm3411, %v4292, 0
        %4299 = vmatprep.subr.bf16.mxu0 0
        %4300 = vmatpush1.bf16.xpose.msra.mxu0 0
        %4301 = vmatprep.subr.bf16.mxu0 0
        %4302 = vmatpush1.bf16.xpose.msra.mxu0 0
        %4303 = vmatprep.subr.bf16.mxu0 0
        %4304 = vmatpush1.bf16.xpose.msra.mxu0 0
        %4305 = vmatprep.subr.bf16.mxu0 0
        %4306 = vmatpush1.bf16.xpose.msra.mxu0 0
        %4307 = vmatprep.subr.bf16.mxu0 0
        %4308 = vmatpush1.bf16.xpose.msra.mxu0 0
        %4309 = vmatprep.subr.bf16.mxu0 0
        %4310 = vmatpush1.bf16.xpose.msra.mxu0 0
        %4311 = vmatprep.subr.bf16.mxu0 0
        %4312 = vmatpush1.bf16.xpose.msra.mxu0 0
        %4313 = vmatprep.subr.bf16.mxu0 0
        %4314 = vmatpush1.bf16.xpose.msra.mxu0 %v4297
        %4315 = vmatprep.subr.bf16.mxu0 0
        %4316 = vmatpush2.bf16.xpose.msra.mxu0 0
        %4317 = vmatprep.subr.bf16.mxu0 0
        %4318 = vmatpush2.bf16.xpose.msra.mxu0 0
        %4319 = vmatprep.subr.bf16.mxu0 0
        %4320 = vmatpush2.bf16.xpose.msra.mxu0 0
        %4321 = vmatprep.subr.bf16.mxu0 0
        %4322 = vmatpush2.bf16.xpose.msra.mxu0 0
        %4323 = vmatprep.subr.bf16.mxu0 0
        %4324 = vmatpush2.bf16.xpose.msra.mxu0 0
        %4325 = vmatprep.subr.bf16.mxu0 0
        %4326 = vmatpush2.bf16.xpose.msra.mxu0 0
        %4327 = vmatprep.subr.bf16.mxu0 0
        %4328 = vmatpush2.bf16.xpose.msra.mxu0 0
        %4329 = vmatprep.subr.bf16.mxu0 0
        %4330 = vmatpush2.bf16.xpose.msra.mxu0 0
        %4331 = vmatprep.mubr.bf16.mxu0 0
        %4332 = vmatmul.mubr.bf16.gmra.mxu0 %v4294
        %v4333 = vpop.f32.mrf.mxu0
        %v4334 = vadd.f32 0.0, %v4333
        %v4335 = vpop.f32.mrf.mxu0
        %v4336 = vpop.f32.mrf.mxu0
        %v4337 = vpop.f32.mrf.mxu0
        %4338 = vdwg.mxu0
        %v4339 = vsel %vm3458, %v4334, -inf
        %4340 = vmax.xlane.f32.xlu0 %v4339
        %v4341 = vpop.xlane.xlu0 %4340
        %v4342 = vsub.f32 %v4334, %v4341
        %v4343 = vmul.f32 %v4342, 1.442695
        %v4344 = vpow.pop %v4343
        %v4345 = vsel %vm3458, %v4344, 0.0
        %4346 = vadd.xlane.f32.xlu0 %v4345
        %v4347 = vpop.xlane.xlu0 %4346
        %v4348 = vrcp.pop %v4347
        %v4349 = vmul.f32 %v4344, %v4348
        %v4350 = vpack.c.bf16 %v4349, %v4349
        %4352 = vrot.lane.b32.xlu0 %v3408, 64
        %v4353 = vpop.permute.xlu0 %4352
        %v4355 = vsel %vm3458, %v4350, 0
        %v4358 = vsel %vm3474, %v4353, 0
        %4360 = vmatprep.subr.bf16.mxu0 0
        %4361 = vmatpush1.bf16.msra.mxu0 0
        %4362 = vmatprep.subr.bf16.mxu0 0
        %4363 = vmatpush1.bf16.msra.mxu0 0
        %4364 = vmatprep.subr.bf16.mxu0 0
        %4365 = vmatpush1.bf16.msra.mxu0 0
        %4366 = vmatprep.subr.bf16.mxu0 0
        %4367 = vmatpush1.bf16.msra.mxu0 0
        %4368 = vmatprep.subr.bf16.mxu0 0
        %4369 = vmatpush1.bf16.msra.mxu0 0
        %4370 = vmatprep.subr.bf16.mxu0 0
        %4371 = vmatpush1.bf16.msra.mxu0 0
        %4372 = vmatprep.subr.bf16.mxu0 0
        %4373 = vmatpush1.bf16.msra.mxu0 0
        %4374 = vmatprep.subr.bf16.mxu0 0
        %4375 = vmatpush1.bf16.msra.mxu0 %v4358
        %4376 = vmatprep.subr.bf16.mxu0 0
        %4377 = vmatpush2.bf16.msra.mxu0 0
        %4378 = vmatprep.subr.bf16.mxu0 0
        %4379 = vmatpush2.bf16.msra.mxu0 0
        %4380 = vmatprep.subr.bf16.mxu0 0
        %4381 = vmatpush2.bf16.msra.mxu0 0
        %4382 = vmatprep.subr.bf16.mxu0 0
        %4383 = vmatpush2.bf16.msra.mxu0 0
        %4384 = vmatprep.subr.bf16.mxu0 0
        %4385 = vmatpush2.bf16.msra.mxu0 0
        %4386 = vmatprep.subr.bf16.mxu0 0
        %4387 = vmatpush2.bf16.msra.mxu0 0
        %4388 = vmatprep.subr.bf16.mxu0 0
        %4389 = vmatpush2.bf16.msra.mxu0 0
        %4390 = vmatprep.subr.bf16.mxu0 0
        %4391 = vmatpush2.bf16.msra.mxu0 0
        %4392 = vmatprep.mubr.bf16.mxu0 0
        %4393 = vmatmul.mubr.bf16.gmra.mxu0 %v4355
        %v4394 = vpop.f32.mrf.mxu0
        %v4395 = vadd.f32 0.0, %v4394
        %v4396 = vpop.f32.mrf.mxu0
        %v4397 = vpop.f32.mrf.mxu0
        %v4398 = vpop.f32.mrf.mxu0
        %4399 = vdwg.mxu0
        %v4400 = vpack.c.bf16 %v4395, %v4395
        %s4401 = scalar_lea.vmem [#allocation8], 384
        %v4402 = vld [vmem:[%s4401] sm:$0xff]
        %v4403 = vld [vmem:[%s4401 + $0x8] sm:$0xff]
        %v4404 = vld [vmem:[%s4401 + $0x10] sm:$0xff]
        %v4405 = vld [vmem:[%s4401 + $0x18] sm:$0xff]
        %v4406 = vld [vmem:[%s4401 + $0x20] sm:$0xff]
        %v4407 = vld [vmem:[%s4401 + $0x28] sm:$0xff]
        %v4408 = vld [vmem:[%s4401 + $0x30] sm:$0xff]
        %v4409 = vld [vmem:[%s4401 + $0x38] sm:$0xff]
        %v4410 = vld [vmem:[%s4401 + $0x40] sm:$0xff]
        %v4411 = vld [vmem:[%s4401 + $0x48] sm:$0xff]
        %v4412 = vld [vmem:[%s4401 + $0x50] sm:$0xff]
        %v4413 = vld [vmem:[%s4401 + $0x58] sm:$0xff]
        %v4414 = vld [vmem:[%s4401 + $0x60] sm:$0xff]
        %v4415 = vld [vmem:[%s4401 + $0x68] sm:$0xff]
        %v4416 = vld [vmem:[%s4401 + $0x70] sm:$0xff]
        %v4417 = vld [vmem:[%s4401 + $0x78] sm:$0xff]
        %v4434 = vunpack.c.l.b16 %v4402
        %v4435 = vunpack.c.h.b16 %v4402
        %v4436 = vunpack.c.l.b16 %v4403
        %v4437 = vunpack.c.h.b16 %v4403
        %v4438 = vunpack.c.l.b16 %v4404
        %v4439 = vunpack.c.h.b16 %v4404
        %v4440 = vunpack.c.l.b16 %v4405
        %v4441 = vunpack.c.h.b16 %v4405
        %v4442 = vunpack.c.l.b16 %v4406
        %v4443 = vunpack.c.h.b16 %v4406
        %v4444 = vunpack.c.l.b16 %v4407
        %v4445 = vunpack.c.h.b16 %v4407
        %v4446 = vunpack.c.l.b16 %v4408
        %v4447 = vunpack.c.h.b16 %v4408
        %v4448 = vunpack.c.l.b16 %v4409
        %v4449 = vunpack.c.h.b16 %v4409
        %v4450 = vunpack.c.l.b16 %v4410
        %v4451 = vunpack.c.h.b16 %v4410
        %v4452 = vunpack.c.l.b16 %v4411
        %v4453 = vunpack.c.h.b16 %v4411
        %v4454 = vunpack.c.l.b16 %v4412
        %v4455 = vunpack.c.h.b16 %v4412
        %v4456 = vunpack.c.l.b16 %v4413
        %v4457 = vunpack.c.h.b16 %v4413
        %v4458 = vunpack.c.l.b16 %v4414
        %v4459 = vunpack.c.h.b16 %v4414
        %v4460 = vunpack.c.l.b16 %v4415
        %v4461 = vunpack.c.h.b16 %v4415
        %v4462 = vunpack.c.l.b16 %v4416
        %v4463 = vunpack.c.h.b16 %v4416
        %v4464 = vunpack.c.l.b16 %v4417
        %v4465 = vunpack.c.h.b16 %v4417
        %v4466 = vpack.c.b16 %v4438, %v4434
        %v4467 = vpack.c.b16 %v4439, %v4435
        %v4468 = vpack.c.b16 %v4440, %v4436
        %v4469 = vpack.c.b16 %v4441, %v4437
        %v4470 = vpack.c.b16 %v4446, %v4442
        %v4471 = vpack.c.b16 %v4447, %v4443
        %v4472 = vpack.c.b16 %v4448, %v4444
        %v4473 = vpack.c.b16 %v4449, %v4445
        %v4474 = vpack.c.b16 %v4454, %v4450
        %v4475 = vpack.c.b16 %v4455, %v4451
        %v4476 = vpack.c.b16 %v4456, %v4452
        %v4477 = vpack.c.b16 %v4457, %v4453
        %v4478 = vpack.c.b16 %v4462, %v4458
        %v4479 = vpack.c.b16 %v4463, %v4459
        %v4480 = vpack.c.b16 %v4464, %v4460
        %v4481 = vpack.c.b16 %v4465, %v4461
        %v4499 = vsel %vm3411, %v4400, 0
        %4501 = vmatprep.subr.bf16.mxu0 0
        %4502 = vmatpush1.bf16.msra.mxu0 0
        %4503 = vmatprep.subr.bf16.mxu0 0
        %4504 = vmatpush1.bf16.msra.mxu0 0
        %4505 = vmatprep.subr.bf16.mxu0 0
        %4506 = vmatpush1.bf16.msra.mxu0 0
        %4507 = vmatprep.subr.bf16.mxu0 0
        %4508 = vmatpush1.bf16.msra.mxu0 0
        %4509 = vmatprep.subr.bf16.mxu0 %v4479
        %4510 = vmatpush1.bf16.msra.mxu0 %v4478
        %4511 = vmatprep.subr.bf16.mxu0 %v4475
        %4512 = vmatpush1.bf16.msra.mxu0 %v4474
        %4513 = vmatprep.subr.bf16.mxu0 %v4471
        %4514 = vmatpush1.bf16.msra.mxu0 %v4470
        %4515 = vmatprep.subr.bf16.mxu0 %v4467
        %4516 = vmatpush1.bf16.msra.mxu0 %v4466
        %4517 = vmatprep.subr.bf16.mxu0 0
        %4518 = vmatpush2.bf16.msra.mxu0 0
        %4519 = vmatprep.subr.bf16.mxu0 0
        %4520 = vmatpush2.bf16.msra.mxu0 0
        %4521 = vmatprep.subr.bf16.mxu0 0
        %4522 = vmatpush2.bf16.msra.mxu0 0
        %4523 = vmatprep.subr.bf16.mxu0 0
        %4524 = vmatpush2.bf16.msra.mxu0 0
        %4525 = vmatprep.subr.bf16.mxu0 0
        %4526 = vmatpush2.bf16.msra.mxu0 0
        %4527 = vmatprep.subr.bf16.mxu0 0
        %4528 = vmatpush2.bf16.msra.mxu0 0
        %4529 = vmatprep.subr.bf16.mxu0 0
        %4530 = vmatpush2.bf16.msra.mxu0 0
        %4531 = vmatprep.subr.bf16.mxu0 0
        %4532 = vmatpush2.bf16.msra.mxu0 0
        %4533 = vmatprep.mubr.bf16.mxu0 0
        %4534 = vmatmul.mubr.bf16.gmra.mxu0 %v4499
        %v4535 = vpop.f32.mrf.mxu0
        %v4536 = vadd.f32 0.0, %v4535
        %v4537 = vpop.f32.mrf.mxu0
        %v4538 = vadd.f32 0.0, %v4537
        %v4539 = vpop.f32.mrf.mxu0
        %v4540 = vpop.f32.mrf.mxu0
        %4541 = vdwg.mxu0
        %4542 = vmatprep.subr.bf16.mxu0 0
        %4543 = vmatpush1.bf16.msra.mxu0 0
        %4544 = vmatprep.subr.bf16.mxu0 0
        %4545 = vmatpush1.bf16.msra.mxu0 0
        %4546 = vmatprep.subr.bf16.mxu0 0
        %4547 = vmatpush1.bf16.msra.mxu0 0
        %4548 = vmatprep.subr.bf16.mxu0 0
        %4549 = vmatpush1.bf16.msra.mxu0 0
        %4550 = vmatprep.subr.bf16.mxu0 %v4481
        %4551 = vmatpush1.bf16.msra.mxu0 %v4480
        %4552 = vmatprep.subr.bf16.mxu0 %v4477
        %4553 = vmatpush1.bf16.msra.mxu0 %v4476
        %4554 = vmatprep.subr.bf16.mxu0 %v4473
        %4555 = vmatpush1.bf16.msra.mxu0 %v4472
        %4556 = vmatprep.subr.bf16.mxu0 %v4469
        %4557 = vmatpush1.bf16.msra.mxu0 %v4468
        %4558 = vmatprep.subr.bf16.mxu0 0
        %4559 = vmatpush2.bf16.msra.mxu0 0
        %4560 = vmatprep.subr.bf16.mxu0 0
        %4561 = vmatpush2.bf16.msra.mxu0 0
        %4562 = vmatprep.subr.bf16.mxu0 0
        %4563 = vmatpush2.bf16.msra.mxu0 0
        %4564 = vmatprep.subr.bf16.mxu0 0
        %4565 = vmatpush2.bf16.msra.mxu0 0
        %4566 = vmatprep.subr.bf16.mxu0 0
        %4567 = vmatpush2.bf16.msra.mxu0 0
        %4568 = vmatprep.subr.bf16.mxu0 0
        %4569 = vmatpush2.bf16.msra.mxu0 0
        %4570 = vmatprep.subr.bf16.mxu0 0
        %4571 = vmatpush2.bf16.msra.mxu0 0
        %4572 = vmatprep.subr.bf16.mxu0 0
        %4573 = vmatpush2.bf16.msra.mxu0 0
        %4574 = vmatprep.mubr.bf16.mxu0 0
        %4575 = vmatmul.mubr.bf16.gmra.mxu0 %v4499
        %v4576 = vpop.f32.mrf.mxu0
        %v4577 = vadd.f32 0.0, %v4576
        %v4578 = vpop.f32.mrf.mxu0
        %v4579 = vadd.f32 0.0, %v4578
        %v4580 = vpop.f32.mrf.mxu0
        %v4581 = vpop.f32.mrf.mxu0
        %4582 = vdwg.mxu0
        %v4583 = vadd.f32 %v4283, %v4536
        %v4584 = vadd.f32 %v4284, %v4538
        %v4585 = vadd.f32 %v4285, %v4577
        %v4586 = vadd.f32 %v4286, %v4579
        %v4588 = vsel %vm3411, %v3401, 0
        %v4591 = vsel %vm3411, %v3405, 0
        %4593 = vmatprep.subr.bf16.mxu0 0
        %4594 = vmatpush1.bf16.xpose.msra.mxu0 0
        %4595 = vmatprep.subr.bf16.mxu0 0
        %4596 = vmatpush1.bf16.xpose.msra.mxu0 0
        %4597 = vmatprep.subr.bf16.mxu0 0
        %4598 = vmatpush1.bf16.xpose.msra.mxu0 0
        %4599 = vmatprep.subr.bf16.mxu0 0
        %4600 = vmatpush1.bf16.xpose.msra.mxu0 0
        %4601 = vmatprep.subr.bf16.mxu0 0
        %4602 = vmatpush1.bf16.xpose.msra.mxu0 0
        %4603 = vmatprep.subr.bf16.mxu0 0
        %4604 = vmatpush1.bf16.xpose.msra.mxu0 0
        %4605 = vmatprep.subr.bf16.mxu0 0
        %4606 = vmatpush1.bf16.xpose.msra.mxu0 0
        %4607 = vmatprep.subr.bf16.mxu0 0
        %4608 = vmatpush1.bf16.xpose.msra.mxu0 %v4591
        %4609 = vmatprep.subr.bf16.mxu0 0
        %4610 = vmatpush2.bf16.xpose.msra.mxu0 0
        %4611 = vmatprep.subr.bf16.mxu0 0
        %4612 = vmatpush2.bf16.xpose.msra.mxu0 0
        %4613 = vmatprep.subr.bf16.mxu0 0
        %4614 = vmatpush2.bf16.xpose.msra.mxu0 0
        %4615 = vmatprep.subr.bf16.mxu0 0
        %4616 = vmatpush2.bf16.xpose.msra.mxu0 0
        %4617 = vmatprep.subr.bf16.mxu0 0
        %4618 = vmatpush2.bf16.xpose.msra.mxu0 0
        %4619 = vmatprep.subr.bf16.mxu0 0
        %4620 = vmatpush2.bf16.xpose.msra.mxu0 0
        %4621 = vmatprep.subr.bf16.mxu0 0
        %4622 = vmatpush2.bf16.xpose.msra.mxu0 0
        %4623 = vmatprep.subr.bf16.mxu0 0
        %4624 = vmatpush2.bf16.xpose.msra.mxu0 0
        %4625 = vmatprep.mubr.bf16.mxu0 0
        %4626 = vmatmul.mubr.bf16.gmra.mxu0 %v4588
        %v4627 = vpop.f32.mrf.mxu0
        %v4628 = vadd.f32 0.0, %v4627
        %v4629 = vpop.f32.mrf.mxu0
        %v4630 = vpop.f32.mrf.mxu0
        %v4631 = vpop.f32.mrf.mxu0
        %4632 = vdwg.mxu0
        %v4633 = vsel %vm3458, %v4628, -inf
        %4634 = vmax.xlane.f32.xlu0 %v4633
        %v4635 = vpop.xlane.xlu0 %4634
        %v4636 = vsub.f32 %v4628, %v4635
        %v4637 = vmul.f32 %v4636, 1.442695
        %v4638 = vpow.pop %v4637
        %v4639 = vsel %vm3458, %v4638, 0.0
        %4640 = vadd.xlane.f32.xlu0 %v4639
        %v4641 = vpop.xlane.xlu0 %4640
        %v4642 = vrcp.pop %v4641
        %v4643 = vmul.f32 %v4638, %v4642
        %v4644 = vpack.c.bf16 %v4643, %v4643
        %v4646 = vsel %vm3458, %v4644, 0
        %v4649 = vsel %vm3474, %v3409, 0
        %4651 = vmatprep.subr.bf16.mxu0 0
        %4652 = vmatpush1.bf16.msra.mxu0 0
        %4653 = vmatprep.subr.bf16.mxu0 0
        %4654 = vmatpush1.bf16.msra.mxu0 0
        %4655 = vmatprep.subr.bf16.mxu0 0
        %4656 = vmatpush1.bf16.msra.mxu0 0
        %4657 = vmatprep.subr.bf16.mxu0 0
        %4658 = vmatpush1.bf16.msra.mxu0 0
        %4659 = vmatprep.subr.bf16.mxu0 0
        %4660 = vmatpush1.bf16.msra.mxu0 0
        %4661 = vmatprep.subr.bf16.mxu0 0
        %4662 = vmatpush1.bf16.msra.mxu0 0
        %4663 = vmatprep.subr.bf16.mxu0 0
        %4664 = vmatpush1.bf16.msra.mxu0 0
        %4665 = vmatprep.subr.bf16.mxu0 0
        %4666 = vmatpush1.bf16.msra.mxu0 %v4649
        %4667 = vmatprep.subr.bf16.mxu0 0
        %4668 = vmatpush2.bf16.msra.mxu0 0
        %4669 = vmatprep.subr.bf16.mxu0 0
        %4670 = vmatpush2.bf16.msra.mxu0 0
        %4671 = vmatprep.subr.bf16.mxu0 0
        %4672 = vmatpush2.bf16.msra.mxu0 0
        %4673 = vmatprep.subr.bf16.mxu0 0
        %4674 = vmatpush2.bf16.msra.mxu0 0
        %4675 = vmatprep.subr.bf16.mxu0 0
        %4676 = vmatpush2.bf16.msra.mxu0 0
        %4677 = vmatprep.subr.bf16.mxu0 0
        %4678 = vmatpush2.bf16.msra.mxu0 0
        %4679 = vmatprep.subr.bf16.mxu0 0
        %4680 = vmatpush2.bf16.msra.mxu0 0
        %4681 = vmatprep.subr.bf16.mxu0 0
        %4682 = vmatpush2.bf16.msra.mxu0 0
        %4683 = vmatprep.mubr.bf16.mxu0 0
        %4684 = vmatmul.mubr.bf16.gmra.mxu0 %v4646
        %v4685 = vpop.f32.mrf.mxu0
        %v4686 = vadd.f32 0.0, %v4685
        %v4687 = vpop.f32.mrf.mxu0
        %v4688 = vpop.f32.mrf.mxu0
        %v4689 = vpop.f32.mrf.mxu0
        %4690 = vdwg.mxu0
        %v4691 = vpack.c.bf16 %v4686, %v4686
        %s4692 = scalar_lea.vmem [#allocation8], 512
        %v4693 = vld [vmem:[%s4692] sm:$0xff]
        %v4694 = vld [vmem:[%s4692 + $0x8] sm:$0xff]
        %v4695 = vld [vmem:[%s4692 + $0x10] sm:$0xff]
        %v4696 = vld [vmem:[%s4692 + $0x18] sm:$0xff]
        %v4697 = vld [vmem:[%s4692 + $0x20] sm:$0xff]
        %v4698 = vld [vmem:[%s4692 + $0x28] sm:$0xff]
        %v4699 = vld [vmem:[%s4692 + $0x30] sm:$0xff]
        %v4700 = vld [vmem:[%s4692 + $0x38] sm:$0xff]
        %v4701 = vld [vmem:[%s4692 + $0x40] sm:$0xff]
        %v4702 = vld [vmem:[%s4692 + $0x48] sm:$0xff]
        %v4703 = vld [vmem:[%s4692 + $0x50] sm:$0xff]
        %v4704 = vld [vmem:[%s4692 + $0x58] sm:$0xff]
        %v4705 = vld [vmem:[%s4692 + $0x60] sm:$0xff]
        %v4706 = vld [vmem:[%s4692 + $0x68] sm:$0xff]
        %v4707 = vld [vmem:[%s4692 + $0x70] sm:$0xff]
        %v4708 = vld [vmem:[%s4692 + $0x78] sm:$0xff]
        %v4725 = vunpack.c.l.b16 %v4693
        %v4726 = vunpack.c.h.b16 %v4693
        %v4727 = vunpack.c.l.b16 %v4694
        %v4728 = vunpack.c.h.b16 %v4694
        %v4729 = vunpack.c.l.b16 %v4695
        %v4730 = vunpack.c.h.b16 %v4695
        %v4731 = vunpack.c.l.b16 %v4696
        %v4732 = vunpack.c.h.b16 %v4696
        %v4733 = vunpack.c.l.b16 %v4697
        %v4734 = vunpack.c.h.b16 %v4697
        %v4735 = vunpack.c.l.b16 %v4698
        %v4736 = vunpack.c.h.b16 %v4698
        %v4737 = vunpack.c.l.b16 %v4699
        %v4738 = vunpack.c.h.b16 %v4699
        %v4739 = vunpack.c.l.b16 %v4700
        %v4740 = vunpack.c.h.b16 %v4700
        %v4741 = vunpack.c.l.b16 %v4701
        %v4742 = vunpack.c.h.b16 %v4701
        %v4743 = vunpack.c.l.b16 %v4702
        %v4744 = vunpack.c.h.b16 %v4702
        %v4745 = vunpack.c.l.b16 %v4703
        %v4746 = vunpack.c.h.b16 %v4703
        %v4747 = vunpack.c.l.b16 %v4704
        %v4748 = vunpack.c.h.b16 %v4704
        %v4749 = vunpack.c.l.b16 %v4705
        %v4750 = vunpack.c.h.b16 %v4705
        %v4751 = vunpack.c.l.b16 %v4706
        %v4752 = vunpack.c.h.b16 %v4706
        %v4753 = vunpack.c.l.b16 %v4707
        %v4754 = vunpack.c.h.b16 %v4707
        %v4755 = vunpack.c.l.b16 %v4708
        %v4756 = vunpack.c.h.b16 %v4708
        %v4757 = vpack.c.b16 %v4729, %v4725
        %v4758 = vpack.c.b16 %v4730, %v4726
        %v4759 = vpack.c.b16 %v4731, %v4727
        %v4760 = vpack.c.b16 %v4732, %v4728
        %v4761 = vpack.c.b16 %v4737, %v4733
        %v4762 = vpack.c.b16 %v4738, %v4734
        %v4763 = vpack.c.b16 %v4739, %v4735
        %v4764 = vpack.c.b16 %v4740, %v4736
        %v4765 = vpack.c.b16 %v4745, %v4741
        %v4766 = vpack.c.b16 %v4746, %v4742
        %v4767 = vpack.c.b16 %v4747, %v4743
        %v4768 = vpack.c.b16 %v4748, %v4744
        %v4769 = vpack.c.b16 %v4753, %v4749
        %v4770 = vpack.c.b16 %v4754, %v4750
        %v4771 = vpack.c.b16 %v4755, %v4751
        %v4772 = vpack.c.b16 %v4756, %v4752
        %v4790 = vsel %vm3411, %v4691, 0
        %4792 = vmatprep.subr.bf16.mxu0 0
        %4793 = vmatpush1.bf16.msra.mxu0 0
        %4794 = vmatprep.subr.bf16.mxu0 0
        %4795 = vmatpush1.bf16.msra.mxu0 0
        %4796 = vmatprep.subr.bf16.mxu0 0
        %4797 = vmatpush1.bf16.msra.mxu0 0
        %4798 = vmatprep.subr.bf16.mxu0 0
        %4799 = vmatpush1.bf16.msra.mxu0 0
        %4800 = vmatprep.subr.bf16.mxu0 %v4770
        %4801 = vmatpush1.bf16.msra.mxu0 %v4769
        %4802 = vmatprep.subr.bf16.mxu0 %v4766
        %4803 = vmatpush1.bf16.msra.mxu0 %v4765
        %4804 = vmatprep.subr.bf16.mxu0 %v4762
        %4805 = vmatpush1.bf16.msra.mxu0 %v4761
        %4806 = vmatprep.subr.bf16.mxu0 %v4758
        %4807 = vmatpush1.bf16.msra.mxu0 %v4757
        %4808 = vmatprep.subr.bf16.mxu0 0
        %4809 = vmatpush2.bf16.msra.mxu0 0
        %4810 = vmatprep.subr.bf16.mxu0 0
        %4811 = vmatpush2.bf16.msra.mxu0 0
        %4812 = vmatprep.subr.bf16.mxu0 0
        %4813 = vmatpush2.bf16.msra.mxu0 0
        %4814 = vmatprep.subr.bf16.mxu0 0
        %4815 = vmatpush2.bf16.msra.mxu0 0
        %4816 = vmatprep.subr.bf16.mxu0 0
        %4817 = vmatpush2.bf16.msra.mxu0 0
        %4818 = vmatprep.subr.bf16.mxu0 0
        %4819 = vmatpush2.bf16.msra.mxu0 0
        %4820 = vmatprep.subr.bf16.mxu0 0
        %4821 = vmatpush2.bf16.msra.mxu0 0
        %4822 = vmatprep.subr.bf16.mxu0 0
        %4823 = vmatpush2.bf16.msra.mxu0 0
        %4824 = vmatprep.mubr.bf16.mxu0 0
        %4825 = vmatmul.mubr.bf16.gmra.mxu0 %v4790
        %v4826 = vpop.f32.mrf.mxu0
        %v4827 = vadd.f32 0.0, %v4826
        %v4828 = vpop.f32.mrf.mxu0
        %v4829 = vadd.f32 0.0, %v4828
        %v4830 = vpop.f32.mrf.mxu0
        %v4831 = vpop.f32.mrf.mxu0
        %4832 = vdwg.mxu0
        %4833 = vmatprep.subr.bf16.mxu0 0
        %4834 = vmatpush1.bf16.msra.mxu0 0
        %4835 = vmatprep.subr.bf16.mxu0 0
        %4836 = vmatpush1.bf16.msra.mxu0 0
        %4837 = vmatprep.subr.bf16.mxu0 0
        %4838 = vmatpush1.bf16.msra.mxu0 0
        %4839 = vmatprep.subr.bf16.mxu0 0
        %4840 = vmatpush1.bf16.msra.mxu0 0
        %4841 = vmatprep.subr.bf16.mxu0 %v4772
        %4842 = vmatpush1.bf16.msra.mxu0 %v4771
        %4843 = vmatprep.subr.bf16.mxu0 %v4768
        %4844 = vmatpush1.bf16.msra.mxu0 %v4767
        %4845 = vmatprep.subr.bf16.mxu0 %v4764
        %4846 = vmatpush1.bf16.msra.mxu0 %v4763
        %4847 = vmatprep.subr.bf16.mxu0 %v4760
        %4848 = vmatpush1.bf16.msra.mxu0 %v4759
        %4849 = vmatprep.subr.bf16.mxu0 0
        %4850 = vmatpush2.bf16.msra.mxu0 0
        %4851 = vmatprep.subr.bf16.mxu0 0
        %4852 = vmatpush2.bf16.msra.mxu0 0
        %4853 = vmatprep.subr.bf16.mxu0 0
        %4854 = vmatpush2.bf16.msra.mxu0 0
        %4855 = vmatprep.subr.bf16.mxu0 0
        %4856 = vmatpush2.bf16.msra.mxu0 0
        %4857 = vmatprep.subr.bf16.mxu0 0
        %4858 = vmatpush2.bf16.msra.mxu0 0
        %4859 = vmatprep.subr.bf16.mxu0 0
        %4860 = vmatpush2.bf16.msra.mxu0 0
        %4861 = vmatprep.subr.bf16.mxu0 0
        %4862 = vmatpush2.bf16.msra.mxu0 0
        %4863 = vmatprep.subr.bf16.mxu0 0
        %4864 = vmatpush2.bf16.msra.mxu0 0
        %4865 = vmatprep.mubr.bf16.mxu0 0
        %4866 = vmatmul.mubr.bf16.gmra.mxu0 %v4790
        %v4867 = vpop.f32.mrf.mxu0
        %v4868 = vadd.f32 0.0, %v4867
        %v4869 = vpop.f32.mrf.mxu0
        %v4870 = vadd.f32 0.0, %v4869
        %v4871 = vpop.f32.mrf.mxu0
        %v4872 = vpop.f32.mrf.mxu0
        %4873 = vdwg.mxu0
        %v4874 = vadd.f32 %v4583, %v4827
        %v4875 = vadd.f32 %v4584, %v4829
        %v4876 = vadd.f32 %v4585, %v4868
        %v4877 = vadd.f32 %v4586, %v4870
        %4879 = vrot.lane.b32.xlu0 %v3401, 64
        %v4880 = vpop.permute.xlu0 %4879
        %4882 = vrot.lane.b32.xlu0 %v3405, 64
        %v4883 = vpop.permute.xlu0 %4882
        %v4885 = vsel %vm3411, %v4880, 0
        %v4888 = vsel %vm3411, %v4883, 0
        %4890 = vmatprep.subr.bf16.mxu0 0
        %4891 = vmatpush1.bf16.xpose.msra.mxu0 0
        %4892 = vmatprep.subr.bf16.mxu0 0
        %4893 = vmatpush1.bf16.xpose.msra.mxu0 0
        %4894 = vmatprep.subr.bf16.mxu0 0
        %4895 = vmatpush1.bf16.xpose.msra.mxu0 0
        %4896 = vmatprep.subr.bf16.mxu0 0
        %4897 = vmatpush1.bf16.xpose.msra.mxu0 0
        %4898 = vmatprep.subr.bf16.mxu0 0
        %4899 = vmatpush1.bf16.xpose.msra.mxu0 0
        %4900 = vmatprep.subr.bf16.mxu0 0
        %4901 = vmatpush1.bf16.xpose.msra.mxu0 0
        %4902 = vmatprep.subr.bf16.mxu0 0
        %4903 = vmatpush1.bf16.xpose.msra.mxu0 0
        %4904 = vmatprep.subr.bf16.mxu0 0
        %4905 = vmatpush1.bf16.xpose.msra.mxu0 %v4888
        %4906 = vmatprep.subr.bf16.mxu0 0
        %4907 = vmatpush2.bf16.xpose.msra.mxu0 0
        %4908 = vmatprep.subr.bf16.mxu0 0
        %4909 = vmatpush2.bf16.xpose.msra.mxu0 0
        %4910 = vmatprep.subr.bf16.mxu0 0
        %4911 = vmatpush2.bf16.xpose.msra.mxu0 0
        %4912 = vmatprep.subr.bf16.mxu0 0
        %4913 = vmatpush2.bf16.xpose.msra.mxu0 0
        %4914 = vmatprep.subr.bf16.mxu0 0
        %4915 = vmatpush2.bf16.xpose.msra.mxu0 0
        %4916 = vmatprep.subr.bf16.mxu0 0
        %4917 = vmatpush2.bf16.xpose.msra.mxu0 0
        %4918 = vmatprep.subr.bf16.mxu0 0
        %4919 = vmatpush2.bf16.xpose.msra.mxu0 0
        %4920 = vmatprep.subr.bf16.mxu0 0
        %4921 = vmatpush2.bf16.xpose.msra.mxu0 0
        %4922 = vmatprep.mubr.bf16.mxu0 0
        %4923 = vmatmul.mubr.bf16.gmra.mxu0 %v4885
        %v4924 = vpop.f32.mrf.mxu0
        %v4925 = vadd.f32 0.0, %v4924
        %v4926 = vpop.f32.mrf.mxu0
        %v4927 = vpop.f32.mrf.mxu0
        %v4928 = vpop.f32.mrf.mxu0
        %4929 = vdwg.mxu0
        %v4930 = vsel %vm3458, %v4925, -inf
        %4931 = vmax.xlane.f32.xlu0 %v4930
        %v4932 = vpop.xlane.xlu0 %4931
        %v4933 = vsub.f32 %v4925, %v4932
        %v4934 = vmul.f32 %v4933, 1.442695
        %v4935 = vpow.pop %v4934
        %v4936 = vsel %vm3458, %v4935, 0.0
        %4937 = vadd.xlane.f32.xlu0 %v4936
        %v4938 = vpop.xlane.xlu0 %4937
        %v4939 = vrcp.pop %v4938
        %v4940 = vmul.f32 %v4935, %v4939
        %v4941 = vpack.c.bf16 %v4940, %v4940
        %4943 = vrot.lane.b32.xlu0 %v3409, 64
        %v4944 = vpop.permute.xlu0 %4943
        %v4946 = vsel %vm3458, %v4941, 0
        %v4949 = vsel %vm3474, %v4944, 0
        %4951 = vmatprep.subr.bf16.mxu0 0
        %4952 = vmatpush1.bf16.msra.mxu0 0
        %4953 = vmatprep.subr.bf16.mxu0 0
        %4954 = vmatpush1.bf16.msra.mxu0 0
        %4955 = vmatprep.subr.bf16.mxu0 0
        %4956 = vmatpush1.bf16.msra.mxu0 0
        %4957 = vmatprep.subr.bf16.mxu0 0
        %4958 = vmatpush1.bf16.msra.mxu0 0
        %4959 = vmatprep.subr.bf16.mxu0 0
        %4960 = vmatpush1.bf16.msra.mxu0 0
        %4961 = vmatprep.subr.bf16.mxu0 0
        %4962 = vmatpush1.bf16.msra.mxu0 0
        %4963 = vmatprep.subr.bf16.mxu0 0
        %4964 = vmatpush1.bf16.msra.mxu0 0
        %4965 = vmatprep.subr.bf16.mxu0 0
        %4966 = vmatpush1.bf16.msra.mxu0 %v4949
        %4967 = vmatprep.subr.bf16.mxu0 0
        %4968 = vmatpush2.bf16.msra.mxu0 0
        %4969 = vmatprep.subr.bf16.mxu0 0
        %4970 = vmatpush2.bf16.msra.mxu0 0
        %4971 = vmatprep.subr.bf16.mxu0 0
        %4972 = vmatpush2.bf16.msra.mxu0 0
        %4973 = vmatprep.subr.bf16.mxu0 0
        %4974 = vmatpush2.bf16.msra.mxu0 0
        %4975 = vmatprep.subr.bf16.mxu0 0
        %4976 = vmatpush2.bf16.msra.mxu0 0
        %4977 = vmatprep.subr.bf16.mxu0 0
        %4978 = vmatpush2.bf16.msra.mxu0 0
        %4979 = vmatprep.subr.bf16.mxu0 0
        %4980 = vmatpush2.bf16.msra.mxu0 0
        %4981 = vmatprep.subr.bf16.mxu0 0
        %4982 = vmatpush2.bf16.msra.mxu0 0
        %4983 = vmatprep.mubr.bf16.mxu0 0
        %4984 = vmatmul.mubr.bf16.gmra.mxu0 %v4946
        %v4985 = vpop.f32.mrf.mxu0
        %v4986 = vadd.f32 0.0, %v4985
        %v4987 = vpop.f32.mrf.mxu0
        %v4988 = vpop.f32.mrf.mxu0
        %v4989 = vpop.f32.mrf.mxu0
        %4990 = vdwg.mxu0
        %v4991 = vpack.c.bf16 %v4986, %v4986
        %s4992 = scalar_lea.vmem [#allocation8], 640
        %v4993 = vld [vmem:[%s4992] sm:$0xff]
        %v4994 = vld [vmem:[%s4992 + $0x8] sm:$0xff]
        %v4995 = vld [vmem:[%s4992 + $0x10] sm:$0xff]
        %v4996 = vld [vmem:[%s4992 + $0x18] sm:$0xff]
        %v4997 = vld [vmem:[%s4992 + $0x20] sm:$0xff]
        %v4998 = vld [vmem:[%s4992 + $0x28] sm:$0xff]
        %v4999 = vld [vmem:[%s4992 + $0x30] sm:$0xff]
        %v5000 = vld [vmem:[%s4992 + $0x38] sm:$0xff]
        %v5001 = vld [vmem:[%s4992 + $0x40] sm:$0xff]
        %v5002 = vld [vmem:[%s4992 + $0x48] sm:$0xff]
        %v5003 = vld [vmem:[%s4992 + $0x50] sm:$0xff]
        %v5004 = vld [vmem:[%s4992 + $0x58] sm:$0xff]
        %v5005 = vld [vmem:[%s4992 + $0x60] sm:$0xff]
        %v5006 = vld [vmem:[%s4992 + $0x68] sm:$0xff]
        %v5007 = vld [vmem:[%s4992 + $0x70] sm:$0xff]
        %v5008 = vld [vmem:[%s4992 + $0x78] sm:$0xff]
        %v5025 = vunpack.c.l.b16 %v4993
        %v5026 = vunpack.c.h.b16 %v4993
        %v5027 = vunpack.c.l.b16 %v4994
        %v5028 = vunpack.c.h.b16 %v4994
        %v5029 = vunpack.c.l.b16 %v4995
        %v5030 = vunpack.c.h.b16 %v4995
        %v5031 = vunpack.c.l.b16 %v4996
        %v5032 = vunpack.c.h.b16 %v4996
        %v5033 = vunpack.c.l.b16 %v4997
        %v5034 = vunpack.c.h.b16 %v4997
        %v5035 = vunpack.c.l.b16 %v4998
        %v5036 = vunpack.c.h.b16 %v4998
        %v5037 = vunpack.c.l.b16 %v4999
        %v5038 = vunpack.c.h.b16 %v4999
        %v5039 = vunpack.c.l.b16 %v5000
        %v5040 = vunpack.c.h.b16 %v5000
        %v5041 = vunpack.c.l.b16 %v5001
        %v5042 = vunpack.c.h.b16 %v5001
        %v5043 = vunpack.c.l.b16 %v5002
        %v5044 = vunpack.c.h.b16 %v5002
        %v5045 = vunpack.c.l.b16 %v5003
        %v5046 = vunpack.c.h.b16 %v5003
        %v5047 = vunpack.c.l.b16 %v5004
        %v5048 = vunpack.c.h.b16 %v5004
        %v5049 = vunpack.c.l.b16 %v5005
        %v5050 = vunpack.c.h.b16 %v5005
        %v5051 = vunpack.c.l.b16 %v5006
        %v5052 = vunpack.c.h.b16 %v5006
        %v5053 = vunpack.c.l.b16 %v5007
        %v5054 = vunpack.c.h.b16 %v5007
        %v5055 = vunpack.c.l.b16 %v5008
        %v5056 = vunpack.c.h.b16 %v5008
        %v5057 = vpack.c.b16 %v5029, %v5025
        %v5058 = vpack.c.b16 %v5030, %v5026
        %v5059 = vpack.c.b16 %v5031, %v5027
        %v5060 = vpack.c.b16 %v5032, %v5028
        %v5061 = vpack.c.b16 %v5037, %v5033
        %v5062 = vpack.c.b16 %v5038, %v5034
        %v5063 = vpack.c.b16 %v5039, %v5035
        %v5064 = vpack.c.b16 %v5040, %v5036
        %v5065 = vpack.c.b16 %v5045, %v5041
        %v5066 = vpack.c.b16 %v5046, %v5042
        %v5067 = vpack.c.b16 %v5047, %v5043
        %v5068 = vpack.c.b16 %v5048, %v5044
        %v5069 = vpack.c.b16 %v5053, %v5049
        %v5070 = vpack.c.b16 %v5054, %v5050
        %v5071 = vpack.c.b16 %v5055, %v5051
        %v5072 = vpack.c.b16 %v5056, %v5052
        %v5090 = vsel %vm3411, %v4991, 0
        %5092 = vmatprep.subr.bf16.mxu0 0
        %5093 = vmatpush1.bf16.msra.mxu0 0
        %5094 = vmatprep.subr.bf16.mxu0 0
        %5095 = vmatpush1.bf16.msra.mxu0 0
        %5096 = vmatprep.subr.bf16.mxu0 0
        %5097 = vmatpush1.bf16.msra.mxu0 0
        %5098 = vmatprep.subr.bf16.mxu0 0
        %5099 = vmatpush1.bf16.msra.mxu0 0
        %5100 = vmatprep.subr.bf16.mxu0 %v5070
        %5101 = vmatpush1.bf16.msra.mxu0 %v5069
        %5102 = vmatprep.subr.bf16.mxu0 %v5066
        %5103 = vmatpush1.bf16.msra.mxu0 %v5065
        %5104 = vmatprep.subr.bf16.mxu0 %v5062
        %5105 = vmatpush1.bf16.msra.mxu0 %v5061
        %5106 = vmatprep.subr.bf16.mxu0 %v5058
        %5107 = vmatpush1.bf16.msra.mxu0 %v5057
        %5108 = vmatprep.subr.bf16.mxu0 0
        %5109 = vmatpush2.bf16.msra.mxu0 0
        %5110 = vmatprep.subr.bf16.mxu0 0
        %5111 = vmatpush2.bf16.msra.mxu0 0
        %5112 = vmatprep.subr.bf16.mxu0 0
        %5113 = vmatpush2.bf16.msra.mxu0 0
        %5114 = vmatprep.subr.bf16.mxu0 0
        %5115 = vmatpush2.bf16.msra.mxu0 0
        %5116 = vmatprep.subr.bf16.mxu0 0
        %5117 = vmatpush2.bf16.msra.mxu0 0
        %5118 = vmatprep.subr.bf16.mxu0 0
        %5119 = vmatpush2.bf16.msra.mxu0 0
        %5120 = vmatprep.subr.bf16.mxu0 0
        %5121 = vmatpush2.bf16.msra.mxu0 0
        %5122 = vmatprep.subr.bf16.mxu0 0
        %5123 = vmatpush2.bf16.msra.mxu0 0
        %5124 = vmatprep.mubr.bf16.mxu0 0
        %5125 = vmatmul.mubr.bf16.gmra.mxu0 %v5090
        %v5126 = vpop.f32.mrf.mxu0
        %v5127 = vadd.f32 0.0, %v5126
        %v5128 = vpop.f32.mrf.mxu0
        %v5129 = vadd.f32 0.0, %v5128
        %v5130 = vpop.f32.mrf.mxu0
        %v5131 = vpop.f32.mrf.mxu0
        %5132 = vdwg.mxu0
        %5133 = vmatprep.subr.bf16.mxu0 0
        %5134 = vmatpush1.bf16.msra.mxu0 0
        %5135 = vmatprep.subr.bf16.mxu0 0
        %5136 = vmatpush1.bf16.msra.mxu0 0
        %5137 = vmatprep.subr.bf16.mxu0 0
        %5138 = vmatpush1.bf16.msra.mxu0 0
        %5139 = vmatprep.subr.bf16.mxu0 0
        %5140 = vmatpush1.bf16.msra.mxu0 0
        %5141 = vmatprep.subr.bf16.mxu0 %v5072
        %5142 = vmatpush1.bf16.msra.mxu0 %v5071
        %5143 = vmatprep.subr.bf16.mxu0 %v5068
        %5144 = vmatpush1.bf16.msra.mxu0 %v5067
        %5145 = vmatprep.subr.bf16.mxu0 %v5064
        %5146 = vmatpush1.bf16.msra.mxu0 %v5063
        %5147 = vmatprep.subr.bf16.mxu0 %v5060
        %5148 = vmatpush1.bf16.msra.mxu0 %v5059
        %5149 = vmatprep.subr.bf16.mxu0 0
        %5150 = vmatpush2.bf16.msra.mxu0 0
        %5151 = vmatprep.subr.bf16.mxu0 0
        %5152 = vmatpush2.bf16.msra.mxu0 0
        %5153 = vmatprep.subr.bf16.mxu0 0
        %5154 = vmatpush2.bf16.msra.mxu0 0
        %5155 = vmatprep.subr.bf16.mxu0 0
        %5156 = vmatpush2.bf16.msra.mxu0 0
        %5157 = vmatprep.subr.bf16.mxu0 0
        %5158 = vmatpush2.bf16.msra.mxu0 0
        %5159 = vmatprep.subr.bf16.mxu0 0
        %5160 = vmatpush2.bf16.msra.mxu0 0
        %5161 = vmatprep.subr.bf16.mxu0 0
        %5162 = vmatpush2.bf16.msra.mxu0 0
        %5163 = vmatprep.subr.bf16.mxu0 0
        %5164 = vmatpush2.bf16.msra.mxu0 0
        %5165 = vmatprep.mubr.bf16.mxu0 0
        %5166 = vmatmul.mubr.bf16.gmra.mxu0 %v5090
        %v5167 = vpop.f32.mrf.mxu0
        %v5168 = vadd.f32 0.0, %v5167
        %v5169 = vpop.f32.mrf.mxu0
        %v5170 = vadd.f32 0.0, %v5169
        %v5171 = vpop.f32.mrf.mxu0
        %v5172 = vpop.f32.mrf.mxu0
        %5173 = vdwg.mxu0
        %v5174 = vadd.f32 %v4874, %v5127
        %v5175 = vadd.f32 %v4875, %v5129
        %v5176 = vadd.f32 %v4876, %v5168
        %v5177 = vadd.f32 %v4877, %v5170
        %v5179 = vsel %vm3411, %v3402, 0
        %v5182 = vsel %vm3411, %v3406, 0
        %5184 = vmatprep.subr.bf16.mxu0 0
        %5185 = vmatpush1.bf16.xpose.msra.mxu0 0
        %5186 = vmatprep.subr.bf16.mxu0 0
        %5187 = vmatpush1.bf16.xpose.msra.mxu0 0
        %5188 = vmatprep.subr.bf16.mxu0 0
        %5189 = vmatpush1.bf16.xpose.msra.mxu0 0
        %5190 = vmatprep.subr.bf16.mxu0 0
        %5191 = vmatpush1.bf16.xpose.msra.mxu0 0
        %5192 = vmatprep.subr.bf16.mxu0 0
        %5193 = vmatpush1.bf16.xpose.msra.mxu0 0
        %5194 = vmatprep.subr.bf16.mxu0 0
        %5195 = vmatpush1.bf16.xpose.msra.mxu0 0
        %5196 = vmatprep.subr.bf16.mxu0 0
        %5197 = vmatpush1.bf16.xpose.msra.mxu0 0
        %5198 = vmatprep.subr.bf16.mxu0 0
        %5199 = vmatpush1.bf16.xpose.msra.mxu0 %v5182
        %5200 = vmatprep.subr.bf16.mxu0 0
        %5201 = vmatpush2.bf16.xpose.msra.mxu0 0
        %5202 = vmatprep.subr.bf16.mxu0 0
        %5203 = vmatpush2.bf16.xpose.msra.mxu0 0
        %5204 = vmatprep.subr.bf16.mxu0 0
        %5205 = vmatpush2.bf16.xpose.msra.mxu0 0
        %5206 = vmatprep.subr.bf16.mxu0 0
        %5207 = vmatpush2.bf16.xpose.msra.mxu0 0
        %5208 = vmatprep.subr.bf16.mxu0 0
        %5209 = vmatpush2.bf16.xpose.msra.mxu0 0
        %5210 = vmatprep.subr.bf16.mxu0 0
        %5211 = vmatpush2.bf16.xpose.msra.mxu0 0
        %5212 = vmatprep.subr.bf16.mxu0 0
        %5213 = vmatpush2.bf16.xpose.msra.mxu0 0
        %5214 = vmatprep.subr.bf16.mxu0 0
        %5215 = vmatpush2.bf16.xpose.msra.mxu0 0
        %5216 = vmatprep.mubr.bf16.mxu0 0
        %5217 = vmatmul.mubr.bf16.gmra.mxu0 %v5179
        %v5218 = vpop.f32.mrf.mxu0
        %v5219 = vadd.f32 0.0, %v5218
        %v5220 = vpop.f32.mrf.mxu0
        %v5221 = vpop.f32.mrf.mxu0
        %v5222 = vpop.f32.mrf.mxu0
        %5223 = vdwg.mxu0
        %v5224 = vsel %vm3458, %v5219, -inf
        %5225 = vmax.xlane.f32.xlu0 %v5224
        %v5226 = vpop.xlane.xlu0 %5225
        %v5227 = vsub.f32 %v5219, %v5226
        %v5228 = vmul.f32 %v5227, 1.442695
        %v5229 = vpow.pop %v5228
        %v5230 = vsel %vm3458, %v5229, 0.0
        %5231 = vadd.xlane.f32.xlu0 %v5230
        %v5232 = vpop.xlane.xlu0 %5231
        %v5233 = vrcp.pop %v5232
        %v5234 = vmul.f32 %v5229, %v5233
        %v5235 = vpack.c.bf16 %v5234, %v5234
        %v5237 = vsel %vm3458, %v5235, 0
        %v5240 = vsel %vm3474, %v3410, 0
        %5242 = vmatprep.subr.bf16.mxu0 0
        %5243 = vmatpush1.bf16.msra.mxu0 0
        %5244 = vmatprep.subr.bf16.mxu0 0
        %5245 = vmatpush1.bf16.msra.mxu0 0
        %5246 = vmatprep.subr.bf16.mxu0 0
        %5247 = vmatpush1.bf16.msra.mxu0 0
        %5248 = vmatprep.subr.bf16.mxu0 0
        %5249 = vmatpush1.bf16.msra.mxu0 0
        %5250 = vmatprep.subr.bf16.mxu0 0
        %5251 = vmatpush1.bf16.msra.mxu0 0
        %5252 = vmatprep.subr.bf16.mxu0 0
        %5253 = vmatpush1.bf16.msra.mxu0 0
        %5254 = vmatprep.subr.bf16.mxu0 0
        %5255 = vmatpush1.bf16.msra.mxu0 0
        %5256 = vmatprep.subr.bf16.mxu0 0
        %5257 = vmatpush1.bf16.msra.mxu0 %v5240
        %5258 = vmatprep.subr.bf16.mxu0 0
        %5259 = vmatpush2.bf16.msra.mxu0 0
        %5260 = vmatprep.subr.bf16.mxu0 0
        %5261 = vmatpush2.bf16.msra.mxu0 0
        %5262 = vmatprep.subr.bf16.mxu0 0
        %5263 = vmatpush2.bf16.msra.mxu0 0
        %5264 = vmatprep.subr.bf16.mxu0 0
        %5265 = vmatpush2.bf16.msra.mxu0 0
        %5266 = vmatprep.subr.bf16.mxu0 0
        %5267 = vmatpush2.bf16.msra.mxu0 0
        %5268 = vmatprep.subr.bf16.mxu0 0
        %5269 = vmatpush2.bf16.msra.mxu0 0
        %5270 = vmatprep.subr.bf16.mxu0 0
        %5271 = vmatpush2.bf16.msra.mxu0 0
        %5272 = vmatprep.subr.bf16.mxu0 0
        %5273 = vmatpush2.bf16.msra.mxu0 0
        %5274 = vmatprep.mubr.bf16.mxu0 0
        %5275 = vmatmul.mubr.bf16.gmra.mxu0 %v5237
        %v5276 = vpop.f32.mrf.mxu0
        %v5277 = vadd.f32 0.0, %v5276
        %v5278 = vpop.f32.mrf.mxu0
        %v5279 = vpop.f32.mrf.mxu0
        %v5280 = vpop.f32.mrf.mxu0
        %5281 = vdwg.mxu0
        %v5282 = vpack.c.bf16 %v5277, %v5277
        %s5283 = scalar_lea.vmem [#allocation8], 768
        %v5284 = vld [vmem:[%s5283] sm:$0xff]
        %v5285 = vld [vmem:[%s5283 + $0x8] sm:$0xff]
        %v5286 = vld [vmem:[%s5283 + $0x10] sm:$0xff]
        %v5287 = vld [vmem:[%s5283 + $0x18] sm:$0xff]
        %v5288 = vld [vmem:[%s5283 + $0x20] sm:$0xff]
        %v5289 = vld [vmem:[%s5283 + $0x28] sm:$0xff]
        %v5290 = vld [vmem:[%s5283 + $0x30] sm:$0xff]
        %v5291 = vld [vmem:[%s5283 + $0x38] sm:$0xff]
        %v5292 = vld [vmem:[%s5283 + $0x40] sm:$0xff]
        %v5293 = vld [vmem:[%s5283 + $0x48] sm:$0xff]
        %v5294 = vld [vmem:[%s5283 + $0x50] sm:$0xff]
        %v5295 = vld [vmem:[%s5283 + $0x58] sm:$0xff]
        %v5296 = vld [vmem:[%s5283 + $0x60] sm:$0xff]
        %v5297 = vld [vmem:[%s5283 + $0x68] sm:$0xff]
        %v5298 = vld [vmem:[%s5283 + $0x70] sm:$0xff]
        %v5299 = vld [vmem:[%s5283 + $0x78] sm:$0xff]
        %v5316 = vunpack.c.l.b16 %v5284
        %v5317 = vunpack.c.h.b16 %v5284
        %v5318 = vunpack.c.l.b16 %v5285
        %v5319 = vunpack.c.h.b16 %v5285
        %v5320 = vunpack.c.l.b16 %v5286
        %v5321 = vunpack.c.h.b16 %v5286
        %v5322 = vunpack.c.l.b16 %v5287
        %v5323 = vunpack.c.h.b16 %v5287
        %v5324 = vunpack.c.l.b16 %v5288
        %v5325 = vunpack.c.h.b16 %v5288
        %v5326 = vunpack.c.l.b16 %v5289
        %v5327 = vunpack.c.h.b16 %v5289
        %v5328 = vunpack.c.l.b16 %v5290
        %v5329 = vunpack.c.h.b16 %v5290
        %v5330 = vunpack.c.l.b16 %v5291
        %v5331 = vunpack.c.h.b16 %v5291
        %v5332 = vunpack.c.l.b16 %v5292
        %v5333 = vunpack.c.h.b16 %v5292
        %v5334 = vunpack.c.l.b16 %v5293
        %v5335 = vunpack.c.h.b16 %v5293
        %v5336 = vunpack.c.l.b16 %v5294
        %v5337 = vunpack.c.h.b16 %v5294
        %v5338 = vunpack.c.l.b16 %v5295
        %v5339 = vunpack.c.h.b16 %v5295
        %v5340 = vunpack.c.l.b16 %v5296
        %v5341 = vunpack.c.h.b16 %v5296
        %v5342 = vunpack.c.l.b16 %v5297
        %v5343 = vunpack.c.h.b16 %v5297
        %v5344 = vunpack.c.l.b16 %v5298
        %v5345 = vunpack.c.h.b16 %v5298
        %v5346 = vunpack.c.l.b16 %v5299
        %v5347 = vunpack.c.h.b16 %v5299
        %v5348 = vpack.c.b16 %v5320, %v5316
        %v5349 = vpack.c.b16 %v5321, %v5317
        %v5350 = vpack.c.b16 %v5322, %v5318
        %v5351 = vpack.c.b16 %v5323, %v5319
        %v5352 = vpack.c.b16 %v5328, %v5324
        %v5353 = vpack.c.b16 %v5329, %v5325
        %v5354 = vpack.c.b16 %v5330, %v5326
        %v5355 = vpack.c.b16 %v5331, %v5327
        %v5356 = vpack.c.b16 %v5336, %v5332
        %v5357 = vpack.c.b16 %v5337, %v5333
        %v5358 = vpack.c.b16 %v5338, %v5334
        %v5359 = vpack.c.b16 %v5339, %v5335
        %v5360 = vpack.c.b16 %v5344, %v5340
        %v5361 = vpack.c.b16 %v5345, %v5341
        %v5362 = vpack.c.b16 %v5346, %v5342
        %v5363 = vpack.c.b16 %v5347, %v5343
        %v5381 = vsel %vm3411, %v5282, 0
        %5383 = vmatprep.subr.bf16.mxu0 0
        %5384 = vmatpush1.bf16.msra.mxu0 0
        %5385 = vmatprep.subr.bf16.mxu0 0
        %5386 = vmatpush1.bf16.msra.mxu0 0
        %5387 = vmatprep.subr.bf16.mxu0 0
        %5388 = vmatpush1.bf16.msra.mxu0 0
        %5389 = vmatprep.subr.bf16.mxu0 0
        %5390 = vmatpush1.bf16.msra.mxu0 0
        %5391 = vmatprep.subr.bf16.mxu0 %v5361
        %5392 = vmatpush1.bf16.msra.mxu0 %v5360
        %5393 = vmatprep.subr.bf16.mxu0 %v5357
        %5394 = vmatpush1.bf16.msra.mxu0 %v5356
        %5395 = vmatprep.subr.bf16.mxu0 %v5353
        %5396 = vmatpush1.bf16.msra.mxu0 %v5352
        %5397 = vmatprep.subr.bf16.mxu0 %v5349
        %5398 = vmatpush1.bf16.msra.mxu0 %v5348
        %5399 = vmatprep.subr.bf16.mxu0 0
        %5400 = vmatpush2.bf16.msra.mxu0 0
        %5401 = vmatprep.subr.bf16.mxu0 0
        %5402 = vmatpush2.bf16.msra.mxu0 0
        %5403 = vmatprep.subr.bf16.mxu0 0
        %5404 = vmatpush2.bf16.msra.mxu0 0
        %5405 = vmatprep.subr.bf16.mxu0 0
        %5406 = vmatpush2.bf16.msra.mxu0 0
        %5407 = vmatprep.subr.bf16.mxu0 0
        %5408 = vmatpush2.bf16.msra.mxu0 0
        %5409 = vmatprep.subr.bf16.mxu0 0
        %5410 = vmatpush2.bf16.msra.mxu0 0
        %5411 = vmatprep.subr.bf16.mxu0 0
        %5412 = vmatpush2.bf16.msra.mxu0 0
        %5413 = vmatprep.subr.bf16.mxu0 0
        %5414 = vmatpush2.bf16.msra.mxu0 0
        %5415 = vmatprep.mubr.bf16.mxu0 0
        %5416 = vmatmul.mubr.bf16.gmra.mxu0 %v5381
        %v5417 = vpop.f32.mrf.mxu0
        %v5418 = vadd.f32 0.0, %v5417
        %v5419 = vpop.f32.mrf.mxu0
        %v5420 = vadd.f32 0.0, %v5419
        %v5421 = vpop.f32.mrf.mxu0
        %v5422 = vpop.f32.mrf.mxu0
        %5423 = vdwg.mxu0
        %5424 = vmatprep.subr.bf16.mxu0 0
        %5425 = vmatpush1.bf16.msra.mxu0 0
        %5426 = vmatprep.subr.bf16.mxu0 0
        %5427 = vmatpush1.bf16.msra.mxu0 0
        %5428 = vmatprep.subr.bf16.mxu0 0
        %5429 = vmatpush1.bf16.msra.mxu0 0
        %5430 = vmatprep.subr.bf16.mxu0 0
        %5431 = vmatpush1.bf16.msra.mxu0 0
        %5432 = vmatprep.subr.bf16.mxu0 %v5363
        %5433 = vmatpush1.bf16.msra.mxu0 %v5362
        %5434 = vmatprep.subr.bf16.mxu0 %v5359
        %5435 = vmatpush1.bf16.msra.mxu0 %v5358
        %5436 = vmatprep.subr.bf16.mxu0 %v5355
        %5437 = vmatpush1.bf16.msra.mxu0 %v5354
        %5438 = vmatprep.subr.bf16.mxu0 %v5351
        %5439 = vmatpush1.bf16.msra.mxu0 %v5350
        %5440 = vmatprep.subr.bf16.mxu0 0
        %5441 = vmatpush2.bf16.msra.mxu0 0
        %5442 = vmatprep.subr.bf16.mxu0 0
        %5443 = vmatpush2.bf16.msra.mxu0 0
        %5444 = vmatprep.subr.bf16.mxu0 0
        %5445 = vmatpush2.bf16.msra.mxu0 0
        %5446 = vmatprep.subr.bf16.mxu0 0
        %5447 = vmatpush2.bf16.msra.mxu0 0
        %5448 = vmatprep.subr.bf16.mxu0 0
        %5449 = vmatpush2.bf16.msra.mxu0 0
        %5450 = vmatprep.subr.bf16.mxu0 0
        %5451 = vmatpush2.bf16.msra.mxu0 0
        %5452 = vmatprep.subr.bf16.mxu0 0
        %5453 = vmatpush2.bf16.msra.mxu0 0
        %5454 = vmatprep.subr.bf16.mxu0 0
        %5455 = vmatpush2.bf16.msra.mxu0 0
        %5456 = vmatprep.mubr.bf16.mxu0 0
        %5457 = vmatmul.mubr.bf16.gmra.mxu0 %v5381
        %v5458 = vpop.f32.mrf.mxu0
        %v5459 = vadd.f32 0.0, %v5458
        %v5460 = vpop.f32.mrf.mxu0
        %v5461 = vadd.f32 0.0, %v5460
        %v5462 = vpop.f32.mrf.mxu0
        %v5463 = vpop.f32.mrf.mxu0
        %5464 = vdwg.mxu0
        %v5465 = vadd.f32 %v5174, %v5418
        %v5466 = vadd.f32 %v5175, %v5420
        %v5467 = vadd.f32 %v5176, %v5459
        %v5468 = vadd.f32 %v5177, %v5461
        %5470 = vrot.lane.b32.xlu0 %v3402, 64
        %v5471 = vpop.permute.xlu0 %5470
        %5473 = vrot.lane.b32.xlu0 %v3406, 64
        %v5474 = vpop.permute.xlu0 %5473
        %v5476 = vsel %vm3411, %v5471, 0
        %v5479 = vsel %vm3411, %v5474, 0
        %5481 = vmatprep.subr.bf16.mxu0 0
        %5482 = vmatpush1.bf16.xpose.msra.mxu0 0
        %5483 = vmatprep.subr.bf16.mxu0 0
        %5484 = vmatpush1.bf16.xpose.msra.mxu0 0
        %5485 = vmatprep.subr.bf16.mxu0 0
        %5486 = vmatpush1.bf16.xpose.msra.mxu0 0
        %5487 = vmatprep.subr.bf16.mxu0 0
        %5488 = vmatpush1.bf16.xpose.msra.mxu0 0
        %5489 = vmatprep.subr.bf16.mxu0 0
        %5490 = vmatpush1.bf16.xpose.msra.mxu0 0
        %5491 = vmatprep.subr.bf16.mxu0 0
        %5492 = vmatpush1.bf16.xpose.msra.mxu0 0
        %5493 = vmatprep.subr.bf16.mxu0 0
        %5494 = vmatpush1.bf16.xpose.msra.mxu0 0
        %5495 = vmatprep.subr.bf16.mxu0 0
        %5496 = vmatpush1.bf16.xpose.msra.mxu0 %v5479
        %5497 = vmatprep.subr.bf16.mxu0 0
        %5498 = vmatpush2.bf16.xpose.msra.mxu0 0
        %5499 = vmatprep.subr.bf16.mxu0 0
        %5500 = vmatpush2.bf16.xpose.msra.mxu0 0
        %5501 = vmatprep.subr.bf16.mxu0 0
        %5502 = vmatpush2.bf16.xpose.msra.mxu0 0
        %5503 = vmatprep.subr.bf16.mxu0 0
        %5504 = vmatpush2.bf16.xpose.msra.mxu0 0
        %5505 = vmatprep.subr.bf16.mxu0 0
        %5506 = vmatpush2.bf16.xpose.msra.mxu0 0
        %5507 = vmatprep.subr.bf16.mxu0 0
        %5508 = vmatpush2.bf16.xpose.msra.mxu0 0
        %5509 = vmatprep.subr.bf16.mxu0 0
        %5510 = vmatpush2.bf16.xpose.msra.mxu0 0
        %5511 = vmatprep.subr.bf16.mxu0 0
        %5512 = vmatpush2.bf16.xpose.msra.mxu0 0
        %5513 = vmatprep.mubr.bf16.mxu0 0
        %5514 = vmatmul.mubr.bf16.gmra.mxu0 %v5476
        %v5515 = vpop.f32.mrf.mxu0
        %v5516 = vadd.f32 0.0, %v5515
        %v5517 = vpop.f32.mrf.mxu0
        %v5518 = vpop.f32.mrf.mxu0
        %v5519 = vpop.f32.mrf.mxu0
        %5520 = vdwg.mxu0
        %v5521 = vsel %vm3458, %v5516, -inf
        %5522 = vmax.xlane.f32.xlu0 %v5521
        %v5523 = vpop.xlane.xlu0 %5522
        %v5524 = vsub.f32 %v5516, %v5523
        %v5525 = vmul.f32 %v5524, 1.442695
        %v5526 = vpow.pop %v5525
        %v5527 = vsel %vm3458, %v5526, 0.0
        %5528 = vadd.xlane.f32.xlu0 %v5527
        %v5529 = vpop.xlane.xlu0 %5528
        %v5530 = vrcp.pop %v5529
        %v5531 = vmul.f32 %v5526, %v5530
        %v5532 = vpack.c.bf16 %v5531, %v5531
        %5534 = vrot.lane.b32.xlu0 %v3410, 64
        %v5535 = vpop.permute.xlu0 %5534
        %v5537 = vsel %vm3458, %v5532, 0
        %v5540 = vsel %vm3474, %v5535, 0
        %5542 = vmatprep.subr.bf16.mxu0 0
        %5543 = vmatpush1.bf16.msra.mxu0 0
        %5544 = vmatprep.subr.bf16.mxu0 0
        %5545 = vmatpush1.bf16.msra.mxu0 0
        %5546 = vmatprep.subr.bf16.mxu0 0
        %5547 = vmatpush1.bf16.msra.mxu0 0
        %5548 = vmatprep.subr.bf16.mxu0 0
        %5549 = vmatpush1.bf16.msra.mxu0 0
        %5550 = vmatprep.subr.bf16.mxu0 0
        %5551 = vmatpush1.bf16.msra.mxu0 0
        %5552 = vmatprep.subr.bf16.mxu0 0
        %5553 = vmatpush1.bf16.msra.mxu0 0
        %5554 = vmatprep.subr.bf16.mxu0 0
        %5555 = vmatpush1.bf16.msra.mxu0 0
        %5556 = vmatprep.subr.bf16.mxu0 0
        %5557 = vmatpush1.bf16.msra.mxu0 %v5540
        %5558 = vmatprep.subr.bf16.mxu0 0
        %5559 = vmatpush2.bf16.msra.mxu0 0
        %5560 = vmatprep.subr.bf16.mxu0 0
        %5561 = vmatpush2.bf16.msra.mxu0 0
        %5562 = vmatprep.subr.bf16.mxu0 0
        %5563 = vmatpush2.bf16.msra.mxu0 0
        %5564 = vmatprep.subr.bf16.mxu0 0
        %5565 = vmatpush2.bf16.msra.mxu0 0
        %5566 = vmatprep.subr.bf16.mxu0 0
        %5567 = vmatpush2.bf16.msra.mxu0 0
        %5568 = vmatprep.subr.bf16.mxu0 0
        %5569 = vmatpush2.bf16.msra.mxu0 0
        %5570 = vmatprep.subr.bf16.mxu0 0
        %5571 = vmatpush2.bf16.msra.mxu0 0
        %5572 = vmatprep.subr.bf16.mxu0 0
        %5573 = vmatpush2.bf16.msra.mxu0 0
        %5574 = vmatprep.mubr.bf16.mxu0 0
        %5575 = vmatmul.mubr.bf16.gmra.mxu0 %v5537
        %v5576 = vpop.f32.mrf.mxu0
        %v5577 = vadd.f32 0.0, %v5576
        %v5578 = vpop.f32.mrf.mxu0
        %v5579 = vpop.f32.mrf.mxu0
        %v5580 = vpop.f32.mrf.mxu0
        %5581 = vdwg.mxu0
        %v5582 = vpack.c.bf16 %v5577, %v5577
        %s5583 = scalar_lea.vmem [#allocation8], 896
        %v5584 = vld [vmem:[%s5583] sm:$0xff]
        %v5585 = vld [vmem:[%s5583 + $0x8] sm:$0xff]
        %v5586 = vld [vmem:[%s5583 + $0x10] sm:$0xff]
        %v5587 = vld [vmem:[%s5583 + $0x18] sm:$0xff]
        %v5588 = vld [vmem:[%s5583 + $0x20] sm:$0xff]
        %v5589 = vld [vmem:[%s5583 + $0x28] sm:$0xff]
        %v5590 = vld [vmem:[%s5583 + $0x30] sm:$0xff]
        %v5591 = vld [vmem:[%s5583 + $0x38] sm:$0xff]
        %v5592 = vld [vmem:[%s5583 + $0x40] sm:$0xff]
        %v5593 = vld [vmem:[%s5583 + $0x48] sm:$0xff]
        %v5594 = vld [vmem:[%s5583 + $0x50] sm:$0xff]
        %v5595 = vld [vmem:[%s5583 + $0x58] sm:$0xff]
        %v5596 = vld [vmem:[%s5583 + $0x60] sm:$0xff]
        %v5597 = vld [vmem:[%s5583 + $0x68] sm:$0xff]
        %v5598 = vld [vmem:[%s5583 + $0x70] sm:$0xff]
        %v5599 = vld [vmem:[%s5583 + $0x78] sm:$0xff]
        %v5616 = vunpack.c.l.b16 %v5584
        %v5617 = vunpack.c.h.b16 %v5584
        %v5618 = vunpack.c.l.b16 %v5585
        %v5619 = vunpack.c.h.b16 %v5585
        %v5620 = vunpack.c.l.b16 %v5586
        %v5621 = vunpack.c.h.b16 %v5586
        %v5622 = vunpack.c.l.b16 %v5587
        %v5623 = vunpack.c.h.b16 %v5587
        %v5624 = vunpack.c.l.b16 %v5588
        %v5625 = vunpack.c.h.b16 %v5588
        %v5626 = vunpack.c.l.b16 %v5589
        %v5627 = vunpack.c.h.b16 %v5589
        %v5628 = vunpack.c.l.b16 %v5590
        %v5629 = vunpack.c.h.b16 %v5590
        %v5630 = vunpack.c.l.b16 %v5591
        %v5631 = vunpack.c.h.b16 %v5591
        %v5632 = vunpack.c.l.b16 %v5592
        %v5633 = vunpack.c.h.b16 %v5592
        %v5634 = vunpack.c.l.b16 %v5593
        %v5635 = vunpack.c.h.b16 %v5593
        %v5636 = vunpack.c.l.b16 %v5594
        %v5637 = vunpack.c.h.b16 %v5594
        %v5638 = vunpack.c.l.b16 %v5595
        %v5639 = vunpack.c.h.b16 %v5595
        %v5640 = vunpack.c.l.b16 %v5596
        %v5641 = vunpack.c.h.b16 %v5596
        %v5642 = vunpack.c.l.b16 %v5597
        %v5643 = vunpack.c.h.b16 %v5597
        %v5644 = vunpack.c.l.b16 %v5598
        %v5645 = vunpack.c.h.b16 %v5598
        %v5646 = vunpack.c.l.b16 %v5599
        %v5647 = vunpack.c.h.b16 %v5599
        %v5648 = vpack.c.b16 %v5620, %v5616
        %v5649 = vpack.c.b16 %v5621, %v5617
        %v5650 = vpack.c.b16 %v5622, %v5618
        %v5651 = vpack.c.b16 %v5623, %v5619
        %v5652 = vpack.c.b16 %v5628, %v5624
        %v5653 = vpack.c.b16 %v5629, %v5625
        %v5654 = vpack.c.b16 %v5630, %v5626
        %v5655 = vpack.c.b16 %v5631, %v5627
        %v5656 = vpack.c.b16 %v5636, %v5632
        %v5657 = vpack.c.b16 %v5637, %v5633
        %v5658 = vpack.c.b16 %v5638, %v5634
        %v5659 = vpack.c.b16 %v5639, %v5635
        %v5660 = vpack.c.b16 %v5644, %v5640
        %v5661 = vpack.c.b16 %v5645, %v5641
        %v5662 = vpack.c.b16 %v5646, %v5642
        %v5663 = vpack.c.b16 %v5647, %v5643
        %v5681 = vsel %vm3411, %v5582, 0
        %5683 = vmatprep.subr.bf16.mxu0 0
        %5684 = vmatpush1.bf16.msra.mxu0 0
        %5685 = vmatprep.subr.bf16.mxu0 0
        %5686 = vmatpush1.bf16.msra.mxu0 0
        %5687 = vmatprep.subr.bf16.mxu0 0
        %5688 = vmatpush1.bf16.msra.mxu0 0
        %5689 = vmatprep.subr.bf16.mxu0 0
        %5690 = vmatpush1.bf16.msra.mxu0 0
        %5691 = vmatprep.subr.bf16.mxu0 %v5661
        %5692 = vmatpush1.bf16.msra.mxu0 %v5660
        %5693 = vmatprep.subr.bf16.mxu0 %v5657
        %5694 = vmatpush1.bf16.msra.mxu0 %v5656
        %5695 = vmatprep.subr.bf16.mxu0 %v5653
        %5696 = vmatpush1.bf16.msra.mxu0 %v5652
        %5697 = vmatprep.subr.bf16.mxu0 %v5649
        %5698 = vmatpush1.bf16.msra.mxu0 %v5648
        %5699 = vmatprep.subr.bf16.mxu0 0
        %5700 = vmatpush2.bf16.msra.mxu0 0
        %5701 = vmatprep.subr.bf16.mxu0 0
        %5702 = vmatpush2.bf16.msra.mxu0 0
        %5703 = vmatprep.subr.bf16.mxu0 0
        %5704 = vmatpush2.bf16.msra.mxu0 0
        %5705 = vmatprep.subr.bf16.mxu0 0
        %5706 = vmatpush2.bf16.msra.mxu0 0
        %5707 = vmatprep.subr.bf16.mxu0 0
        %5708 = vmatpush2.bf16.msra.mxu0 0
        %5709 = vmatprep.subr.bf16.mxu0 0
        %5710 = vmatpush2.bf16.msra.mxu0 0
        %5711 = vmatprep.subr.bf16.mxu0 0
        %5712 = vmatpush2.bf16.msra.mxu0 0
        %5713 = vmatprep.subr.bf16.mxu0 0
        %5714 = vmatpush2.bf16.msra.mxu0 0
        %5715 = vmatprep.mubr.bf16.mxu0 0
        %5716 = vmatmul.mubr.bf16.gmra.mxu0 %v5681
        %v5717 = vpop.f32.mrf.mxu0
        %v5718 = vadd.f32 0.0, %v5717
        %v5719 = vpop.f32.mrf.mxu0
        %v5720 = vadd.f32 0.0, %v5719
        %v5721 = vpop.f32.mrf.mxu0
        %v5722 = vpop.f32.mrf.mxu0
        %5723 = vdwg.mxu0
        %5724 = vmatprep.subr.bf16.mxu0 0
        %5725 = vmatpush1.bf16.msra.mxu0 0
        %5726 = vmatprep.subr.bf16.mxu0 0
        %5727 = vmatpush1.bf16.msra.mxu0 0
        %5728 = vmatprep.subr.bf16.mxu0 0
        %5729 = vmatpush1.bf16.msra.mxu0 0
        %5730 = vmatprep.subr.bf16.mxu0 0
        %5731 = vmatpush1.bf16.msra.mxu0 0
        %5732 = vmatprep.subr.bf16.mxu0 %v5663
        %5733 = vmatpush1.bf16.msra.mxu0 %v5662
        %5734 = vmatprep.subr.bf16.mxu0 %v5659
        %5735 = vmatpush1.bf16.msra.mxu0 %v5658
        %5736 = vmatprep.subr.bf16.mxu0 %v5655
        %5737 = vmatpush1.bf16.msra.mxu0 %v5654
        %5738 = vmatprep.subr.bf16.mxu0 %v5651
        %5739 = vmatpush1.bf16.msra.mxu0 %v5650
        %5740 = vmatprep.subr.bf16.mxu0 0
        %5741 = vmatpush2.bf16.msra.mxu0 0
        %5742 = vmatprep.subr.bf16.mxu0 0
        %5743 = vmatpush2.bf16.msra.mxu0 0
        %5744 = vmatprep.subr.bf16.mxu0 0
        %5745 = vmatpush2.bf16.msra.mxu0 0
        %5746 = vmatprep.subr.bf16.mxu0 0
        %5747 = vmatpush2.bf16.msra.mxu0 0
        %5748 = vmatprep.subr.bf16.mxu0 0
        %5749 = vmatpush2.bf16.msra.mxu0 0
        %5750 = vmatprep.subr.bf16.mxu0 0
        %5751 = vmatpush2.bf16.msra.mxu0 0
        %5752 = vmatprep.subr.bf16.mxu0 0
        %5753 = vmatpush2.bf16.msra.mxu0 0
        %5754 = vmatprep.subr.bf16.mxu0 0
        %5755 = vmatpush2.bf16.msra.mxu0 0
        %5756 = vmatprep.mubr.bf16.mxu0 0
        %5757 = vmatmul.mubr.bf16.gmra.mxu0 %v5681
        %v5758 = vpop.f32.mrf.mxu0
        %v5759 = vadd.f32 0.0, %v5758
        %v5760 = vpop.f32.mrf.mxu0
        %v5761 = vadd.f32 0.0, %v5760
        %v5762 = vpop.f32.mrf.mxu0
        %v5763 = vpop.f32.mrf.mxu0
        %5764 = vdwg.mxu0
        %v5765 = vadd.f32 %v5465, %v5718
        %v5766 = vadd.f32 %v5466, %v5720
        %v5767 = vadd.f32 %v5467, %v5759
        %v5768 = vadd.f32 %v5468, %v5761
        %v5769 = vld [vmem:[%s10] sm:$0xf]
        %v5771 = vlaneseq
        %v5772 = vshrl.u32 %v5771, 7
        %v5773 = vsub.s32 0, %v5772
        %v5774 = vrot.slane %v5769, %v5773
        %v5775 = vlaneseq
        %v5776 = vshrl.u32 %v5775, 7
        %v5777 = vsub.s32 1, %v5776
        %v5778 = vrot.slane %v5769, %v5777
        %v5779 = vlaneseq
        %v5780 = vshrl.u32 %v5779, 7
        %v5781 = vsub.s32 2, %v5780
        %v5782 = vrot.slane %v5769, %v5781
        %v5783 = vlaneseq
        %v5784 = vshrl.u32 %v5783, 7
        %v5785 = vsub.s32 3, %v5784
        %v5786 = vrot.slane %v5769, %v5785
        %v5791 = vadd.f32 %v5765, %v5774
        %v5792 = vadd.f32 %v5766, %v5778
        %v5793 = vadd.f32 %v5767, %v5782
        %v5794 = vadd.f32 %v5768, %v5786
        %5795 = vst [vmem:[%s468] sm:$0xff] %v5791
        %5796 = vst [vmem:[%s468 + $0x8] sm:$0xff] %v5792
        %5797 = vst [vmem:[%s468 + $0x10] sm:$0xff] %v5793
        %5798 = vst [vmem:[%s468 + $0x18] sm:$0xff] %v5794
        %s5799 = sand.u32 %s282, 1
        %s5800 = scalar_lea.sflag [#allocation4], %s5799
        %s5801 = sand.u32 %s282, 1
        %s5802 = smul.addr %s5801, 32
        %s5803 = scalar_lea.vmem [#allocation10], %s5802
        // Predicated region
        $region81: #{mhatt_pallas.1} parent=63 // pred_check
          %p5804 = pneg %p292
        $region82: #{mhatt_pallas.1} parent=63 // pred_check_branch
          %5806 = sbr.rel (%p5804) target = $region84
        $region83: #{mhatt_pallas.1} parent=63 // pred_region
          %s5808 = ssub.s32 512, 512
          %5809 = vsyncadd %s5800, %s5808
          %s5810 = smul.addr %s28, 4
          %s5811 = smul.addr %s5810, 128
          %s5812 = scalar_lea.hbm %s11, %s5811
          %s5814 = sshll.u32 %s5803, 4
          %s5815 = int_to_ptr.vmem [resolvable:$true] %s5814
          %5817 = dma.vmem_to_hbm [thread:$0]  %s5815, 512, %s5812, %s5800
        $region84: #{mhatt_pallas.1} parent=63 // pred_fallthru
          _
      $region64: #{mhatt_pallas.1} parent=5 // pred_fallthru
        _
      %p5818 = scmp.le.s32.totalorder 2, %s23
      // Predicated region
      $region85: #{mhatt_pallas.1} parent=5 // pred_check
        %p5819 = pneg %p5818
      $region86: #{mhatt_pallas.1} parent=5 // pred_check_branch
        %5821 = sbr.rel (%p5819) target = $region88
      $region87: #{mhatt_pallas.1} parent=5 // pred_region
        %s5822 = ssub.s32 %s23, 2
        // Predicated region
        $region89: #{mhatt_pallas.1} parent=87 // pred_check
          %p5823 = pneg %p298
        $region90: #{mhatt_pallas.1} parent=87 // pred_check_branch
          %5825 = sbr.rel (%p5823) target = $region92
        $region91: #{mhatt_pallas.1} parent=87 // pred_region
          %s5826 = sand.u32 %s283, 1
          %s5827 = scalar_lea.sflag [#allocation4], %s5826
          %s5828 = sand.u32 %s283, 1
          %s5829 = smul.addr %s5828, 32
          %s5830 = scalar_lea.vmem [#allocation10], %s5829
          %5831 = dma.done %s5827, 512
        $region92: #{mhatt_pallas.1} parent=87 // pred_fallthru
          _
      $region88: #{mhatt_pallas.1} parent=5 // pred_fallthru
        _
    $region6: #{mhatt_pallas.1} parent=1 // loop_footer
      %s27 = sadd.s32 1, %s23
    $region7: #{mhatt_pallas.1} parent=1 // loop_footer_branch
      %22 = sbr.rel target = $region3
    $region8: #{mhatt_pallas.1} parent=1 // loop_exit
      _
    %5832 = vsyncpa [#allocation3], 1
    %s5833 = scalar_lea.sflag [#allocation3], 1
    %5834 = vsyncpa %s5833, 1
    %5835 = vsyncpa [#allocation6], 1
    %5836 = vsyncpa [#allocation9], 1
    %5837 = vsyncpa [#allocation4], 1
    %s5838 = scalar_lea.sflag [#allocation4], 1
    %5839 = vsyncpa %s5838, 1

</llo_original>
